<compile_context>
chip_gen: v7x
topology: tpu7x:2x2x1
jax: 0.10.0
libtpu: 0.0.40
codegen_flags: <defaults>
</compile_context>

<pallas_src>
import math
import functools

import jax
import jax.numpy as jnp
from jax.experimental import pallas as pl
from jax.experimental.pallas import tpu as pltpu


def _layer_norm(v, alpha, bias, eps=1e-6):
    # Matches the custom torch LayerNormalization: mean/std over the last dim,
    # *unbiased* std (divide by N-1), eps added to the STD (not the variance),
    # scalar alpha/bias. Intentionally differs from torch.nn.LayerNorm; do not
    # "fix". Exact divide here (accuracy feeds the residual stream 3x).
    n = v.shape[-1]
    mean = jnp.mean(v, axis=-1, keepdims=True)
    var = jnp.sum((v - mean) ** 2, axis=-1, keepdims=True) * (1.0 / (n - 1))
    return alpha * (v - mean) / (jnp.sqrt(var) + eps) + bias


def _softmax(s):
    m = jnp.max(s, axis=-1, keepdims=True)
    e = jnp.exp(s - m)
    # EUP approx reciprocal: per-row relative error cancels in the ratio.
    return e * pl.reciprocal(jnp.sum(e, axis=-1, keepdims=True), approx=True)


def _bmm(a, b):
    # (n, M, K) @ (n, K, N) -> (n, M, N), f32 accumulation on the MXU.
    return jax.lax.dot_general(
        a, b, (((2,), (1,)), ((0,), (0,))), preferred_element_type=jnp.float32)


def _bmm_tb(a, b):
    # (n, M, K) x (n, N, K) contracting the last dims (B^T form) -> (n, M, N).
    return jax.lax.dot_general(
        a, b, (((2,), (2,)), ((0,), (0,))), preferred_element_type=jnp.float32)


def decoder_block_kernel(x_ref, enc_ref, tgt_bias_ref, src_bias_ref,
                         w_in_ref, w2_ref, b12_ref, ln_ref, o_ref, *, h, d_k):
    f32, bf16 = jnp.float32, jnp.bfloat16
    x = x_ref[0].astype(f32)                  # (St, D) f32 residual path
    enc = enc_ref[0]                          # (Ss, D) bf16 (k/v source only)
    St, D = x.shape
    d_ff = w2_ref.shape[0]

    # Static column offsets inside the packed (D, 8D + F) weight slab:
    # [QKV_self | Q_cross | KV_cross | Wo_self | Wo_cross | W1]
    o_qkv, o_qc, o_kvc, o_wos, o_woc, o_w1 = 0, 3 * D, 4 * D, 6 * D, 7 * D, 8 * D

    def split_heads(mat, nh):
        # (S, nh*d_k) -> (nh, S, d_k) via static lane slices + stack
        # (no lane-splitting reshape, no broadcast_in_dim copies).
        return jnp.stack([mat[:, i * d_k:(i + 1) * d_k] for i in range(nh)],
                         axis=0)

    def attention(q_heads, k_heads, v_heads, bias, wo):
        # q already carries 1/sqrt(d_k) (folded into Wq at pack time).
        scores = _bmm_tb(q_heads, k_heads) + bias.astype(f32)   # (h, Sq, Sk) f32
        probs = _softmax(scores)
        ctx = _bmm(probs.astype(bf16), v_heads)                 # (h, Sq, d_k) f32
        # Merge heads (lane concat) and do ONE full-depth K=D output matmul.
        merged = jnp.concatenate([ctx[i] for i in range(h)], axis=-1).astype(bf16)
        return jnp.dot(merged, wo, preferred_element_type=f32)  # (Sq, D) f32

    # ---------------- sublayer 1: masked self-attention ---------------------
    xn = _layer_norm(x, ln_ref[0], ln_ref[1]).astype(bf16)
    qkv = jnp.dot(xn, w_in_ref[:, o_qkv:o_qkv + 3 * D],
                  preferred_element_type=f32).astype(bf16)      # (St, 3D)
    qkv_h = split_heads(qkv, 3 * h)                             # (3h, St, d_k)
    attn = attention(qkv_h[:h], qkv_h[h:2 * h], qkv_h[2 * h:],
                     tgt_bias_ref[0], w_in_ref[:, o_wos:o_wos + D])
    x1 = x + attn                                               # residual 1

    # ---------------- sublayer 2: cross-attention ---------------------------
    xn2 = _layer_norm(x1, ln_ref[2], ln_ref[3]).astype(bf16)
    q_c = jnp.dot(xn2, w_in_ref[:, o_qc:o_qc + D],
                  preferred_element_type=f32).astype(bf16)      # (St, D)
    kv_c = jnp.dot(enc, w_in_ref[:, o_kvc:o_kvc + 2 * D],
                   preferred_element_type=f32).astype(bf16)     # (Ss, 2D)
    q_ch = split_heads(q_c, h)
    kv_ch = split_heads(kv_c, 2 * h)
    attn_c = attention(q_ch, kv_ch[:h], kv_ch[h:],
                       src_bias_ref[0], w_in_ref[:, o_woc:o_woc + D])
    x2 = x1 + attn_c                                            # residual 2

    # ---------------- sublayer 3: feed-forward -------------------------------
    xn3 = _layer_norm(x2, ln_ref[4], ln_ref[5]).astype(bf16)
    hdn = jnp.dot(xn3, w_in_ref[:, o_w1:o_w1 + d_ff],
                  preferred_element_type=f32) + b12_ref[:, :d_ff]
    hdn = jnp.maximum(hdn, 0.0).astype(bf16)                    # relu
    ffn = jnp.dot(hdn, w2_ref[...], preferred_element_type=f32) + b12_ref[:, d_ff:]

    o_ref[0] = (x2 + ffn).astype(o_ref.dtype)                   # residual 3


def pack_decoder_params(params, *, h):
    """One-time repacking of the (x @ W layout) DecoderBlock weights into the
    fused, lane-dense, bf16 slabs the kernel consumes. Call once at model load
    time, NOT per decode step."""
    (wq_s, wk_s, wv_s, wo_s, wq_c, wk_c, wv_c, wo_c,
     w1, b1, w2, b2, ln) = params
    D = wq_s.shape[0]
    F = w1.shape[1]
    d_k = D // h
    scale = 1.0 / math.sqrt(d_k)
    bf16 = jnp.bfloat16
    # 1/sqrt(d_k) folded into the q projections; all D-row matrices packed into
    # one lane-dense slab: [QKV_self | Q_cross | KV_cross | Wo_self | Wo_cross | W1].
    w_in = jnp.concatenate(
        [wq_s * scale, wk_s, wv_s,
         wq_c * scale,
         wk_c, wv_c,
         wo_s, wo_c,
         w1], axis=1).astype(bf16)                               # (D, 8D + F)
    b12 = jnp.concatenate([b1.reshape(1, F), b2.reshape(1, D)],
                          axis=1).astype(jnp.float32)            # (1, F + D)
    return {"w_in": w_in, "w2": w2.astype(bf16), "b12": b12,
            "ln": ln.astype(jnp.float32), "h": h, "d_model": D, "d_ff": F}


def decoder_block(x, encoder_output, src_mask, tgt_mask, packed, *,
                  vmem_limit_bytes=None):
    h, D, F = packed["h"], packed["d_model"], packed["d_ff"]
    d_k = D // h
    B, St, _ = x.shape
    _, Ss, _ = encoder_output.shape
    bf16 = jnp.bfloat16

    enc_b = encoder_output.astype(bf16)                          # k/v source only
    # Masks -> additive biases once (bf16 halves the mask DMA; -1e9 matches the
    # torch masked_fill value up to bf16 rounding => softmax weight ~0).
    tgt_bias = jnp.where(tgt_mask == 0, -1e9, 0.0).astype(bf16)  # (B, St, St)
    src_bias = jnp.where(src_mask == 0, -1e9, 0.0).astype(bf16)  # (B, St, Ss)

    if vmem_limit_bytes is None:
        # Tiling-derived budget: double-buffered per-batch blocks, single-
        # buffered weights, f32 score/activation intermediates; clamped so the
        # request stays deliberate on v7x (64 MiB physical VMEM per core).
        per_batch = (St * D * 4 + Ss * D * 2 + St * St * 2 + St * Ss * 2
                     + St * D * 4)
        weights = (D * (8 * D + F) + F * D) * 2 + (F + D) * 4
        interm = 4 * h * St * max(St, Ss) * 4 + 8 * St * max(D, F) * 4
        est = 2 * per_batch + weights + interm
        vmem_limit_bytes = int(min(max(2 * est, 32 << 20), 64 << 20))

    kernel = functools.partial(decoder_block_kernel, h=h, d_k=d_k)

    def build(single_buffer_weights):
        cb = {"pipeline_mode": pl.Buffered(1)} if single_buffer_weights else {}
        return pl.pallas_call(
            kernel,
            out_shape=jax.ShapeDtypeStruct((B, St, D), x.dtype),
            grid=(B,),
            in_specs=[
                pl.BlockSpec((1, St, D), lambda b: (b, 0, 0)),      # x
                pl.BlockSpec((1, Ss, D), lambda b: (b, 0, 0)),      # encoder_output
                pl.BlockSpec((1, St, St), lambda b: (b, 0, 0)),     # tgt additive bias
                pl.BlockSpec((1, St, Ss), lambda b: (b, 0, 0)),     # src additive bias
                pl.BlockSpec((D, 8 * D + F), lambda b: (0, 0), **cb),  # fused weights
                pl.BlockSpec((F, D), lambda b: (0, 0), **cb),          # W2
                pl.BlockSpec((1, F + D), lambda b: (0, 0), **cb),      # [b1 | b2]
                pl.BlockSpec(memory_space=pltpu.MemorySpace.SMEM),     # 6 LN scalars
            ],
            out_specs=pl.BlockSpec((1, St, D), lambda b: (b, 0, 0)),
            compiler_params=pltpu.CompilerParams(
                dimension_semantics=("parallel",),
                vmem_limit_bytes=vmem_limit_bytes),
        )

    operands = (x, enc_b, tgt_bias, src_bias,
                packed["w_in"], packed["w2"], packed["b12"], packed["ln"])
    try:
        # Constant-index weight blocks single-buffered (halves weight VMEM).
        return jax.block_until_ready(build(True)(*operands))
    except Exception:
        # This jax build rejects pipeline_mode / Buffered(1): fall back to the
        # default double-buffered pipeline (identical numerics).
        return build(False)(*operands)


# ------------------------- pure-JAX reference --------------------------------
def reference(x, encoder_output, src_mask, tgt_mask, params, *, h):
    (wq_s, wk_s, wv_s, wo_s, wq_c, wk_c, wv_c, wo_c,
     w1, b1, w2, b2, ln) = params
    B, St, D = x.shape
    d_k = D // h

    def ln_fn(v, a, b):
        mean = jnp.mean(v, -1, keepdims=True)
        var = jnp.sum((v - mean) ** 2, -1, keepdims=True) / (v.shape[-1] - 1)
        return a * (v - mean) / (jnp.sqrt(var) + 1e-6) + b

    def mha(q_in, kv_in, mask, wq, wk, wv, wo):
        Sq, Sk = q_in.shape[1], kv_in.shape[1]
        q = (q_in @ wq).reshape(B, Sq, h, d_k).transpose(0, 2, 1, 3)
        k = (kv_in @ wk).reshape(B, Sk, h, d_k).transpose(0, 2, 1, 3)
        v = (kv_in @ wv).reshape(B, Sk, h, d_k).transpose(0, 2, 1, 3)
        s = jnp.einsum("bhqd,bhkd->bhqk", q, k) / math.sqrt(d_k)
        s = jnp.where(mask[:, None, :, :] == 0, -1e9, s)
        p = jax.nn.softmax(s, axis=-1)
        ctx = jnp.einsum("bhqk,bhkd->bhqd", p, v)
        ctx = ctx.transpose(0, 2, 1, 3).reshape(B, Sq, D)
        return ctx @ wo

    xn = ln_fn(x, ln[0], ln[1])
    x1 = x + mha(xn, xn, tgt_mask, wq_s, wk_s, wv_s, wo_s)
    xn2 = ln_fn(x1, ln[2], ln[3])
    x2 = x1 + mha(xn2, encoder_output, src_mask, wq_c, wk_c, wv_c, wo_c)
    xn3 = ln_fn(x2, ln[4], ln[5])
    return x2 + (jnp.maximum(xn3 @ w1 + b1, 0.0) @ w2 + b2)


if __name__ == "__main__":
    B, St, Ss, D, H, F = 2, 8, 16, 32, 4, 64   # batch, tgt_seq, src_seq, d_model, heads, d_ff

    key = jax.random.PRNGKey(0)
    ks = jax.random.split(key, 16)
    sc = 0.05
    mk = lambda k, shape: jax.random.normal(k, shape, jnp.float32) * sc
    wq_s, wk_s, wv_s, wo_s = (mk(ks[i], (D, D)) for i in range(4))
    wq_c, wk_c, wv_c, wo_c = (mk(ks[i], (D, D)) for i in range(4, 8))
    w1 = mk(ks[8], (D, F))
    b1 = mk(ks[9], (1, F))
    w2 = mk(ks[10], (F, D))
    b2 = mk(ks[11], (1, D))
    # Three LayerNormalization modules: scalar (alpha, bias) pairs.
    ln = jnp.array([1.05, 0.02, 0.97, -0.01, 1.10, 0.03], jnp.float32)
    params = (wq_s, wk_s, wv_s, wo_s, wq_c, wk_c, wv_c, wo_c, w1, b1, w2, b2, ln)

    x = jax.random.normal(ks[12], (B, St, D), jnp.float32)
    enc = jax.random.normal(ks[13], (B, Ss, D), jnp.float32)

    # tgt_mask: causal; src_mask: padding (batch 1 cannot see last 3 encoder positions).
    tgt_mask = jnp.broadcast_to(jnp.tril(jnp.ones((St, St), jnp.int32)), (B, St, St))
    src_mask = jnp.ones((B, St, Ss), jnp.int32).at[1, :, -3:].set(0)

    packed = pack_decoder_params(params, h=H)       # once, at "model load" time
    out = decoder_block(x, enc, src_mask, tgt_mask, packed)
    out = jax.block_until_ready(out)

    ref = reference(x, enc, src_mask, tgt_mask, params, h=H)
    assert out.shape == (B, St, D)
    max_err = float(jnp.max(jnp.abs(out - ref)))
    # bf16 matmul inputs + approx softmax reciprocal => slightly loosened tolerance.
    assert jnp.allclose(out, ref, atol=2e-2, rtol=2e-2), max_err

    print("KERNEL_OK")
</pallas_src>

<mosaic_0001>
module attributes {stable_mosaic.version = 11 : i64} {
  func.func @decoder_block_kernel(%arg0: i32, %arg1: memref<1x8x32xf32, #tpu.memory_space<vmem>>, %arg2: memref<1x16x32xbf16, #tpu.memory_space<vmem>>, %arg3: memref<1x8x8xbf16, #tpu.memory_space<vmem>>, %arg4: memref<1x8x16xbf16, #tpu.memory_space<vmem>>, %arg5: memref<32x320xbf16, #tpu.memory_space<vmem>>, %arg6: memref<64x32xbf16, #tpu.memory_space<vmem>>, %arg7: memref<1x96xf32, #tpu.memory_space<vmem>>, %arg8: memref<6xf32, #tpu.memory_space<smem>>, %arg9: memref<1x8x32xf32, #tpu.memory_space<vmem>>) attributes {dimension_semantics = [#tpu.dimension_semantics<parallel>], iteration_bounds = array<i64: 2>, scalar_prefetch = 0 : i64, scratch_operands = 0 : i64, tpu.core_type = #tpu.core_type<tc>, window_params = [{transform_indices = @transform_0, window_bounds = array<i64: 1, 8, 32>}, {transform_indices = @transform_1, window_bounds = array<i64: 1, 16, 32>}, {transform_indices = @transform_2, window_bounds = array<i64: 1, 8, 8>}, {transform_indices = @transform_3, window_bounds = array<i64: 1, 8, 16>}, {pipeline_mode = #tpu.pipeline_mode<synchronous>, transform_indices = @transform_4, window_bounds = array<i64: 32, 320>}, {pipeline_mode = #tpu.pipeline_mode<synchronous>, transform_indices = @transform_5, window_bounds = array<i64: 64, 32>}, {pipeline_mode = #tpu.pipeline_mode<synchronous>, transform_indices = @transform_6, window_bounds = array<i64: 1, 96>}, {transform_indices = @transform_7, window_bounds = array<i64: 6>}, {transform_indices = @transform_8, window_bounds = array<i64: 1, 8, 32>}]} {
    %c0 = arith.constant 0 : index
    %c0_0 = arith.constant 0 : index
    %c0_1 = arith.constant 0 : index
    %0 = vector.load %arg1[%c0, %c0_0, %c0_1] : memref<1x8x32xf32, #tpu.memory_space<vmem>>, vector<1x8x32xf32>
    %1 = vector.shape_cast %0 : vector<1x8x32xf32> to vector<8x32xf32>
    %c0_2 = arith.constant 0 : index
    %c0_3 = arith.constant 0 : index
    %c0_4 = arith.constant 0 : index
    %2 = vector.load %arg2[%c0_2, %c0_3, %c0_4] : memref<1x16x32xbf16, #tpu.memory_space<vmem>>, vector<1x16x32xbf16>
    %3 = vector.shape_cast %2 : vector<1x16x32xbf16> to vector<16x32xbf16>
    %c0_5 = arith.constant 0 : index
    %4 = memref.load %arg8[%c0_5] : memref<6xf32, #tpu.memory_space<smem>>
    %c1 = arith.constant 1 : index
    %5 = memref.load %arg8[%c1] : memref<6xf32, #tpu.memory_space<smem>>
    %cst = arith.constant dense<0.000000e+00> : vector<8xf32>
    %6 = vector.multi_reduction <add>, %1, %cst [1] : vector<8x32xf32> to vector<8xf32>
    %7 = vector.shape_cast %6 : vector<8xf32> to vector<8x1xf32>
    %cst_6 = arith.constant 3.200000e+01 : f32
    %8 = vector.broadcast %cst_6 : f32 to vector<8x1xf32>
    %9 = arith.divf %7, %8 : vector<8x1xf32>
    %10 = vector.broadcast %9 : vector<8x1xf32> to vector<8x32xf32>
    %11 = arith.subf %1, %10 : vector<8x32xf32>
    %12 = arith.mulf %11, %11 : vector<8x32xf32>
    %cst_7 = arith.constant dense<0.000000e+00> : vector<8xf32>
    %13 = vector.multi_reduction <add>, %12, %cst_7 [1] : vector<8x32xf32> to vector<8xf32>
    %14 = vector.shape_cast %13 : vector<8xf32> to vector<8x1xf32>
    %cst_8 = arith.constant 0.0322580636 : f32
    %15 = vector.broadcast %cst_8 : f32 to vector<8x1xf32>
    %16 = arith.mulf %14, %15 : vector<8x1xf32>
    %17 = vector.broadcast %9 : vector<8x1xf32> to vector<8x32xf32>
    %18 = arith.subf %1, %17 : vector<8x32xf32>
    %19 = vector.broadcast %4 : f32 to vector<8x32xf32>
    %20 = arith.mulf %19, %18 : vector<8x32xf32>
    %21 = math.sqrt %16 : vector<8x1xf32>
    %cst_9 = arith.constant 9.99999997E-7 : f32
    %22 = vector.broadcast %cst_9 : f32 to vector<8x1xf32>
    %23 = arith.addf %21, %22 : vector<8x1xf32>
    %24 = vector.broadcast %23 : vector<8x1xf32> to vector<8x32xf32>
    %25 = arith.divf %20, %24 : vector<8x32xf32>
    %26 = vector.broadcast %5 : f32 to vector<8x32xf32>
    %27 = arith.addf %25, %26 : vector<8x32xf32>
    %28 = arith.truncf %27 : vector<8x32xf32> to vector<8x32xbf16>
    %c0_10 = arith.constant 0 : index
    %c0_11 = arith.constant 0 : index
    %29 = vector.load %arg5[%c0_10, %c0_11] : memref<32x320xbf16, #tpu.memory_space<vmem>>, vector<32x96xbf16>
    %cst_12 = arith.constant dense<0.000000e+00> : vector<8x96xf32>
    %30 = tpu.matmul %28, %29, %cst_12 {dimension_numbers = #tpu.dot_dimension_numbers<[1], [0], [0], [1], [0, 0, 1, 1], [], []>} : vector<8x32xbf16>, vector<32x96xbf16>, vector<8x96xf32> -> vector<8x96xf32>
    %31 = arith.truncf %30 : vector<8x96xf32> to vector<8x96xbf16>
    %32 = vector.extract_strided_slice %31 {offsets = [0, 0], sizes = [8, 8], strides = [1, 1]} : vector<8x96xbf16> to vector<8x8xbf16>
    %33 = vector.extract_strided_slice %31 {offsets = [0, 8], sizes = [8, 8], strides = [1, 1]} : vector<8x96xbf16> to vector<8x8xbf16>
    %34 = vector.extract_strided_slice %31 {offsets = [0, 16], sizes = [8, 8], strides = [1, 1]} : vector<8x96xbf16> to vector<8x8xbf16>
    %35 = vector.extract_strided_slice %31 {offsets = [0, 24], sizes = [8, 8], strides = [1, 1]} : vector<8x96xbf16> to vector<8x8xbf16>
    %36 = vector.extract_strided_slice %31 {offsets = [0, 32], sizes = [8, 8], strides = [1, 1]} : vector<8x96xbf16> to vector<8x8xbf16>
    %37 = vector.extract_strided_slice %31 {offsets = [0, 40], sizes = [8, 8], strides = [1, 1]} : vector<8x96xbf16> to vector<8x8xbf16>
    %38 = vector.extract_strided_slice %31 {offsets = [0, 48], sizes = [8, 8], strides = [1, 1]} : vector<8x96xbf16> to vector<8x8xbf16>
    %39 = vector.extract_strided_slice %31 {offsets = [0, 56], sizes = [8, 8], strides = [1, 1]} : vector<8x96xbf16> to vector<8x8xbf16>
    %40 = vector.extract_strided_slice %31 {offsets = [0, 64], sizes = [8, 8], strides = [1, 1]} : vector<8x96xbf16> to vector<8x8xbf16>
    %41 = vector.extract_strided_slice %31 {offsets = [0, 72], sizes = [8, 8], strides = [1, 1]} : vector<8x96xbf16> to vector<8x8xbf16>
    %42 = vector.extract_strided_slice %31 {offsets = [0, 80], sizes = [8, 8], strides = [1, 1]} : vector<8x96xbf16> to vector<8x8xbf16>
    %43 = vector.extract_strided_slice %31 {offsets = [0, 88], sizes = [8, 8], strides = [1, 1]} : vector<8x96xbf16> to vector<8x8xbf16>
    %44 = vector.shape_cast %32 : vector<8x8xbf16> to vector<1x8x8xbf16>
    %45 = vector.shape_cast %33 : vector<8x8xbf16> to vector<1x8x8xbf16>
    %46 = vector.shape_cast %34 : vector<8x8xbf16> to vector<1x8x8xbf16>
    %47 = vector.shape_cast %35 : vector<8x8xbf16> to vector<1x8x8xbf16>
    %48 = vector.shape_cast %36 : vector<8x8xbf16> to vector<1x8x8xbf16>
    %49 = vector.shape_cast %37 : vector<8x8xbf16> to vector<1x8x8xbf16>
    %50 = vector.shape_cast %38 : vector<8x8xbf16> to vector<1x8x8xbf16>
    %51 = vector.shape_cast %39 : vector<8x8xbf16> to vector<1x8x8xbf16>
    %52 = vector.shape_cast %40 : vector<8x8xbf16> to vector<1x8x8xbf16>
    %53 = vector.shape_cast %41 : vector<8x8xbf16> to vector<1x8x8xbf16>
    %54 = vector.shape_cast %42 : vector<8x8xbf16> to vector<1x8x8xbf16>
    %55 = vector.shape_cast %43 : vector<8x8xbf16> to vector<1x8x8xbf16>
    %56 = tpu.concatenate %44, %45, %46, %47, %48, %49, %50, %51, %52, %53, %54, %55 in 0 : vector<1x8x8xbf16>, vector<1x8x8xbf16>, vector<1x8x8xbf16>, vector<1x8x8xbf16>, vector<1x8x8xbf16>, vector<1x8x8xbf16>, vector<1x8x8xbf16>, vector<1x8x8xbf16>, vector<1x8x8xbf16>, vector<1x8x8xbf16>, vector<1x8x8xbf16>, vector<1x8x8xbf16> -> vector<12x8x8xbf16>
    %57 = vector.extract_strided_slice %56 {offsets = [0, 0, 0], sizes = [4, 8, 8], strides = [1, 1, 1]} : vector<12x8x8xbf16> to vector<4x8x8xbf16>
    %58 = vector.extract_strided_slice %56 {offsets = [4, 0, 0], sizes = [4, 8, 8], strides = [1, 1, 1]} : vector<12x8x8xbf16> to vector<4x8x8xbf16>
    %59 = vector.extract_strided_slice %56 {offsets = [8, 0, 0], sizes = [4, 8, 8], strides = [1, 1, 1]} : vector<12x8x8xbf16> to vector<4x8x8xbf16>
    %c0_13 = arith.constant 0 : index
    %c0_14 = arith.constant 0 : index
    %c0_15 = arith.constant 0 : index
    %60 = vector.load %arg3[%c0_13, %c0_14, %c0_15] : memref<1x8x8xbf16, #tpu.memory_space<vmem>>, vector<1x8x8xbf16>
    %61 = vector.shape_cast %60 : vector<1x8x8xbf16> to vector<8x8xbf16>
    %c0_16 = arith.constant 0 : index
    %c192 = arith.constant 192 : index
    %62 = vector.load %arg5[%c0_16, %c192] : memref<32x320xbf16, #tpu.memory_space<vmem>>, vector<32x32xbf16>
    %cst_17 = arith.constant dense<0.000000e+00> : vector<4x8x8xf32>
    %63 = tpu.matmul %57, %58, %cst_17 {dimension_numbers = #tpu.dot_dimension_numbers<[2], [2], [1], [1], [0, 0, 0, 1, 1, 1], [0], [0]>} : vector<4x8x8xbf16>, vector<4x8x8xbf16>, vector<4x8x8xf32> -> vector<4x8x8xf32>
    %64 = arith.extf %61 : vector<8x8xbf16> to vector<8x8xf32>
    %65 = vector.shape_cast %64 : vector<8x8xf32> to vector<1x8x8xf32>
    %66 = vector.broadcast %65 : vector<1x8x8xf32> to vector<4x8x8xf32>
    %67 = arith.addf %63, %66 : vector<4x8x8xf32>
    %cst_18 = arith.constant dense<0xFF800000> : vector<4x8xf32>
    %68 = vector.multi_reduction <maximumf>, %67, %cst_18 [2] : vector<4x8x8xf32> to vector<4x8xf32>
    %69 = vector.shape_cast %68 : vector<4x8xf32> to vector<4x8x1xf32>
    %70 = vector.broadcast %69 : vector<4x8x1xf32> to vector<4x8x8xf32>
    %71 = arith.subf %67, %70 : vector<4x8x8xf32>
    %72 = math.exp %71 : vector<4x8x8xf32>
    %cst_19 = arith.constant dense<0.000000e+00> : vector<4x8xf32>
    %73 = vector.multi_reduction <add>, %72, %cst_19 [2] : vector<4x8x8xf32> to vector<4x8xf32>
    %74 = vector.shape_cast %73 : vector<4x8xf32> to vector<4x8x1xf32>
    %75 = tpu.reciprocal %74 {approx = true} : vector<4x8x1xf32> -> vector<4x8x1xf32>
    %76 = vector.broadcast %75 : vector<4x8x1xf32> to vector<4x8x8xf32>
    %77 = arith.mulf %72, %76 : vector<4x8x8xf32>
    %78 = arith.truncf %77 : vector<4x8x8xf32> to vector<4x8x8xbf16>
    %cst_20 = arith.constant dense<0.000000e+00> : vector<4x8x8xf32>
    %79 = tpu.matmul %78, %59, %cst_20 {dimension_numbers = #tpu.dot_dimension_numbers<[2], [1], [1], [2], [0, 0, 0, 1, 1, 2], [0], [0]>} : vector<4x8x8xbf16>, vector<4x8x8xbf16>, vector<4x8x8xf32> -> vector<4x8x8xf32>
    %80 = vector.extract_strided_slice %79 {offsets = [0, 0, 0], sizes = [1, 8, 8], strides = [1, 1, 1]} : vector<4x8x8xf32> to vector<1x8x8xf32>
    %81 = vector.shape_cast %80 : vector<1x8x8xf32> to vector<8x8xf32>
    %82 = vector.extract_strided_slice %79 {offsets = [1, 0, 0], sizes = [1, 8, 8], strides = [1, 1, 1]} : vector<4x8x8xf32> to vector<1x8x8xf32>
    %83 = vector.shape_cast %82 : vector<1x8x8xf32> to vector<8x8xf32>
    %84 = vector.extract_strided_slice %79 {offsets = [2, 0, 0], sizes = [1, 8, 8], strides = [1, 1, 1]} : vector<4x8x8xf32> to vector<1x8x8xf32>
    %85 = vector.shape_cast %84 : vector<1x8x8xf32> to vector<8x8xf32>
    %86 = vector.extract_strided_slice %79 {offsets = [3, 0, 0], sizes = [1, 8, 8], strides = [1, 1, 1]} : vector<4x8x8xf32> to vector<1x8x8xf32>
    %87 = vector.shape_cast %86 : vector<1x8x8xf32> to vector<8x8xf32>
    %88 = tpu.concatenate %81, %83, %85, %87 in 1 : vector<8x8xf32>, vector<8x8xf32>, vector<8x8xf32>, vector<8x8xf32> -> vector<8x32xf32>
    %89 = arith.truncf %88 : vector<8x32xf32> to vector<8x32xbf16>
    %cst_21 = arith.constant dense<0.000000e+00> : vector<8x32xf32>
    %90 = tpu.matmul %89, %62, %cst_21 {dimension_numbers = #tpu.dot_dimension_numbers<[1], [0], [0], [1], [0, 0, 1, 1], [], []>} : vector<8x32xbf16>, vector<32x32xbf16>, vector<8x32xf32> -> vector<8x32xf32>
    %91 = arith.addf %1, %90 : vector<8x32xf32>
    %c2 = arith.constant 2 : index
    %92 = memref.load %arg8[%c2] : memref<6xf32, #tpu.memory_space<smem>>
    %c3 = arith.constant 3 : index
    %93 = memref.load %arg8[%c3] : memref<6xf32, #tpu.memory_space<smem>>
    %cst_22 = arith.constant dense<0.000000e+00> : vector<8xf32>
    %94 = vector.multi_reduction <add>, %91, %cst_22 [1] : vector<8x32xf32> to vector<8xf32>
    %95 = vector.shape_cast %94 : vector<8xf32> to vector<8x1xf32>
    %cst_23 = arith.constant 3.200000e+01 : f32
    %96 = vector.broadcast %cst_23 : f32 to vector<8x1xf32>
    %97 = arith.divf %95, %96 : vector<8x1xf32>
    %98 = vector.broadcast %97 : vector<8x1xf32> to vector<8x32xf32>
    %99 = arith.subf %91, %98 : vector<8x32xf32>
    %100 = arith.mulf %99, %99 : vector<8x32xf32>
    %cst_24 = arith.constant dense<0.000000e+00> : vector<8xf32>
    %101 = vector.multi_reduction <add>, %100, %cst_24 [1] : vector<8x32xf32> to vector<8xf32>
    %102 = vector.shape_cast %101 : vector<8xf32> to vector<8x1xf32>
    %cst_25 = arith.constant 0.0322580636 : f32
    %103 = vector.broadcast %cst_25 : f32 to vector<8x1xf32>
    %104 = arith.mulf %102, %103 : vector<8x1xf32>
    %105 = vector.broadcast %97 : vector<8x1xf32> to vector<8x32xf32>
    %106 = arith.subf %91, %105 : vector<8x32xf32>
    %107 = vector.broadcast %92 : f32 to vector<8x32xf32>
    %108 = arith.mulf %107, %106 : vector<8x32xf32>
    %109 = math.sqrt %104 : vector<8x1xf32>
    %cst_26 = arith.constant 9.99999997E-7 : f32
    %110 = vector.broadcast %cst_26 : f32 to vector<8x1xf32>
    %111 = arith.addf %109, %110 : vector<8x1xf32>
    %112 = vector.broadcast %111 : vector<8x1xf32> to vector<8x32xf32>
    %113 = arith.divf %108, %112 : vector<8x32xf32>
    %114 = vector.broadcast %93 : f32 to vector<8x32xf32>
    %115 = arith.addf %113, %114 : vector<8x32xf32>
    %116 = arith.truncf %115 : vector<8x32xf32> to vector<8x32xbf16>
    %c0_27 = arith.constant 0 : index
    %c96 = arith.constant 96 : index
    %117 = vector.load %arg5[%c0_27, %c96] : memref<32x320xbf16, #tpu.memory_space<vmem>>, vector<32x32xbf16>
    %cst_28 = arith.constant dense<0.000000e+00> : vector<8x32xf32>
    %118 = tpu.matmul %116, %117, %cst_28 {dimension_numbers = #tpu.dot_dimension_numbers<[1], [0], [0], [1], [0, 0, 1, 1], [], []>} : vector<8x32xbf16>, vector<32x32xbf16>, vector<8x32xf32> -> vector<8x32xf32>
    %119 = arith.truncf %118 : vector<8x32xf32> to vector<8x32xbf16>
    %c0_29 = arith.constant 0 : index
    %c128 = arith.constant 128 : index
    %120 = vector.load %arg5[%c0_29, %c128] : memref<32x320xbf16, #tpu.memory_space<vmem>>, vector<32x64xbf16>
    %cst_30 = arith.constant dense<0.000000e+00> : vector<16x64xf32>
    %121 = tpu.matmul %3, %120, %cst_30 {dimension_numbers = #tpu.dot_dimension_numbers<[1], [0], [0], [1], [0, 0, 1, 1], [], []>} : vector<16x32xbf16>, vector<32x64xbf16>, vector<16x64xf32> -> vector<16x64xf32>
    %122 = arith.truncf %121 : vector<16x64xf32> to vector<16x64xbf16>
    %123 = vector.extract_strided_slice %119 {offsets = [0, 0], sizes = [8, 8], strides = [1, 1]} : vector<8x32xbf16> to vector<8x8xbf16>
    %124 = vector.extract_strided_slice %119 {offsets = [0, 8], sizes = [8, 8], strides = [1, 1]} : vector<8x32xbf16> to vector<8x8xbf16>
    %125 = vector.extract_strided_slice %119 {offsets = [0, 16], sizes = [8, 8], strides = [1, 1]} : vector<8x32xbf16> to vector<8x8xbf16>
    %126 = vector.extract_strided_slice %119 {offsets = [0, 24], sizes = [8, 8], strides = [1, 1]} : vector<8x32xbf16> to vector<8x8xbf16>
    %127 = vector.shape_cast %123 : vector<8x8xbf16> to vector<1x8x8xbf16>
    %128 = vector.shape_cast %124 : vector<8x8xbf16> to vector<1x8x8xbf16>
    %129 = vector.shape_cast %125 : vector<8x8xbf16> to vector<1x8x8xbf16>
    %130 = vector.shape_cast %126 : vector<8x8xbf16> to vector<1x8x8xbf16>
    %131 = tpu.concatenate %127, %128, %129, %130 in 0 : vector<1x8x8xbf16>, vector<1x8x8xbf16>, vector<1x8x8xbf16>, vector<1x8x8xbf16> -> vector<4x8x8xbf16>
    %132 = vector.extract_strided_slice %122 {offsets = [0, 0], sizes = [16, 8], strides = [1, 1]} : vector<16x64xbf16> to vector<16x8xbf16>
    %133 = vector.extract_strided_slice %122 {offsets = [0, 8], sizes = [16, 8], strides = [1, 1]} : vector<16x64xbf16> to vector<16x8xbf16>
    %134 = vector.extract_strided_slice %122 {offsets = [0, 16], sizes = [16, 8], strides = [1, 1]} : vector<16x64xbf16> to vector<16x8xbf16>
    %135 = vector.extract_strided_slice %122 {offsets = [0, 24], sizes = [16, 8], strides = [1, 1]} : vector<16x64xbf16> to vector<16x8xbf16>
    %136 = vector.extract_strided_slice %122 {offsets = [0, 32], sizes = [16, 8], strides = [1, 1]} : vector<16x64xbf16> to vector<16x8xbf16>
    %137 = vector.extract_strided_slice %122 {offsets = [0, 40], sizes = [16, 8], strides = [1, 1]} : vector<16x64xbf16> to vector<16x8xbf16>
    %138 = vector.extract_strided_slice %122 {offsets = [0, 48], sizes = [16, 8], strides = [1, 1]} : vector<16x64xbf16> to vector<16x8xbf16>
    %139 = vector.extract_strided_slice %122 {offsets = [0, 56], sizes = [16, 8], strides = [1, 1]} : vector<16x64xbf16> to vector<16x8xbf16>
    %140 = vector.shape_cast %132 : vector<16x8xbf16> to vector<1x16x8xbf16>
    %141 = vector.shape_cast %133 : vector<16x8xbf16> to vector<1x16x8xbf16>
    %142 = vector.shape_cast %134 : vector<16x8xbf16> to vector<1x16x8xbf16>
    %143 = vector.shape_cast %135 : vector<16x8xbf16> to vector<1x16x8xbf16>
    %144 = vector.shape_cast %136 : vector<16x8xbf16> to vector<1x16x8xbf16>
    %145 = vector.shape_cast %137 : vector<16x8xbf16> to vector<1x16x8xbf16>
    %146 = vector.shape_cast %138 : vector<16x8xbf16> to vector<1x16x8xbf16>
    %147 = vector.shape_cast %139 : vector<16x8xbf16> to vector<1x16x8xbf16>
    %148 = tpu.concatenate %140, %141, %142, %143, %144, %145, %146, %147 in 0 : vector<1x16x8xbf16>, vector<1x16x8xbf16>, vector<1x16x8xbf16>, vector<1x16x8xbf16>, vector<1x16x8xbf16>, vector<1x16x8xbf16>, vector<1x16x8xbf16>, vector<1x16x8xbf16> -> vector<8x16x8xbf16>
    %149 = vector.extract_strided_slice %148 {offsets = [0, 0, 0], sizes = [4, 16, 8], strides = [1, 1, 1]} : vector<8x16x8xbf16> to vector<4x16x8xbf16>
    %150 = vector.extract_strided_slice %148 {offsets = [4, 0, 0], sizes = [4, 16, 8], strides = [1, 1, 1]} : vector<8x16x8xbf16> to vector<4x16x8xbf16>
    %c0_31 = arith.constant 0 : index
    %c0_32 = arith.constant 0 : index
    %c0_33 = arith.constant 0 : index
    %151 = vector.load %arg4[%c0_31, %c0_32, %c0_33] : memref<1x8x16xbf16, #tpu.memory_space<vmem>>, vector<1x8x16xbf16>
    %152 = vector.shape_cast %151 : vector<1x8x16xbf16> to vector<8x16xbf16>
    %c0_34 = arith.constant 0 : index
    %c224 = arith.constant 224 : index
    %153 = vector.load %arg5[%c0_34, %c224] : memref<32x320xbf16, #tpu.memory_space<vmem>>, vector<32x32xbf16>
    %cst_35 = arith.constant dense<0.000000e+00> : vector<4x8x16xf32>
    %154 = tpu.matmul %131, %149, %cst_35 {dimension_numbers = #tpu.dot_dimension_numbers<[2], [2], [1], [1], [0, 0, 0, 1, 1, 1], [0], [0]>} : vector<4x8x8xbf16>, vector<4x16x8xbf16>, vector<4x8x16xf32> -> vector<4x8x16xf32>
    %155 = arith.extf %152 : vector<8x16xbf16> to vector<8x16xf32>
    %156 = vector.shape_cast %155 : vector<8x16xf32> to vector<1x8x16xf32>
    %157 = vector.broadcast %156 : vector<1x8x16xf32> to vector<4x8x16xf32>
    %158 = arith.addf %154, %157 : vector<4x8x16xf32>
    %cst_36 = arith.constant dense<0xFF800000> : vector<4x8xf32>
    %159 = vector.multi_reduction <maximumf>, %158, %cst_36 [2] : vector<4x8x16xf32> to vector<4x8xf32>
    %160 = vector.shape_cast %159 : vector<4x8xf32> to vector<4x8x1xf32>
    %161 = vector.broadcast %160 : vector<4x8x1xf32> to vector<4x8x16xf32>
    %162 = arith.subf %158, %161 : vector<4x8x16xf32>
    %163 = math.exp %162 : vector<4x8x16xf32>
    %cst_37 = arith.constant dense<0.000000e+00> : vector<4x8xf32>
    %164 = vector.multi_reduction <add>, %163, %cst_37 [2] : vector<4x8x16xf32> to vector<4x8xf32>
    %165 = vector.shape_cast %164 : vector<4x8xf32> to vector<4x8x1xf32>
    %166 = tpu.reciprocal %165 {approx = true} : vector<4x8x1xf32> -> vector<4x8x1xf32>
    %167 = vector.broadcast %166 : vector<4x8x1xf32> to vector<4x8x16xf32>
    %168 = arith.mulf %163, %167 : vector<4x8x16xf32>
    %169 = arith.truncf %168 : vector<4x8x16xf32> to vector<4x8x16xbf16>
    %cst_38 = arith.constant dense<0.000000e+00> : vector<4x8x8xf32>
    %170 = tpu.matmul %169, %150, %cst_38 {dimension_numbers = #tpu.dot_dimension_numbers<[2], [1], [1], [2], [0, 0, 0, 1, 1, 2], [0], [0]>} : vector<4x8x16xbf16>, vector<4x16x8xbf16>, vector<4x8x8xf32> -> vector<4x8x8xf32>
    %171 = vector.extract_strided_slice %170 {offsets = [0, 0, 0], sizes = [1, 8, 8], strides = [1, 1, 1]} : vector<4x8x8xf32> to vector<1x8x8xf32>
    %172 = vector.shape_cast %171 : vector<1x8x8xf32> to vector<8x8xf32>
    %173 = vector.extract_strided_slice %170 {offsets = [1, 0, 0], sizes = [1, 8, 8], strides = [1, 1, 1]} : vector<4x8x8xf32> to vector<1x8x8xf32>
    %174 = vector.shape_cast %173 : vector<1x8x8xf32> to vector<8x8xf32>
    %175 = vector.extract_strided_slice %170 {offsets = [2, 0, 0], sizes = [1, 8, 8], strides = [1, 1, 1]} : vector<4x8x8xf32> to vector<1x8x8xf32>
    %176 = vector.shape_cast %175 : vector<1x8x8xf32> to vector<8x8xf32>
    %177 = vector.extract_strided_slice %170 {offsets = [3, 0, 0], sizes = [1, 8, 8], strides = [1, 1, 1]} : vector<4x8x8xf32> to vector<1x8x8xf32>
    %178 = vector.shape_cast %177 : vector<1x8x8xf32> to vector<8x8xf32>
    %179 = tpu.concatenate %172, %174, %176, %178 in 1 : vector<8x8xf32>, vector<8x8xf32>, vector<8x8xf32>, vector<8x8xf32> -> vector<8x32xf32>
    %180 = arith.truncf %179 : vector<8x32xf32> to vector<8x32xbf16>
    %cst_39 = arith.constant dense<0.000000e+00> : vector<8x32xf32>
    %181 = tpu.matmul %180, %153, %cst_39 {dimension_numbers = #tpu.dot_dimension_numbers<[1], [0], [0], [1], [0, 0, 1, 1], [], []>} : vector<8x32xbf16>, vector<32x32xbf16>, vector<8x32xf32> -> vector<8x32xf32>
    %182 = arith.addf %91, %181 : vector<8x32xf32>
    %c4 = arith.constant 4 : index
    %183 = memref.load %arg8[%c4] : memref<6xf32, #tpu.memory_space<smem>>
    %c5 = arith.constant 5 : index
    %184 = memref.load %arg8[%c5] : memref<6xf32, #tpu.memory_space<smem>>
    %cst_40 = arith.constant dense<0.000000e+00> : vector<8xf32>
    %185 = vector.multi_reduction <add>, %182, %cst_40 [1] : vector<8x32xf32> to vector<8xf32>
    %186 = vector.shape_cast %185 : vector<8xf32> to vector<8x1xf32>
    %cst_41 = arith.constant 3.200000e+01 : f32
    %187 = vector.broadcast %cst_41 : f32 to vector<8x1xf32>
    %188 = arith.divf %186, %187 : vector<8x1xf32>
    %189 = vector.broadcast %188 : vector<8x1xf32> to vector<8x32xf32>
    %190 = arith.subf %182, %189 : vector<8x32xf32>
    %191 = arith.mulf %190, %190 : vector<8x32xf32>
    %cst_42 = arith.constant dense<0.000000e+00> : vector<8xf32>
    %192 = vector.multi_reduction <add>, %191, %cst_42 [1] : vector<8x32xf32> to vector<8xf32>
    %193 = vector.shape_cast %192 : vector<8xf32> to vector<8x1xf32>
    %cst_43 = arith.constant 0.0322580636 : f32
    %194 = vector.broadcast %cst_43 : f32 to vector<8x1xf32>
    %195 = arith.mulf %193, %194 : vector<8x1xf32>
    %196 = vector.broadcast %188 : vector<8x1xf32> to vector<8x32xf32>
    %197 = arith.subf %182, %196 : vector<8x32xf32>
    %198 = vector.broadcast %183 : f32 to vector<8x32xf32>
    %199 = arith.mulf %198, %197 : vector<8x32xf32>
    %200 = math.sqrt %195 : vector<8x1xf32>
    %cst_44 = arith.constant 9.99999997E-7 : f32
    %201 = vector.broadcast %cst_44 : f32 to vector<8x1xf32>
    %202 = arith.addf %200, %201 : vector<8x1xf32>
    %203 = vector.broadcast %202 : vector<8x1xf32> to vector<8x32xf32>
    %204 = arith.divf %199, %203 : vector<8x32xf32>
    %205 = vector.broadcast %184 : f32 to vector<8x32xf32>
    %206 = arith.addf %204, %205 : vector<8x32xf32>
    %207 = arith.truncf %206 : vector<8x32xf32> to vector<8x32xbf16>
    %c0_45 = arith.constant 0 : index
    %c256 = arith.constant 256 : index
    %208 = vector.load %arg5[%c0_45, %c256] : memref<32x320xbf16, #tpu.memory_space<vmem>>, vector<32x64xbf16>
    %cst_46 = arith.constant dense<0.000000e+00> : vector<8x64xf32>
    %209 = tpu.matmul %207, %208, %cst_46 {dimension_numbers = #tpu.dot_dimension_numbers<[1], [0], [0], [1], [0, 0, 1, 1], [], []>} : vector<8x32xbf16>, vector<32x64xbf16>, vector<8x64xf32> -> vector<8x64xf32>
    %c0_47 = arith.constant 0 : index
    %c0_48 = arith.constant 0 : index
    %210 = vector.load %arg7[%c0_47, %c0_48] : memref<1x96xf32, #tpu.memory_space<vmem>>, vector<1x64xf32>
    %211 = vector.broadcast %210 : vector<1x64xf32> to vector<8x64xf32>
    %212 = arith.addf %209, %211 : vector<8x64xf32>
    %cst_49 = arith.constant 0.000000e+00 : f32
    %213 = vector.broadcast %cst_49 : f32 to vector<8x64xf32>
    %214 = arith.maximumf %212, %213 : vector<8x64xf32>
    %215 = arith.truncf %214 : vector<8x64xf32> to vector<8x64xbf16>
    %c0_50 = arith.constant 0 : index
    %c0_51 = arith.constant 0 : index
    %216 = vector.load %arg6[%c0_50, %c0_51] : memref<64x32xbf16, #tpu.memory_space<vmem>>, vector<64x32xbf16>
    %cst_52 = arith.constant dense<0.000000e+00> : vector<8x32xf32>
    %217 = tpu.matmul %215, %216, %cst_52 {dimension_numbers = #tpu.dot_dimension_numbers<[1], [0], [0], [1], [0, 0, 1, 1], [], []>} : vector<8x64xbf16>, vector<64x32xbf16>, vector<8x32xf32> -> vector<8x32xf32>
    %c0_53 = arith.constant 0 : index
    %c64 = arith.constant 64 : index
    %218 = vector.load %arg7[%c0_53, %c64] : memref<1x96xf32, #tpu.memory_space<vmem>>, vector<1x32xf32>
    %219 = vector.broadcast %218 : vector<1x32xf32> to vector<8x32xf32>
    %220 = arith.addf %217, %219 : vector<8x32xf32>
    %221 = arith.addf %182, %220 : vector<8x32xf32>
    %c0_54 = arith.constant 0 : index
    %c0_55 = arith.constant 0 : index
    %c0_56 = arith.constant 0 : index
    %222 = vector.load %arg9[%c0_54, %c0_55, %c0_56] : memref<1x8x32xf32, #tpu.memory_space<vmem>>, vector<1x8x32xf32>
    %223 = vector.shape_cast %222 : vector<1x8x32xf32> to vector<8x32xf32>
    %224 = vector.shape_cast %221 : vector<8x32xf32> to vector<1x8x32xf32>
    tpu.vector_store %arg9[%c0_54, %c0_55, %c0_56], %224 {strides = array<i32>} : memref<1x8x32xf32, #tpu.memory_space<vmem>>, vector<1x8x32xf32>,
    return
  }
  func.func @transform_0(%arg0: i32) -> (i32, i32, i32) {
    %c0_i32 = arith.constant 0 : i32
    %c0_i32_0 = arith.constant 0 : i32
    %c0_i32_1 = arith.constant 0 : i32
    return %arg0, %c0_i32, %c0_i32_0 : i32, i32, i32
  }
  func.func @transform_1(%arg0: i32) -> (i32, i32, i32) {
    %c0_i32 = arith.constant 0 : i32
    %c0_i32_0 = arith.constant 0 : i32
    %c0_i32_1 = arith.constant 0 : i32
    return %arg0, %c0_i32, %c0_i32_0 : i32, i32, i32
  }
  func.func @transform_2(%arg0: i32) -> (i32, i32, i32) {
    %c0_i32 = arith.constant 0 : i32
    %c0_i32_0 = arith.constant 0 : i32
    %c0_i32_1 = arith.constant 0 : i32
    return %arg0, %c0_i32, %c0_i32_0 : i32, i32, i32
  }
  func.func @transform_3(%arg0: i32) -> (i32, i32, i32) {
    %c0_i32 = arith.constant 0 : i32
    %c0_i32_0 = arith.constant 0 : i32
    %c0_i32_1 = arith.constant 0 : i32
    return %arg0, %c0_i32, %c0_i32_0 : i32, i32, i32
  }
  func.func @transform_4(%arg0: i32) -> (i32, i32) {
    %c0_i32 = arith.constant 0 : i32
    %c0_i32_0 = arith.constant 0 : i32
    %c0_i32_1 = arith.constant 0 : i32
    return %c0_i32, %c0_i32_0 : i32, i32
  }
  func.func @transform_5(%arg0: i32) -> (i32, i32) {
    %c0_i32 = arith.constant 0 : i32
    %c0_i32_0 = arith.constant 0 : i32
    %c0_i32_1 = arith.constant 0 : i32
    return %c0_i32, %c0_i32_0 : i32, i32
  }
  func.func @transform_6(%arg0: i32) -> (i32, i32) {
    %c0_i32 = arith.constant 0 : i32
    %c0_i32_0 = arith.constant 0 : i32
    %c0_i32_1 = arith.constant 0 : i32
    return %c0_i32, %c0_i32_0 : i32, i32
  }
  func.func @transform_7(%arg0: i32) -> i32 {
    %c0_i32 = arith.constant 0 : i32
    %c0_i32_0 = arith.constant 0 : i32
    return %c0_i32 : i32
  }
  func.func @transform_8(%arg0: i32) -> (i32, i32, i32) {
    %c0_i32 = arith.constant 0 : i32
    %c0_i32_0 = arith.constant 0 : i32
    %c0_i32_1 = arith.constant 0 : i32
    return %arg0, %c0_i32, %c0_i32_0 : i32, i32, i32
  }
}

module attributes {stable_mosaic.version = 11 : i64} {
  func.func @decoder_block_kernel(%arg0: i32, %arg1: memref<1x8x32xf32, #tpu.memory_space<vmem>>, %arg2: memref<1x16x32xbf16, #tpu.memory_space<vmem>>, %arg3: memref<1x8x8xbf16, #tpu.memory_space<vmem>>, %arg4: memref<1x8x16xbf16, #tpu.memory_space<vmem>>, %arg5: memref<32x320xbf16, #tpu.memory_space<vmem>>, %arg6: memref<64x32xbf16, #tpu.memory_space<vmem>>, %arg7: memref<1x96xf32, #tpu.memory_space<vmem>>, %arg8: memref<6xf32, #tpu.memory_space<smem>>, %arg9: memref<1x8x32xf32, #tpu.memory_space<vmem>>) attributes {dimension_semantics = [#tpu.dimension_semantics<parallel>], iteration_bounds = array<i64: 2>, scalar_prefetch = 0 : i64, scratch_operands = 0 : i64, tpu.core_type = #tpu.core_type<tc>, window_params = [{transform_indices = @transform_0, window_bounds = array<i64: 1, 8, 32>}, {transform_indices = @transform_1, window_bounds = array<i64: 1, 16, 32>}, {transform_indices = @transform_2, window_bounds = array<i64: 1, 8, 8>}, {transform_indices = @transform_3, window_bounds = array<i64: 1, 8, 16>}, {pipeline_mode = #tpu.pipeline_mode<synchronous>, transform_indices = @transform_4, window_bounds = array<i64: 32, 320>}, {pipeline_mode = #tpu.pipeline_mode<synchronous>, transform_indices = @transform_5, window_bounds = array<i64: 64, 32>}, {pipeline_mode = #tpu.pipeline_mode<synchronous>, transform_indices = @transform_6, window_bounds = array<i64: 1, 96>}, {transform_indices = @transform_7, window_bounds = array<i64: 6>}, {transform_indices = @transform_8, window_bounds = array<i64: 1, 8, 32>}]} {
    %c0 = arith.constant 0 : index
    %c0_0 = arith.constant 0 : index
    %c0_1 = arith.constant 0 : index
    %0 = vector.load %arg1[%c0, %c0_0, %c0_1] : memref<1x8x32xf32, #tpu.memory_space<vmem>>, vector<1x8x32xf32>
    %1 = vector.shape_cast %0 : vector<1x8x32xf32> to vector<8x32xf32>
    %c0_2 = arith.constant 0 : index
    %c0_3 = arith.constant 0 : index
    %c0_4 = arith.constant 0 : index
    %2 = vector.load %arg2[%c0_2, %c0_3, %c0_4] : memref<1x16x32xbf16, #tpu.memory_space<vmem>>, vector<1x16x32xbf16>
    %3 = vector.shape_cast %2 : vector<1x16x32xbf16> to vector<16x32xbf16>
    %c0_5 = arith.constant 0 : index
    %4 = memref.load %arg8[%c0_5] : memref<6xf32, #tpu.memory_space<smem>>
    %c1 = arith.constant 1 : index
    %5 = memref.load %arg8[%c1] : memref<6xf32, #tpu.memory_space<smem>>
    %cst = arith.constant dense<0.000000e+00> : vector<8xf32>
    %6 = vector.multi_reduction <add>, %1, %cst [1] : vector<8x32xf32> to vector<8xf32>
    %7 = vector.shape_cast %6 : vector<8xf32> to vector<8x1xf32>
    %cst_6 = arith.constant 3.200000e+01 : f32
    %8 = vector.broadcast %cst_6 : f32 to vector<8x1xf32>
    %9 = arith.divf %7, %8 : vector<8x1xf32>
    %10 = vector.broadcast %9 : vector<8x1xf32> to vector<8x32xf32>
    %11 = arith.subf %1, %10 : vector<8x32xf32>
    %12 = arith.mulf %11, %11 : vector<8x32xf32>
    %cst_7 = arith.constant dense<0.000000e+00> : vector<8xf32>
    %13 = vector.multi_reduction <add>, %12, %cst_7 [1] : vector<8x32xf32> to vector<8xf32>
    %14 = vector.shape_cast %13 : vector<8xf32> to vector<8x1xf32>
    %cst_8 = arith.constant 0.0322580636 : f32
    %15 = vector.broadcast %cst_8 : f32 to vector<8x1xf32>
    %16 = arith.mulf %14, %15 : vector<8x1xf32>
    %17 = vector.broadcast %9 : vector<8x1xf32> to vector<8x32xf32>
    %18 = arith.subf %1, %17 : vector<8x32xf32>
    %19 = vector.broadcast %4 : f32 to vector<8x32xf32>
    %20 = arith.mulf %19, %18 : vector<8x32xf32>
    %21 = math.sqrt %16 : vector<8x1xf32>
    %cst_9 = arith.constant 9.99999997E-7 : f32
    %22 = vector.broadcast %cst_9 : f32 to vector<8x1xf32>
    %23 = arith.addf %21, %22 : vector<8x1xf32>
    %24 = vector.broadcast %23 : vector<8x1xf32> to vector<8x32xf32>
    %25 = arith.divf %20, %24 : vector<8x32xf32>
    %26 = vector.broadcast %5 : f32 to vector<8x32xf32>
    %27 = arith.addf %25, %26 : vector<8x32xf32>
    %28 = arith.truncf %27 : vector<8x32xf32> to vector<8x32xbf16>
    %c0_10 = arith.constant 0 : index
    %c0_11 = arith.constant 0 : index
    %29 = vector.load %arg5[%c0_10, %c0_11] : memref<32x320xbf16, #tpu.memory_space<vmem>>, vector<32x96xbf16>
    %cst_12 = arith.constant dense<0.000000e+00> : vector<8x96xf32>
    %30 = tpu.matmul %28, %29, %cst_12 {dimension_numbers = #tpu.dot_dimension_numbers<[1], [0], [0], [1], [0, 0, 1, 1], [], []>} : vector<8x32xbf16>, vector<32x96xbf16>, vector<8x96xf32> -> vector<8x96xf32>
    %31 = arith.truncf %30 : vector<8x96xf32> to vector<8x96xbf16>
    %32 = vector.extract_strided_slice %31 {offsets = [0, 0], sizes = [8, 8], strides = [1, 1]} : vector<8x96xbf16> to vector<8x8xbf16>
    %33 = vector.extract_strided_slice %31 {offsets = [0, 8], sizes = [8, 8], strides = [1, 1]} : vector<8x96xbf16> to vector<8x8xbf16>
    %34 = vector.extract_strided_slice %31 {offsets = [0, 16], sizes = [8, 8], strides = [1, 1]} : vector<8x96xbf16> to vector<8x8xbf16>
    %35 = vector.extract_strided_slice %31 {offsets = [0, 24], sizes = [8, 8], strides = [1, 1]} : vector<8x96xbf16> to vector<8x8xbf16>
    %36 = vector.extract_strided_slice %31 {offsets = [0, 32], sizes = [8, 8], strides = [1, 1]} : vector<8x96xbf16> to vector<8x8xbf16>
    %37 = vector.extract_strided_slice %31 {offsets = [0, 40], sizes = [8, 8], strides = [1, 1]} : vector<8x96xbf16> to vector<8x8xbf16>
    %38 = vector.extract_strided_slice %31 {offsets = [0, 48], sizes = [8, 8], strides = [1, 1]} : vector<8x96xbf16> to vector<8x8xbf16>
    %39 = vector.extract_strided_slice %31 {offsets = [0, 56], sizes = [8, 8], strides = [1, 1]} : vector<8x96xbf16> to vector<8x8xbf16>
    %40 = vector.extract_strided_slice %31 {offsets = [0, 64], sizes = [8, 8], strides = [1, 1]} : vector<8x96xbf16> to vector<8x8xbf16>
    %41 = vector.extract_strided_slice %31 {offsets = [0, 72], sizes = [8, 8], strides = [1, 1]} : vector<8x96xbf16> to vector<8x8xbf16>
    %42 = vector.extract_strided_slice %31 {offsets = [0, 80], sizes = [8, 8], strides = [1, 1]} : vector<8x96xbf16> to vector<8x8xbf16>
    %43 = vector.extract_strided_slice %31 {offsets = [0, 88], sizes = [8, 8], strides = [1, 1]} : vector<8x96xbf16> to vector<8x8xbf16>
    %44 = vector.shape_cast %32 : vector<8x8xbf16> to vector<1x8x8xbf16>
    %45 = vector.shape_cast %33 : vector<8x8xbf16> to vector<1x8x8xbf16>
    %46 = vector.shape_cast %34 : vector<8x8xbf16> to vector<1x8x8xbf16>
    %47 = vector.shape_cast %35 : vector<8x8xbf16> to vector<1x8x8xbf16>
    %48 = vector.shape_cast %36 : vector<8x8xbf16> to vector<1x8x8xbf16>
    %49 = vector.shape_cast %37 : vector<8x8xbf16> to vector<1x8x8xbf16>
    %50 = vector.shape_cast %38 : vector<8x8xbf16> to vector<1x8x8xbf16>
    %51 = vector.shape_cast %39 : vector<8x8xbf16> to vector<1x8x8xbf16>
    %52 = vector.shape_cast %40 : vector<8x8xbf16> to vector<1x8x8xbf16>
    %53 = vector.shape_cast %41 : vector<8x8xbf16> to vector<1x8x8xbf16>
    %54 = vector.shape_cast %42 : vector<8x8xbf16> to vector<1x8x8xbf16>
    %55 = vector.shape_cast %43 : vector<8x8xbf16> to vector<1x8x8xbf16>
    %56 = tpu.concatenate %44, %45, %46, %47, %48, %49, %50, %51, %52, %53, %54, %55 in 0 : vector<1x8x8xbf16>, vector<1x8x8xbf16>, vector<1x8x8xbf16>, vector<1x8x8xbf16>, vector<1x8x8xbf16>, vector<1x8x8xbf16>, vector<1x8x8xbf16>, vector<1x8x8xbf16>, vector<1x8x8xbf16>, vector<1x8x8xbf16>, vector<1x8x8xbf16>, vector<1x8x8xbf16> -> vector<12x8x8xbf16>
    %57 = vector.extract_strided_slice %56 {offsets = [0, 0, 0], sizes = [4, 8, 8], strides = [1, 1, 1]} : vector<12x8x8xbf16> to vector<4x8x8xbf16>
    %58 = vector.extract_strided_slice %56 {offsets = [4, 0, 0], sizes = [4, 8, 8], strides = [1, 1, 1]} : vector<12x8x8xbf16> to vector<4x8x8xbf16>
    %59 = vector.extract_strided_slice %56 {offsets = [8, 0, 0], sizes = [4, 8, 8], strides = [1, 1, 1]} : vector<12x8x8xbf16> to vector<4x8x8xbf16>
    %c0_13 = arith.constant 0 : index
    %c0_14 = arith.constant 0 : index
    %c0_15 = arith.constant 0 : index
    %60 = vector.load %arg3[%c0_13, %c0_14, %c0_15] : memref<1x8x8xbf16, #tpu.memory_space<vmem>>, vector<1x8x8xbf16>
    %61 = vector.shape_cast %60 : vector<1x8x8xbf16> to vector<8x8xbf16>
    %c0_16 = arith.constant 0 : index
    %c192 = arith.constant 192 : index
    %62 = vector.load %arg5[%c0_16, %c192] : memref<32x320xbf16, #tpu.memory_space<vmem>>, vector<32x32xbf16>
    %cst_17 = arith.constant dense<0.000000e+00> : vector<4x8x8xf32>
    %63 = tpu.matmul %57, %58, %cst_17 {dimension_numbers = #tpu.dot_dimension_numbers<[2], [2], [1], [1], [0, 0, 0, 1, 1, 1], [0], [0]>} : vector<4x8x8xbf16>, vector<4x8x8xbf16>, vector<4x8x8xf32> -> vector<4x8x8xf32>
    %64 = arith.extf %61 : vector<8x8xbf16> to vector<8x8xf32>
    %65 = vector.shape_cast %64 : vector<8x8xf32> to vector<1x8x8xf32>
    %66 = vector.broadcast %65 : vector<1x8x8xf32> to vector<4x8x8xf32>
    %67 = arith.addf %63, %66 : vector<4x8x8xf32>
    %cst_18 = arith.constant dense<0xFF800000> : vector<4x8xf32>
    %68 = vector.multi_reduction <maximumf>, %67, %cst_18 [2] : vector<4x8x8xf32> to vector<4x8xf32>
    %69 = vector.shape_cast %68 : vector<4x8xf32> to vector<4x8x1xf32>
    %70 = vector.broadcast %69 : vector<4x8x1xf32> to vector<4x8x8xf32>
    %71 = arith.subf %67, %70 : vector<4x8x8xf32>
    %72 = math.exp %71 : vector<4x8x8xf32>
    %cst_19 = arith.constant dense<0.000000e+00> : vector<4x8xf32>
    %73 = vector.multi_reduction <add>, %72, %cst_19 [2] : vector<4x8x8xf32> to vector<4x8xf32>
    %74 = vector.shape_cast %73 : vector<4x8xf32> to vector<4x8x1xf32>
    %75 = tpu.reciprocal %74 {approx = true} : vector<4x8x1xf32> -> vector<4x8x1xf32>
    %76 = vector.broadcast %75 : vector<4x8x1xf32> to vector<4x8x8xf32>
    %77 = arith.mulf %72, %76 : vector<4x8x8xf32>
    %78 = arith.truncf %77 : vector<4x8x8xf32> to vector<4x8x8xbf16>
    %cst_20 = arith.constant dense<0.000000e+00> : vector<4x8x8xf32>
    %79 = tpu.matmul %78, %59, %cst_20 {dimension_numbers = #tpu.dot_dimension_numbers<[2], [1], [1], [2], [0, 0, 0, 1, 1, 2], [0], [0]>} : vector<4x8x8xbf16>, vector<4x8x8xbf16>, vector<4x8x8xf32> -> vector<4x8x8xf32>
    %80 = vector.extract_strided_slice %79 {offsets = [0, 0, 0], sizes = [1, 8, 8], strides = [1, 1, 1]} : vector<4x8x8xf32> to vector<1x8x8xf32>
    %81 = vector.shape_cast %80 : vector<1x8x8xf32> to vector<8x8xf32>
    %82 = vector.extract_strided_slice %79 {offsets = [1, 0, 0], sizes = [1, 8, 8], strides = [1, 1, 1]} : vector<4x8x8xf32> to vector<1x8x8xf32>
    %83 = vector.shape_cast %82 : vector<1x8x8xf32> to vector<8x8xf32>
    %84 = vector.extract_strided_slice %79 {offsets = [2, 0, 0], sizes = [1, 8, 8], strides = [1, 1, 1]} : vector<4x8x8xf32> to vector<1x8x8xf32>
    %85 = vector.shape_cast %84 : vector<1x8x8xf32> to vector<8x8xf32>
    %86 = vector.extract_strided_slice %79 {offsets = [3, 0, 0], sizes = [1, 8, 8], strides = [1, 1, 1]} : vector<4x8x8xf32> to vector<1x8x8xf32>
    %87 = vector.shape_cast %86 : vector<1x8x8xf32> to vector<8x8xf32>
    %88 = tpu.concatenate %81, %83, %85, %87 in 1 : vector<8x8xf32>, vector<8x8xf32>, vector<8x8xf32>, vector<8x8xf32> -> vector<8x32xf32>
    %89 = arith.truncf %88 : vector<8x32xf32> to vector<8x32xbf16>
    %cst_21 = arith.constant dense<0.000000e+00> : vector<8x32xf32>
    %90 = tpu.matmul %89, %62, %cst_21 {dimension_numbers = #tpu.dot_dimension_numbers<[1], [0], [0], [1], [0, 0, 1, 1], [], []>} : vector<8x32xbf16>, vector<32x32xbf16>, vector<8x32xf32> -> vector<8x32xf32>
    %91 = arith.addf %1, %90 : vector<8x32xf32>
    %c2 = arith.constant 2 : index
    %92 = memref.load %arg8[%c2] : memref<6xf32, #tpu.memory_space<smem>>
    %c3 = arith.constant 3 : index
    %93 = memref.load %arg8[%c3] : memref<6xf32, #tpu.memory_space<smem>>
    %cst_22 = arith.constant dense<0.000000e+00> : vector<8xf32>
    %94 = vector.multi_reduction <add>, %91, %cst_22 [1] : vector<8x32xf32> to vector<8xf32>
    %95 = vector.shape_cast %94 : vector<8xf32> to vector<8x1xf32>
    %cst_23 = arith.constant 3.200000e+01 : f32
    %96 = vector.broadcast %cst_23 : f32 to vector<8x1xf32>
    %97 = arith.divf %95, %96 : vector<8x1xf32>
    %98 = vector.broadcast %97 : vector<8x1xf32> to vector<8x32xf32>
    %99 = arith.subf %91, %98 : vector<8x32xf32>
    %100 = arith.mulf %99, %99 : vector<8x32xf32>
    %cst_24 = arith.constant dense<0.000000e+00> : vector<8xf32>
    %101 = vector.multi_reduction <add>, %100, %cst_24 [1] : vector<8x32xf32> to vector<8xf32>
    %102 = vector.shape_cast %101 : vector<8xf32> to vector<8x1xf32>
    %cst_25 = arith.constant 0.0322580636 : f32
    %103 = vector.broadcast %cst_25 : f32 to vector<8x1xf32>
    %104 = arith.mulf %102, %103 : vector<8x1xf32>
    %105 = vector.broadcast %97 : vector<8x1xf32> to vector<8x32xf32>
    %106 = arith.subf %91, %105 : vector<8x32xf32>
    %107 = vector.broadcast %92 : f32 to vector<8x32xf32>
    %108 = arith.mulf %107, %106 : vector<8x32xf32>
    %109 = math.sqrt %104 : vector<8x1xf32>
    %cst_26 = arith.constant 9.99999997E-7 : f32
    %110 = vector.broadcast %cst_26 : f32 to vector<8x1xf32>
    %111 = arith.addf %109, %110 : vector<8x1xf32>
    %112 = vector.broadcast %111 : vector<8x1xf32> to vector<8x32xf32>
    %113 = arith.divf %108, %112 : vector<8x32xf32>
    %114 = vector.broadcast %93 : f32 to vector<8x32xf32>
    %115 = arith.addf %113, %114 : vector<8x32xf32>
    %116 = arith.truncf %115 : vector<8x32xf32> to vector<8x32xbf16>
    %c0_27 = arith.constant 0 : index
    %c96 = arith.constant 96 : index
    %117 = vector.load %arg5[%c0_27, %c96] : memref<32x320xbf16, #tpu.memory_space<vmem>>, vector<32x32xbf16>
    %cst_28 = arith.constant dense<0.000000e+00> : vector<8x32xf32>
    %118 = tpu.matmul %116, %117, %cst_28 {dimension_numbers = #tpu.dot_dimension_numbers<[1], [0], [0], [1], [0, 0, 1, 1], [], []>} : vector<8x32xbf16>, vector<32x32xbf16>, vector<8x32xf32> -> vector<8x32xf32>
    %119 = arith.truncf %118 : vector<8x32xf32> to vector<8x32xbf16>
    %c0_29 = arith.constant 0 : index
    %c128 = arith.constant 128 : index
    %120 = vector.load %arg5[%c0_29, %c128] : memref<32x320xbf16, #tpu.memory_space<vmem>>, vector<32x64xbf16>
    %cst_30 = arith.constant dense<0.000000e+00> : vector<16x64xf32>
    %121 = tpu.matmul %3, %120, %cst_30 {dimension_numbers = #tpu.dot_dimension_numbers<[1], [0], [0], [1], [0, 0, 1, 1], [], []>} : vector<16x32xbf16>, vector<32x64xbf16>, vector<16x64xf32> -> vector<16x64xf32>
    %122 = arith.truncf %121 : vector<16x64xf32> to vector<16x64xbf16>
    %123 = vector.extract_strided_slice %119 {offsets = [0, 0], sizes = [8, 8], strides = [1, 1]} : vector<8x32xbf16> to vector<8x8xbf16>
    %124 = vector.extract_strided_slice %119 {offsets = [0, 8], sizes = [8, 8], strides = [1, 1]} : vector<8x32xbf16> to vector<8x8xbf16>
    %125 = vector.extract_strided_slice %119 {offsets = [0, 16], sizes = [8, 8], strides = [1, 1]} : vector<8x32xbf16> to vector<8x8xbf16>
    %126 = vector.extract_strided_slice %119 {offsets = [0, 24], sizes = [8, 8], strides = [1, 1]} : vector<8x32xbf16> to vector<8x8xbf16>
    %127 = vector.shape_cast %123 : vector<8x8xbf16> to vector<1x8x8xbf16>
    %128 = vector.shape_cast %124 : vector<8x8xbf16> to vector<1x8x8xbf16>
    %129 = vector.shape_cast %125 : vector<8x8xbf16> to vector<1x8x8xbf16>
    %130 = vector.shape_cast %126 : vector<8x8xbf16> to vector<1x8x8xbf16>
    %131 = tpu.concatenate %127, %128, %129, %130 in 0 : vector<1x8x8xbf16>, vector<1x8x8xbf16>, vector<1x8x8xbf16>, vector<1x8x8xbf16> -> vector<4x8x8xbf16>
    %132 = vector.extract_strided_slice %122 {offsets = [0, 0], sizes = [16, 8], strides = [1, 1]} : vector<16x64xbf16> to vector<16x8xbf16>
    %133 = vector.extract_strided_slice %122 {offsets = [0, 8], sizes = [16, 8], strides = [1, 1]} : vector<16x64xbf16> to vector<16x8xbf16>
    %134 = vector.extract_strided_slice %122 {offsets = [0, 16], sizes = [16, 8], strides = [1, 1]} : vector<16x64xbf16> to vector<16x8xbf16>
    %135 = vector.extract_strided_slice %122 {offsets = [0, 24], sizes = [16, 8], strides = [1, 1]} : vector<16x64xbf16> to vector<16x8xbf16>
    %136 = vector.extract_strided_slice %122 {offsets = [0, 32], sizes = [16, 8], strides = [1, 1]} : vector<16x64xbf16> to vector<16x8xbf16>
    %137 = vector.extract_strided_slice %122 {offsets = [0, 40], sizes = [16, 8], strides = [1, 1]} : vector<16x64xbf16> to vector<16x8xbf16>
    %138 = vector.extract_strided_slice %122 {offsets = [0, 48], sizes = [16, 8], strides = [1, 1]} : vector<16x64xbf16> to vector<16x8xbf16>
    %139 = vector.extract_strided_slice %122 {offsets = [0, 56], sizes = [16, 8], strides = [1, 1]} : vector<16x64xbf16> to vector<16x8xbf16>
    %140 = vector.shape_cast %132 : vector<16x8xbf16> to vector<1x16x8xbf16>
    %141 = vector.shape_cast %133 : vector<16x8xbf16> to vector<1x16x8xbf16>
    %142 = vector.shape_cast %134 : vector<16x8xbf16> to vector<1x16x8xbf16>
    %143 = vector.shape_cast %135 : vector<16x8xbf16> to vector<1x16x8xbf16>
    %144 = vector.shape_cast %136 : vector<16x8xbf16> to vector<1x16x8xbf16>
    %145 = vector.shape_cast %137 : vector<16x8xbf16> to vector<1x16x8xbf16>
    %146 = vector.shape_cast %138 : vector<16x8xbf16> to vector<1x16x8xbf16>
    %147 = vector.shape_cast %139 : vector<16x8xbf16> to vector<1x16x8xbf16>
    %148 = tpu.concatenate %140, %141, %142, %143, %144, %145, %146, %147 in 0 : vector<1x16x8xbf16>, vector<1x16x8xbf16>, vector<1x16x8xbf16>, vector<1x16x8xbf16>, vector<1x16x8xbf16>, vector<1x16x8xbf16>, vector<1x16x8xbf16>, vector<1x16x8xbf16> -> vector<8x16x8xbf16>
    %149 = vector.extract_strided_slice %148 {offsets = [0, 0, 0], sizes = [4, 16, 8], strides = [1, 1, 1]} : vector<8x16x8xbf16> to vector<4x16x8xbf16>
    %150 = vector.extract_strided_slice %148 {offsets = [4, 0, 0], sizes = [4, 16, 8], strides = [1, 1, 1]} : vector<8x16x8xbf16> to vector<4x16x8xbf16>
    %c0_31 = arith.constant 0 : index
    %c0_32 = arith.constant 0 : index
    %c0_33 = arith.constant 0 : index
    %151 = vector.load %arg4[%c0_31, %c0_32, %c0_33] : memref<1x8x16xbf16, #tpu.memory_space<vmem>>, vector<1x8x16xbf16>
    %152 = vector.shape_cast %151 : vector<1x8x16xbf16> to vector<8x16xbf16>
    %c0_34 = arith.constant 0 : index
    %c224 = arith.constant 224 : index
    %153 = vector.load %arg5[%c0_34, %c224] : memref<32x320xbf16, #tpu.memory_space<vmem>>, vector<32x32xbf16>
    %cst_35 = arith.constant dense<0.000000e+00> : vector<4x8x16xf32>
    %154 = tpu.matmul %131, %149, %cst_35 {dimension_numbers = #tpu.dot_dimension_numbers<[2], [2], [1], [1], [0, 0, 0, 1, 1, 1], [0], [0]>} : vector<4x8x8xbf16>, vector<4x16x8xbf16>, vector<4x8x16xf32> -> vector<4x8x16xf32>
    %155 = arith.extf %152 : vector<8x16xbf16> to vector<8x16xf32>
    %156 = vector.shape_cast %155 : vector<8x16xf32> to vector<1x8x16xf32>
    %157 = vector.broadcast %156 : vector<1x8x16xf32> to vector<4x8x16xf32>
    %158 = arith.addf %154, %157 : vector<4x8x16xf32>
    %cst_36 = arith.constant dense<0xFF800000> : vector<4x8xf32>
    %159 = vector.multi_reduction <maximumf>, %158, %cst_36 [2] : vector<4x8x16xf32> to vector<4x8xf32>
    %160 = vector.shape_cast %159 : vector<4x8xf32> to vector<4x8x1xf32>
    %161 = vector.broadcast %160 : vector<4x8x1xf32> to vector<4x8x16xf32>
    %162 = arith.subf %158, %161 : vector<4x8x16xf32>
    %163 = math.exp %162 : vector<4x8x16xf32>
    %cst_37 = arith.constant dense<0.000000e+00> : vector<4x8xf32>
    %164 = vector.multi_reduction <add>, %163, %cst_37 [2] : vector<4x8x16xf32> to vector<4x8xf32>
    %165 = vector.shape_cast %164 : vector<4x8xf32> to vector<4x8x1xf32>
    %166 = tpu.reciprocal %165 {approx = true} : vector<4x8x1xf32> -> vector<4x8x1xf32>
    %167 = vector.broadcast %166 : vector<4x8x1xf32> to vector<4x8x16xf32>
    %168 = arith.mulf %163, %167 : vector<4x8x16xf32>
    %169 = arith.truncf %168 : vector<4x8x16xf32> to vector<4x8x16xbf16>
    %cst_38 = arith.constant dense<0.000000e+00> : vector<4x8x8xf32>
    %170 = tpu.matmul %169, %150, %cst_38 {dimension_numbers = #tpu.dot_dimension_numbers<[2], [1], [1], [2], [0, 0, 0, 1, 1, 2], [0], [0]>} : vector<4x8x16xbf16>, vector<4x16x8xbf16>, vector<4x8x8xf32> -> vector<4x8x8xf32>
    %171 = vector.extract_strided_slice %170 {offsets = [0, 0, 0], sizes = [1, 8, 8], strides = [1, 1, 1]} : vector<4x8x8xf32> to vector<1x8x8xf32>
    %172 = vector.shape_cast %171 : vector<1x8x8xf32> to vector<8x8xf32>
    %173 = vector.extract_strided_slice %170 {offsets = [1, 0, 0], sizes = [1, 8, 8], strides = [1, 1, 1]} : vector<4x8x8xf32> to vector<1x8x8xf32>
    %174 = vector.shape_cast %173 : vector<1x8x8xf32> to vector<8x8xf32>
    %175 = vector.extract_strided_slice %170 {offsets = [2, 0, 0], sizes = [1, 8, 8], strides = [1, 1, 1]} : vector<4x8x8xf32> to vector<1x8x8xf32>
    %176 = vector.shape_cast %175 : vector<1x8x8xf32> to vector<8x8xf32>
    %177 = vector.extract_strided_slice %170 {offsets = [3, 0, 0], sizes = [1, 8, 8], strides = [1, 1, 1]} : vector<4x8x8xf32> to vector<1x8x8xf32>
    %178 = vector.shape_cast %177 : vector<1x8x8xf32> to vector<8x8xf32>
    %179 = tpu.concatenate %172, %174, %176, %178 in 1 : vector<8x8xf32>, vector<8x8xf32>, vector<8x8xf32>, vector<8x8xf32> -> vector<8x32xf32>
    %180 = arith.truncf %179 : vector<8x32xf32> to vector<8x32xbf16>
    %cst_39 = arith.constant dense<0.000000e+00> : vector<8x32xf32>
    %181 = tpu.matmul %180, %153, %cst_39 {dimension_numbers = #tpu.dot_dimension_numbers<[1], [0], [0], [1], [0, 0, 1, 1], [], []>} : vector<8x32xbf16>, vector<32x32xbf16>, vector<8x32xf32> -> vector<8x32xf32>
    %182 = arith.addf %91, %181 : vector<8x32xf32>
    %c4 = arith.constant 4 : index
    %183 = memref.load %arg8[%c4] : memref<6xf32, #tpu.memory_space<smem>>
    %c5 = arith.constant 5 : index
    %184 = memref.load %arg8[%c5] : memref<6xf32, #tpu.memory_space<smem>>
    %cst_40 = arith.constant dense<0.000000e+00> : vector<8xf32>
    %185 = vector.multi_reduction <add>, %182, %cst_40 [1] : vector<8x32xf32> to vector<8xf32>
    %186 = vector.shape_cast %185 : vector<8xf32> to vector<8x1xf32>
    %cst_41 = arith.constant 3.200000e+01 : f32
    %187 = vector.broadcast %cst_41 : f32 to vector<8x1xf32>
    %188 = arith.divf %186, %187 : vector<8x1xf32>
    %189 = vector.broadcast %188 : vector<8x1xf32> to vector<8x32xf32>
    %190 = arith.subf %182, %189 : vector<8x32xf32>
    %191 = arith.mulf %190, %190 : vector<8x32xf32>
    %cst_42 = arith.constant dense<0.000000e+00> : vector<8xf32>
    %192 = vector.multi_reduction <add>, %191, %cst_42 [1] : vector<8x32xf32> to vector<8xf32>
    %193 = vector.shape_cast %192 : vector<8xf32> to vector<8x1xf32>
    %cst_43 = arith.constant 0.0322580636 : f32
    %194 = vector.broadcast %cst_43 : f32 to vector<8x1xf32>
    %195 = arith.mulf %193, %194 : vector<8x1xf32>
    %196 = vector.broadcast %188 : vector<8x1xf32> to vector<8x32xf32>
    %197 = arith.subf %182, %196 : vector<8x32xf32>
    %198 = vector.broadcast %183 : f32 to vector<8x32xf32>
    %199 = arith.mulf %198, %197 : vector<8x32xf32>
    %200 = math.sqrt %195 : vector<8x1xf32>
    %cst_44 = arith.constant 9.99999997E-7 : f32
    %201 = vector.broadcast %cst_44 : f32 to vector<8x1xf32>
    %202 = arith.addf %200, %201 : vector<8x1xf32>
    %203 = vector.broadcast %202 : vector<8x1xf32> to vector<8x32xf32>
    %204 = arith.divf %199, %203 : vector<8x32xf32>
    %205 = vector.broadcast %184 : f32 to vector<8x32xf32>
    %206 = arith.addf %204, %205 : vector<8x32xf32>
    %207 = arith.truncf %206 : vector<8x32xf32> to vector<8x32xbf16>
    %c0_45 = arith.constant 0 : index
    %c256 = arith.constant 256 : index
    %208 = vector.load %arg5[%c0_45, %c256] : memref<32x320xbf16, #tpu.memory_space<vmem>>, vector<32x64xbf16>
    %cst_46 = arith.constant dense<0.000000e+00> : vector<8x64xf32>
    %209 = tpu.matmul %207, %208, %cst_46 {dimension_numbers = #tpu.dot_dimension_numbers<[1], [0], [0], [1], [0, 0, 1, 1], [], []>} : vector<8x32xbf16>, vector<32x64xbf16>, vector<8x64xf32> -> vector<8x64xf32>
    %c0_47 = arith.constant 0 : index
    %c0_48 = arith.constant 0 : index
    %210 = vector.load %arg7[%c0_47, %c0_48] : memref<1x96xf32, #tpu.memory_space<vmem>>, vector<1x64xf32>
    %211 = vector.broadcast %210 : vector<1x64xf32> to vector<8x64xf32>
    %212 = arith.addf %209, %211 : vector<8x64xf32>
    %cst_49 = arith.constant 0.000000e+00 : f32
    %213 = vector.broadcast %cst_49 : f32 to vector<8x64xf32>
    %214 = arith.maximumf %212, %213 : vector<8x64xf32>
    %215 = arith.truncf %214 : vector<8x64xf32> to vector<8x64xbf16>
    %c0_50 = arith.constant 0 : index
    %c0_51 = arith.constant 0 : index
    %216 = vector.load %arg6[%c0_50, %c0_51] : memref<64x32xbf16, #tpu.memory_space<vmem>>, vector<64x32xbf16>
    %cst_52 = arith.constant dense<0.000000e+00> : vector<8x32xf32>
    %217 = tpu.matmul %215, %216, %cst_52 {dimension_numbers = #tpu.dot_dimension_numbers<[1], [0], [0], [1], [0, 0, 1, 1], [], []>} : vector<8x64xbf16>, vector<64x32xbf16>, vector<8x32xf32> -> vector<8x32xf32>
    %c0_53 = arith.constant 0 : index
    %c64 = arith.constant 64 : index
    %218 = vector.load %arg7[%c0_53, %c64] : memref<1x96xf32, #tpu.memory_space<vmem>>, vector<1x32xf32>
    %219 = vector.broadcast %218 : vector<1x32xf32> to vector<8x32xf32>
    %220 = arith.addf %217, %219 : vector<8x32xf32>
    %221 = arith.addf %182, %220 : vector<8x32xf32>
    %c0_54 = arith.constant 0 : index
    %c0_55 = arith.constant 0 : index
    %c0_56 = arith.constant 0 : index
    %222 = vector.load %arg9[%c0_54, %c0_55, %c0_56] : memref<1x8x32xf32, #tpu.memory_space<vmem>>, vector<1x8x32xf32>
    %223 = vector.shape_cast %222 : vector<1x8x32xf32> to vector<8x32xf32>
    %224 = vector.shape_cast %221 : vector<8x32xf32> to vector<1x8x32xf32>
    tpu.vector_store %arg9[%c0_54, %c0_55, %c0_56], %224 {strides = array<i32>} : memref<1x8x32xf32, #tpu.memory_space<vmem>>, vector<1x8x32xf32>,
    return
  }
  func.func @transform_0(%arg0: i32) -> (i32, i32, i32) {
    %c0_i32 = arith.constant 0 : i32
    %c0_i32_0 = arith.constant 0 : i32
    %c0_i32_1 = arith.constant 0 : i32
    return %arg0, %c0_i32, %c0_i32_0 : i32, i32, i32
  }
  func.func @transform_1(%arg0: i32) -> (i32, i32, i32) {
    %c0_i32 = arith.constant 0 : i32
    %c0_i32_0 = arith.constant 0 : i32
    %c0_i32_1 = arith.constant 0 : i32
    return %arg0, %c0_i32, %c0_i32_0 : i32, i32, i32
  }
  func.func @transform_2(%arg0: i32) -> (i32, i32, i32) {
    %c0_i32 = arith.constant 0 : i32
    %c0_i32_0 = arith.constant 0 : i32
    %c0_i32_1 = arith.constant 0 : i32
    return %arg0, %c0_i32, %c0_i32_0 : i32, i32, i32
  }
  func.func @transform_3(%arg0: i32) -> (i32, i32, i32) {
    %c0_i32 = arith.constant 0 : i32
    %c0_i32_0 = arith.constant 0 : i32
    %c0_i32_1 = arith.constant 0 : i32
    return %arg0, %c0_i32, %c0_i32_0 : i32, i32, i32
  }
  func.func @transform_4(%arg0: i32) -> (i32, i32) {
    %c0_i32 = arith.constant 0 : i32
    %c0_i32_0 = arith.constant 0 : i32
    %c0_i32_1 = arith.constant 0 : i32
    return %c0_i32, %c0_i32_0 : i32, i32
  }
  func.func @transform_5(%arg0: i32) -> (i32, i32) {
    %c0_i32 = arith.constant 0 : i32
    %c0_i32_0 = arith.constant 0 : i32
    %c0_i32_1 = arith.constant 0 : i32
    return %c0_i32, %c0_i32_0 : i32, i32
  }
  func.func @transform_6(%arg0: i32) -> (i32, i32) {
    %c0_i32 = arith.constant 0 : i32
    %c0_i32_0 = arith.constant 0 : i32
    %c0_i32_1 = arith.constant 0 : i32
    return %c0_i32, %c0_i32_0 : i32, i32
  }
  func.func @transform_7(%arg0: i32) -> i32 {
    %c0_i32 = arith.constant 0 : i32
    %c0_i32_0 = arith.constant 0 : i32
    return %c0_i32 : i32
  }
  func.func @transform_8(%arg0: i32) -> (i32, i32, i32) {
    %c0_i32 = arith.constant 0 : i32
    %c0_i32_0 = arith.constant 0 : i32
    %c0_i32_1 = arith.constant 0 : i32
    return %arg0, %c0_i32, %c0_i32_0 : i32, i32, i32
  }
}

</mosaic_0001>

<llo_original>
// kernel: tpu_custom_call.1
$region0: #{tpu_custom_call.1}
  #allocation0 [shape = 'u32[]', space=smem, size = 0x4, offset = 0x4, fixed_abs, tag = 'smem constant byte address 0x4 - core index']
  #allocation1 [shape = 'u32[144,128]{1,0:T(1,128)}', space=vmem, size = 0x12000, scoped, tag = 'internal scratch']
  %s0 = inlined_call_operand.hbm [shape: f32[2,8,32], index: 0, kind: input, shape index: {}]
  %s1 = inlined_call_operand.hbm [shape: bf16[2,16,32], index: 1, kind: input, shape index: {}]
  %s2 = inlined_call_operand.hbm [shape: bf16[2,8,8], index: 2, kind: input, shape index: {}]
  %s3 = inlined_call_operand.hbm [shape: bf16[2,8,16], index: 3, kind: input, shape index: {}]
  %s4 = inlined_call_operand.vmem [shape: bf16[32,320], index: 4, kind: input, shape index: {}]
  %s5 = inlined_call_operand.vmem [shape: bf16[64,32], index: 5, kind: input, shape index: {}]
  %s6 = inlined_call_operand.vmem [shape: f32[1,96], index: 6, kind: input, shape index: {}]
  %s7 = inlined_call_operand.vmem [shape: f32[6], index: 7, kind: input, shape index: {}]
  %s8 = inlined_call_operand.hbm [shape: f32[2,8,32], index: 8, kind: output, shape index: {}]
  %s9 = sld [smem:[#allocation0]]
  $region85: #{tpu_custom_call.1} parent=0
    _
  %s11 = ssub.s32 1, %s9
  %s12 = scalar_select 0, %s11, %s9
  $region1: #{tpu_custom_call.1} parent=0
    #allocation2 [shape = 'u8[8192]{0}', space=vmem, size = 0x2000, scoped, tag = 'input window, operand 0']
    #allocation3 [shape = 's32[2]{0}', space=sflag, size = 0x8, scoped, tag = 'scoped memory for tpu_custom_call.1']
    #allocation4 [shape = 's32[2]{0}', space=sflag, size = 0x8, scoped, tag = 'scoped memory for tpu_custom_call.1']
    #allocation5 [shape = 's32[2]{0}', space=sflag, size = 0x8, scoped, tag = 'scoped memory for tpu_custom_call.1']
    #allocation6 [shape = 'u8[8192]{0}', space=vmem, size = 0x2000, scoped, tag = 'input window, operand 1']
    #allocation7 [shape = 's32[2]{0}', space=sflag, size = 0x8, scoped, tag = 'scoped memory for tpu_custom_call.1']
    #allocation8 [shape = 'u8[4096]{0}', space=vmem, size = 0x1000, scoped, tag = 'input window, operand 2']
    #allocation9 [shape = 'u8[4096]{0}', space=vmem, size = 0x1000, scoped, tag = 'input window, operand 3']
    #allocation10 [shape = 's32[2]{0}', space=sflag, size = 0x8, scoped, tag = 'scoped memory for tpu_custom_call.1']
    #allocation11 [shape = 'u8[512]{0}', space=smem, size = 0x200, scoped, tag = 'input window, operand 7, single buffered']
    #allocation12 [shape = 'u8[8192]{0}', space=vmem, size = 0x2000, scoped, tag = 'output window, operand 0']
    %13 = vsyncpa [#allocation3], 0
    %s14 = scalar_lea.sflag [#allocation3], 1
    %15 = vsyncpa %s14, 0
    %16 = vsyncpa [#allocation7], 0
    %s17 = scalar_lea.sflag [#allocation7], 1
    %18 = vsyncpa %s17, 0
    %19 = vsyncpa [#allocation10], 0
    %s20 = scalar_lea.sflag [#allocation10], 1
    %21 = vsyncpa %s20, 0
    %22 = vsyncpa [#allocation5], 0
    %23 = vsyncpa [#allocation4], 0
    %s24 = scalar_lea.sflag [#allocation4], 1
    %25 = vsyncpa %s24, 0
    loop: start=0, step=1, limit=4
    $region2: #{tpu_custom_call.1} parent=1 // loop_pre_header
      _
    $region3: #{tpu_custom_call.1} parent=1 // loop_header
      %s27 = sphi 0, %s31
      %p28 = scmp.ge.s32.totalorder %s27, 4
      %s37 = sphi 0, %s39
      %s40 = sphi 0, %s37
      %s41 = sphi 0, %s40
      %s57 = sphi 0, %s41
      %s63 = sphi 0, %s65
      %s66 = sphi 0, %s63
      %s67 = sphi 0, %s66
      %s83 = sphi 0, %s67
      %s89 = sphi 0, %s91
      %s92 = sphi 0, %s89
      %s93 = sphi 0, %s92
      %s109 = sphi 0, %s93
      %s115 = sphi 0, %s117
      %s118 = sphi 0, %s115
      %s119 = sphi 0, %s118
      %s135 = sphi 0, %s119
      %s139 = sphi 0, %s139
      %s141 = sphi 0, %s139
      %s142 = sphi 0, %s141
      %s156 = sphi 0, %s142
      %s160 = sphi 0, %s160
      %s162 = sphi 0, %s160
      %s163 = sphi 0, %s162
      %s177 = sphi 0, %s163
      %s181 = sphi 0, %s181
      %s183 = sphi 0, %s181
      %s184 = sphi 0, %s183
      %s198 = sphi 0, %s184
      %s202 = sphi 0, %s202
      %s204 = sphi 0, %s202
      %s205 = sphi 0, %s204
      %s219 = sphi 0, %s205
      %s225 = sphi 0, %s227
      %s228 = sphi 0, %s225
      %s229 = sphi 0, %s228
      %s245 = sphi 0, %s229
    $region4: #{tpu_custom_call.1} parent=1 // loop_header_branch
      %30 = sbr.rel (%p28) target = $region8
    $region5: #{tpu_custom_call.1} parent=1 // loop_body
      %s32 = ssub.s32 %s27, 1
      %s33 = ssub.s32 %s27, 2
      %s34 = sadd.s32 %s27, 1
      %s35 = ssub.s32 %s27, %s34
      %p36 = scmp.eq.s32.totalorder %s35, 0
      %s38 = sadd.s32 %s37, 1
      %s39 = scalar_select %p36, %s37, %s38
      %p42 = pneg %p36
      %p43 = scmp.eq.s32.totalorder %s27, 1
      %p44 = por %p42, %p43
      %p45 = scmp.ne.s32.totalorder %s37, %s40
      %p46 = scmp.eq.s32.totalorder %s27, 0
      %p47 = por %p45, %p46
      %p48 = scmp.ne.s32.totalorder %s37, %s40
      %p49 = scmp.eq.s32.totalorder %s32, 1
      %p50 = por %p48, %p49
      %p51 = scmp.ne.s32.totalorder %s40, %s41
      %p52 = scmp.eq.s32.totalorder %s32, 0
      %p53 = por %p51, %p52
      %p54 = scmp.ne.s32.totalorder %s40, %s41
      %p55 = scmp.eq.s32.totalorder %s33, 1
      %p56 = por %p54, %p55
      %p58 = scmp.ne.s32.totalorder %s41, %s57
      %p59 = scmp.eq.s32.totalorder %s33, 0
      %p60 = por %p58, %p59
      %s61 = ssub.s32 %s27, %s34
      %p62 = scmp.eq.s32.totalorder %s61, 0
      %s64 = sadd.s32 %s63, 1
      %s65 = scalar_select %p62, %s63, %s64
      %p68 = pneg %p62
      %p69 = scmp.eq.s32.totalorder %s27, 1
      %p70 = por %p68, %p69
      %p71 = scmp.ne.s32.totalorder %s63, %s66
      %p72 = scmp.eq.s32.totalorder %s27, 0
      %p73 = por %p71, %p72
      %p74 = scmp.ne.s32.totalorder %s63, %s66
      %p75 = scmp.eq.s32.totalorder %s32, 1
      %p76 = por %p74, %p75
      %p77 = scmp.ne.s32.totalorder %s66, %s67
      %p78 = scmp.eq.s32.totalorder %s32, 0
      %p79 = por %p77, %p78
      %p80 = scmp.ne.s32.totalorder %s66, %s67
      %p81 = scmp.eq.s32.totalorder %s33, 1
      %p82 = por %p80, %p81
      %p84 = scmp.ne.s32.totalorder %s67, %s83
      %p85 = scmp.eq.s32.totalorder %s33, 0
      %p86 = por %p84, %p85
      %s87 = ssub.s32 %s27, %s34
      %p88 = scmp.eq.s32.totalorder %s87, 0
      %s90 = sadd.s32 %s89, 1
      %s91 = scalar_select %p88, %s89, %s90
      %p94 = pneg %p88
      %p95 = scmp.eq.s32.totalorder %s27, 1
      %p96 = por %p94, %p95
      %p97 = scmp.ne.s32.totalorder %s89, %s92
      %p98 = scmp.eq.s32.totalorder %s27, 0
      %p99 = por %p97, %p98
      %p100 = scmp.ne.s32.totalorder %s89, %s92
      %p101 = scmp.eq.s32.totalorder %s32, 1
      %p102 = por %p100, %p101
      %p103 = scmp.ne.s32.totalorder %s92, %s93
      %p104 = scmp.eq.s32.totalorder %s32, 0
      %p105 = por %p103, %p104
      %p106 = scmp.ne.s32.totalorder %s92, %s93
      %p107 = scmp.eq.s32.totalorder %s33, 1
      %p108 = por %p106, %p107
      %p110 = scmp.ne.s32.totalorder %s93, %s109
      %p111 = scmp.eq.s32.totalorder %s33, 0
      %p112 = por %p110, %p111
      %s113 = ssub.s32 %s27, %s34
      %p114 = scmp.eq.s32.totalorder %s113, 0
      %s116 = sadd.s32 %s115, 1
      %s117 = scalar_select %p114, %s115, %s116
      %p120 = pneg %p114
      %p121 = scmp.eq.s32.totalorder %s27, 1
      %p122 = por %p120, %p121
      %p123 = scmp.ne.s32.totalorder %s115, %s118
      %p124 = scmp.eq.s32.totalorder %s27, 0
      %p125 = por %p123, %p124
      %p126 = scmp.ne.s32.totalorder %s115, %s118
      %p127 = scmp.eq.s32.totalorder %s32, 1
      %p128 = por %p126, %p127
      %p129 = scmp.ne.s32.totalorder %s118, %s119
      %p130 = scmp.eq.s32.totalorder %s32, 0
      %p131 = por %p129, %p130
      %p132 = scmp.ne.s32.totalorder %s118, %s119
      %p133 = scmp.eq.s32.totalorder %s33, 1
      %p134 = por %p132, %p133
      %p136 = scmp.ne.s32.totalorder %s119, %s135
      %p137 = scmp.eq.s32.totalorder %s33, 0
      %p138 = por %p136, %p137
      %s140 = sadd.s32 %s139, 1
      %p143 = scmp.eq.s32.totalorder %s27, 1
      %p144 = scmp.ne.s32.totalorder %s139, %s141
      %p145 = scmp.eq.s32.totalorder %s27, 0
      %p146 = por %p144, %p145
      %p147 = scmp.ne.s32.totalorder %s139, %s141
      %p148 = scmp.eq.s32.totalorder %s32, 1
      %p149 = por %p147, %p148
      %p150 = scmp.ne.s32.totalorder %s141, %s142
      %p151 = scmp.eq.s32.totalorder %s32, 0
      %p152 = por %p150, %p151
      %p153 = scmp.ne.s32.totalorder %s141, %s142
      %p154 = scmp.eq.s32.totalorder %s33, 1
      %p155 = por %p153, %p154
      %p157 = scmp.ne.s32.totalorder %s142, %s156
      %p158 = scmp.eq.s32.totalorder %s33, 0
      %p159 = por %p157, %p158
      %s161 = sadd.s32 %s160, 1
      %p164 = scmp.eq.s32.totalorder %s27, 1
      %p165 = scmp.ne.s32.totalorder %s160, %s162
      %p166 = scmp.eq.s32.totalorder %s27, 0
      %p167 = por %p165, %p166
      %p168 = scmp.ne.s32.totalorder %s160, %s162
      %p169 = scmp.eq.s32.totalorder %s32, 1
      %p170 = por %p168, %p169
      %p171 = scmp.ne.s32.totalorder %s162, %s163
      %p172 = scmp.eq.s32.totalorder %s32, 0
      %p173 = por %p171, %p172
      %p174 = scmp.ne.s32.totalorder %s162, %s163
      %p175 = scmp.eq.s32.totalorder %s33, 1
      %p176 = por %p174, %p175
      %p178 = scmp.ne.s32.totalorder %s163, %s177
      %p179 = scmp.eq.s32.totalorder %s33, 0
      %p180 = por %p178, %p179
      %s182 = sadd.s32 %s181, 1
      %p185 = scmp.eq.s32.totalorder %s27, 1
      %p186 = scmp.ne.s32.totalorder %s181, %s183
      %p187 = scmp.eq.s32.totalorder %s27, 0
      %p188 = por %p186, %p187
      %p189 = scmp.ne.s32.totalorder %s181, %s183
      %p190 = scmp.eq.s32.totalorder %s32, 1
      %p191 = por %p189, %p190
      %p192 = scmp.ne.s32.totalorder %s183, %s184
      %p193 = scmp.eq.s32.totalorder %s32, 0
      %p194 = por %p192, %p193
      %p195 = scmp.ne.s32.totalorder %s183, %s184
      %p196 = scmp.eq.s32.totalorder %s33, 1
      %p197 = por %p195, %p196
      %p199 = scmp.ne.s32.totalorder %s184, %s198
      %p200 = scmp.eq.s32.totalorder %s33, 0
      %p201 = por %p199, %p200
      %s203 = sadd.s32 %s202, 1
      %p206 = scmp.eq.s32.totalorder %s27, 1
      %p207 = scmp.ne.s32.totalorder %s202, %s204
      %p208 = scmp.eq.s32.totalorder %s27, 0
      %p209 = por %p207, %p208
      %p210 = scmp.ne.s32.totalorder %s202, %s204
      %p211 = scmp.eq.s32.totalorder %s32, 1
      %p212 = por %p210, %p211
      %p213 = scmp.ne.s32.totalorder %s204, %s205
      %p214 = scmp.eq.s32.totalorder %s32, 0
      %p215 = por %p213, %p214
      %p216 = scmp.ne.s32.totalorder %s204, %s205
      %p217 = scmp.eq.s32.totalorder %s33, 1
      %p218 = por %p216, %p217
      %p220 = scmp.ne.s32.totalorder %s205, %s219
      %p221 = scmp.eq.s32.totalorder %s33, 0
      %p222 = por %p220, %p221
      %s223 = ssub.s32 %s27, %s34
      %p224 = scmp.eq.s32.totalorder %s223, 0
      %s226 = sadd.s32 %s225, 1
      %s227 = scalar_select %p224, %s225, %s226
      %p230 = pneg %p224
      %p231 = scmp.eq.s32.totalorder %s27, 1
      %p232 = por %p230, %p231
      %p233 = scmp.ne.s32.totalorder %s225, %s228
      %p234 = scmp.eq.s32.totalorder %s27, 0
      %p235 = por %p233, %p234
      %p236 = scmp.ne.s32.totalorder %s225, %s228
      %p237 = scmp.eq.s32.totalorder %s32, 1
      %p238 = por %p236, %p237
      %p239 = scmp.ne.s32.totalorder %s228, %s229
      %p240 = scmp.eq.s32.totalorder %s32, 0
      %p241 = por %p239, %p240
      %p242 = scmp.ne.s32.totalorder %s228, %s229
      %p243 = scmp.eq.s32.totalorder %s33, 1
      %p244 = por %p242, %p243
      %p246 = scmp.ne.s32.totalorder %s229, %s245
      %p247 = scmp.eq.s32.totalorder %s33, 0
      %p248 = por %p246, %p247
      %p249 = scmp.le.s32.totalorder 1, %s27
      %p250 = scmp.lt.s32.totalorder %s27, 3
      %p251 = pnand %p249, %p250
      %p252 = pneg %p251
      // Predicated region
      $region9: #{tpu_custom_call.1} parent=5 // pred_check
        _
      $region10: #{tpu_custom_call.1} parent=5 // pred_check_branch
        %254 = sbr.rel (%p251) target = $region12
      $region11: #{tpu_custom_call.1} parent=5 // pred_region
        %s255 = ssub.s32 %s27, 1
        // Predicated region
        $region13: #{tpu_custom_call.1} parent=11 // pred_check
          %p256 = pneg %p152
        $region14: #{tpu_custom_call.1} parent=11 // pred_check_branch
          %258 = sbr.rel (%p256) target = $region16
        $region15: #{tpu_custom_call.1} parent=11 // pred_region
          _
        $region16: #{tpu_custom_call.1} parent=11 // pred_fallthru
          _
        // Predicated region
        $region17: #{tpu_custom_call.1} parent=11 // pred_check
          %p259 = pneg %p173
        $region18: #{tpu_custom_call.1} parent=11 // pred_check_branch
          %261 = sbr.rel (%p259) target = $region20
        $region19: #{tpu_custom_call.1} parent=11 // pred_region
          _
        $region20: #{tpu_custom_call.1} parent=11 // pred_fallthru
          _
        // Predicated region
        $region21: #{tpu_custom_call.1} parent=11 // pred_check
          %p262 = pneg %p194
        $region22: #{tpu_custom_call.1} parent=11 // pred_check_branch
          %264 = sbr.rel (%p262) target = $region24
        $region23: #{tpu_custom_call.1} parent=11 // pred_region
          _
        $region24: #{tpu_custom_call.1} parent=11 // pred_fallthru
          _
        // Predicated region
        $region25: #{tpu_custom_call.1} parent=11 // pred_check
          %p265 = pneg %p215
        $region26: #{tpu_custom_call.1} parent=11 // pred_check_branch
          %267 = sbr.rel (%p265) target = $region28
        $region27: #{tpu_custom_call.1} parent=11 // pred_region
          %s269 = ssub.s32 16, 16
          %270 = vsyncadd [#allocation5], %s269
          %s272 = sshll.u32 %s7, 4
          %s273 = int_to_ptr.vmem [resolvable:$true] %s272
          %275 = dma.vmem_to_smem %s273, 16, [#allocation11], [#allocation5]
        $region28: #{tpu_custom_call.1} parent=11 // pred_fallthru
          _
      $region12: #{tpu_custom_call.1} parent=5 // pred_fallthru
        _
      %p276 = scmp.lt.s32.totalorder %s27, 2
      // Predicated region
      $region29: #{tpu_custom_call.1} parent=5 // pred_check
        %p277 = pneg %p276
      $region30: #{tpu_custom_call.1} parent=5 // pred_check_branch
        %279 = sbr.rel (%p277) target = $region32
      $region31: #{tpu_custom_call.1} parent=5 // pred_region
        // Predicated region
        $region33: #{tpu_custom_call.1} parent=31 // pred_check
          %p280 = pneg %p47
        $region34: #{tpu_custom_call.1} parent=31 // pred_check_branch
          %282 = sbr.rel (%p280) target = $region36
        $region35: #{tpu_custom_call.1} parent=31 // pred_region
          %s283 = sand.u32 %s37, 1
          %s284 = scalar_lea.sflag [#allocation3], %s283
          %s285 = sand.u32 %s37, 1
          %s286 = smul.addr %s285, 8
          %s287 = scalar_lea.vmem [#allocation2], %s286
          %s289 = ssub.s32 128, 128
          %290 = vsyncadd %s284, %s289
          %s291 = smul.addr %s27, 128
          %s292 = scalar_lea.hbm %s0, %s291
          %s294 = sshll.u32 %s287, 4
          %s295 = int_to_ptr.vmem [resolvable:$true] %s294
          %297 = dma.hbm_to_vmem [thread:$0]  %s292, 128, %s295, %s284
        $region36: #{tpu_custom_call.1} parent=31 // pred_fallthru
          _
        // Predicated region
        $region37: #{tpu_custom_call.1} parent=31 // pred_check
          %p298 = pneg %p73
        $region38: #{tpu_custom_call.1} parent=31 // pred_check_branch
          %300 = sbr.rel (%p298) target = $region40
        $region39: #{tpu_custom_call.1} parent=31 // pred_region
          %s301 = sand.u32 %s27, 1
          %s302 = scalar_lea.sflag [#allocation7], %s301
          %s303 = sand.u32 %s63, 1
          %s304 = smul.addr %s303, 8
          %s305 = scalar_lea.vmem [#allocation6], %s304
          %s307 = ssub.s32 128, 128
          %308 = vsyncadd %s302, %s307
          %s309 = smul.addr %s27, 2
          %s310 = smul.addr %s309, 64
          %s311 = scalar_lea.hbm %s1, %s310
          %s312 = sshll.u32 %s305, 4
          %s313 = int_to_ptr.vmem [resolvable:$true] %s312
          %318 = dma.hbm_to_vmem [thread:$0]  %s311, 128, %s313, %s302, 64, 64, 4
        $region40: #{tpu_custom_call.1} parent=31 // pred_fallthru
          _
        // Predicated region
        $region41: #{tpu_custom_call.1} parent=31 // pred_check
          %p319 = pneg %p99
        $region42: #{tpu_custom_call.1} parent=31 // pred_check_branch
          %321 = sbr.rel (%p319) target = $region44
        $region43: #{tpu_custom_call.1} parent=31 // pred_region
          %s322 = sand.u32 %s27, 1
          %s323 = scalar_lea.sflag [#allocation7], %s322
          %s324 = sand.u32 %s89, 1
          %s325 = smul.addr %s324, 4
          %s326 = scalar_lea.vmem [#allocation8], %s325
          %s328 = ssub.s32 64, 64
          %329 = vsyncadd %s323, %s328
          %s330 = smul.addr %s27, 64
          %s331 = scalar_lea.hbm %s2, %s330
          %s333 = sshll.u32 %s326, 4
          %s334 = int_to_ptr.vmem [resolvable:$true] %s333
          %336 = dma.hbm_to_vmem [thread:$0]  %s331, 64, %s334, %s323
        $region44: #{tpu_custom_call.1} parent=31 // pred_fallthru
          _
        // Predicated region
        $region45: #{tpu_custom_call.1} parent=31 // pred_check
          %p337 = pneg %p125
        $region46: #{tpu_custom_call.1} parent=31 // pred_check_branch
          %339 = sbr.rel (%p337) target = $region48
        $region47: #{tpu_custom_call.1} parent=31 // pred_region
          %s340 = sand.u32 %s115, 1
          %s341 = scalar_lea.sflag [#allocation10], %s340
          %s342 = sand.u32 %s115, 1
          %s343 = smul.addr %s342, 4
          %s344 = scalar_lea.vmem [#allocation9], %s343
          %s346 = ssub.s32 64, 64
          %347 = vsyncadd %s341, %s346
          %s348 = smul.addr %s27, 64
          %s349 = scalar_lea.hbm %s3, %s348
          %s351 = sshll.u32 %s344, 4
          %s352 = int_to_ptr.vmem [resolvable:$true] %s351
          %354 = dma.hbm_to_vmem [thread:$0]  %s349, 64, %s352, %s341
        $region48: #{tpu_custom_call.1} parent=31 // pred_fallthru
          _
      $region32: #{tpu_custom_call.1} parent=5 // pred_fallthru
        _
      %p355 = scmp.le.s32.totalorder 1, %s27
      %p356 = scmp.lt.s32.totalorder %s27, 3
      %p357 = pnand %p355, %p356
      %p358 = pneg %p357
      // Predicated region
      $region49: #{tpu_custom_call.1} parent=5 // pred_check
        _
      $region50: #{tpu_custom_call.1} parent=5 // pred_check_branch
        %360 = sbr.rel (%p357) target = $region52
      $region51: #{tpu_custom_call.1} parent=5 // pred_region
        %s361 = ssub.s32 %s27, 1
        %s362 = sand.u32 %s40, 1
        %s363 = scalar_lea.sflag [#allocation3], %s362
        %s364 = sand.u32 %s40, 1
        %s365 = smul.addr %s364, 8
        %s366 = scalar_lea.vmem [#allocation2], %s365
        // Predicated region
        $region53: #{tpu_custom_call.1} parent=51 // pred_check
          %p367 = pneg %p53
        $region54: #{tpu_custom_call.1} parent=51 // pred_check_branch
          %369 = sbr.rel (%p367) target = $region56
        $region55: #{tpu_custom_call.1} parent=51 // pred_region
          %370 = dma.done %s363, 128
        $region56: #{tpu_custom_call.1} parent=51 // pred_fallthru
          _
        %s371 = sand.u32 %s32, 1
        %s372 = scalar_lea.sflag [#allocation7], %s371
        %s373 = sand.u32 %s66, 1
        %s374 = smul.addr %s373, 8
        %s375 = scalar_lea.vmem [#allocation6], %s374
        // Predicated region
        $region57: #{tpu_custom_call.1} parent=51 // pred_check
          %p376 = pneg %p79
        $region58: #{tpu_custom_call.1} parent=51 // pred_check_branch
          %378 = sbr.rel (%p376) target = $region60
        $region59: #{tpu_custom_call.1} parent=51 // pred_region
          %379 = dma.done %s372, 128
        $region60: #{tpu_custom_call.1} parent=51 // pred_fallthru
          _
        %s380 = sand.u32 %s32, 1
        %s381 = scalar_lea.sflag [#allocation7], %s380
        %s382 = sand.u32 %s92, 1
        %s383 = smul.addr %s382, 4
        %s384 = scalar_lea.vmem [#allocation8], %s383
        // Predicated region
        $region61: #{tpu_custom_call.1} parent=51 // pred_check
          %p385 = pneg %p105
        $region62: #{tpu_custom_call.1} parent=51 // pred_check_branch
          %387 = sbr.rel (%p385) target = $region64
        $region63: #{tpu_custom_call.1} parent=51 // pred_region
          %388 = dma.done %s381, 64
        $region64: #{tpu_custom_call.1} parent=51 // pred_fallthru
          _
        %s389 = sand.u32 %s118, 1
        %s390 = scalar_lea.sflag [#allocation10], %s389
        %s391 = sand.u32 %s118, 1
        %s392 = smul.addr %s391, 4
        %s393 = scalar_lea.vmem [#allocation9], %s392
        // Predicated region
        $region65: #{tpu_custom_call.1} parent=51 // pred_check
          %p394 = pneg %p131
        $region66: #{tpu_custom_call.1} parent=51 // pred_check_branch
          %396 = sbr.rel (%p394) target = $region68
        $region67: #{tpu_custom_call.1} parent=51 // pred_region
          %397 = dma.done %s390, 64
        $region68: #{tpu_custom_call.1} parent=51 // pred_fallthru
          _
        // Predicated region
        $region69: #{tpu_custom_call.1} parent=51 // pred_check
          %p398 = pneg %p215
        $region70: #{tpu_custom_call.1} parent=51 // pred_check_branch
          %400 = sbr.rel (%p398) target = $region72
        $region71: #{tpu_custom_call.1} parent=51 // pred_region
          %401 = dma.done [#allocation5], 16
        $region72: #{tpu_custom_call.1} parent=51 // pred_fallthru
          _
        %402 = sfence
        %s403 = sand.u32 %s40, 1
        %s404 = scalar_lea.sflag [#allocation3], %s403
        %s405 = sand.u32 %s40, 1
        %s406 = smul.addr %s405, 8
        %s407 = scalar_lea.vmem [#allocation2], %s406
        %p408 = pneg %p53
        %p409 = pneg %p50
        %s410 = sand.u32 %s32, 1
        %s411 = scalar_lea.sflag [#allocation7], %s410
        %s412 = sand.u32 %s66, 1
        %s413 = smul.addr %s412, 8
        %s414 = scalar_lea.vmem [#allocation6], %s413
        %p415 = pneg %p79
        %p416 = pneg %p76
        %s417 = sand.u32 %s32, 1
        %s418 = scalar_lea.sflag [#allocation7], %s417
        %s419 = sand.u32 %s92, 1
        %s420 = smul.addr %s419, 4
        %s421 = scalar_lea.vmem [#allocation8], %s420
        %p422 = pneg %p105
        %p423 = pneg %p102
        %s424 = sand.u32 %s118, 1
        %s425 = scalar_lea.sflag [#allocation10], %s424
        %s426 = sand.u32 %s118, 1
        %s427 = smul.addr %s426, 4
        %s428 = scalar_lea.vmem [#allocation9], %s427
        %p429 = pneg %p131
        %p430 = pneg %p128
        %p431 = pneg %p152
        %p432 = pneg %p149
        %p433 = pneg %p173
        %p434 = pneg %p170
        %p435 = pneg %p194
        %p436 = pneg %p191
        %p437 = pneg %p215
        %p438 = pneg %p212
        %p439 = pneg %p241
        %p440 = pneg %p238
        %s441 = sand.u32 %s228, 1
        %s442 = scalar_lea.sflag [#allocation4], %s441
        %s443 = sand.u32 %s228, 1
        %s444 = smul.addr %s443, 8
        %s445 = scalar_lea.vmem [#allocation12], %s444
        %v447 = vld [vmem:[%s366] sm:$0xff]
        %v448 = vld [vmem:[%s375] sm:$0xf]
        %v449 = vld [vmem:[%s375 + $0x4] sm:$0xf]
        %s450 = sld [smem:[#allocation11]]
        %s451 = sld [smem:[#allocation11 + $0x1]]
        %vm452 = vcmask 261120
        %v453 = vsel %vm452, %v447, 0.0
        %454 = vadd.xlane.f32.xlu0 %v453
        %v455 = vpop.xlane.xlu0 %454
        %v456 = vrcp.pop 32.0
        %v457 = vmul.f32 %v455, %v456
        %v458 = vsub.f32 %v447, %v457
        %v459 = vmul.f32 %v458, %v458
        %v460 = vsel %vm452, %v459, 0.0
        %461 = vadd.xlane.f32.xlu0 %v460
        %v462 = vpop.xlane.xlu0 %461
        %v463 = vmul.f32 %v462, 0.032258064
        %v464 = vstv %s450
        %v465 = vmul.f32 %v464, %v458
        %v466 = vrsqrt.pop %v463
        %v467 = vmul.f32 %v463, %v466
        %vm468 = vcmp.eq.f32.partialorder %v463, inf
        %v469 = vsel %vm468, %v463, %v467
        %vm470 = vcmp.eq.f32.partialorder %v463, 0.0
        %v471 = vand.u32 %v463, 2147483648
        %v472 = vsel %vm470, %v471, %v469
        %v473 = vadd.f32 %v472, 1e-06
        %v474 = vrcp.pop %v473
        %v475 = vmul.f32 %v465, %v474
        %v476 = vstv %s451
        %v477 = vadd.f32 %v475, %v476
        %v478 = vpack.c.bf16 %v477, %v477
        %v479 = vld [vmem:[%s4] sm:$0xf]
        %v480 = vld [vmem:[%s4 + $0xc] sm:$0xf]
        %v481 = vld [vmem:[%s4 + $0x18] sm:$0xf]
        %v482 = vld [vmem:[%s4 + $0x24] sm:$0xf]
        %v487 = vunpack.c.l.b16 %v479
        %v488 = vunpack.c.l.b16 %v480
        %v489 = vunpack.c.l.b16 %v481
        %v490 = vunpack.c.l.b16 %v482
        %v491 = vpack.c.b16 %v488, %v487
        %v492 = vpack.c.b16 %v490, %v489
        %v496 = vsel %vm452, %v478, 0
        %498 = vmatprep.subr.bf16.mxu0 0
        %499 = vmatpush1.bf16.msra.mxu0 %v491
        %500 = vmatprep.subr.bf16.mxu0 0
        %501 = vmatpush1.bf16.msra.mxu0 %v492
        %502 = vmatprep.subr.bf16.mxu0 0
        %503 = vmatpush1.bf16.msra.mxu0 0
        %504 = vmatprep.subr.bf16.mxu0 0
        %505 = vmatpush1.bf16.msra.mxu0 0
        %506 = vmatprep.subr.bf16.mxu0 0
        %507 = vmatpush1.bf16.msra.mxu0 0
        %508 = vmatprep.subr.bf16.mxu0 0
        %509 = vmatpush1.bf16.msra.mxu0 0
        %510 = vmatprep.subr.bf16.mxu0 0
        %511 = vmatpush1.bf16.msra.mxu0 0
        %512 = vmatprep.subr.bf16.mxu0 0
        %513 = vmatpush1.bf16.msra.mxu0 0
        %514 = vmatprep.subr.bf16.mxu0 0
        %515 = vmatpush1.bf16.msra.mxu0 0
        %516 = vmatprep.subr.bf16.mxu0 0
        %517 = vmatpush1.bf16.msra.mxu0 0
        %518 = vmatprep.subr.bf16.mxu0 0
        %519 = vmatpush1.bf16.msra.mxu0 0
        %520 = vmatprep.subr.bf16.mxu0 0
        %521 = vmatpush1.bf16.msra.mxu0 0
        %522 = vmatprep.subr.bf16.mxu0 0
        %523 = vmatpush1.bf16.msra.mxu0 0
        %524 = vmatprep.subr.bf16.mxu0 0
        %525 = vmatpush1.bf16.msra.mxu0 0
        %526 = vmatprep.subr.bf16.mxu0 0
        %527 = vmatpush1.bf16.msra.mxu0 0
        %528 = vmatprep.subr.bf16.mxu0 0
        %529 = vmatpush1.bf16.msra.mxu0 0
        %530 = vmatprep.mubr.bf16.mxu0 0
        %531 = vmatmul.mubr.bf16.gmra.mrb[0].mxu0 %v496
        %v532 = vpop.f32.mrb[0].mxu0
        %v533 = vadd.f32 0.0, %v532
        %v534 = vpop.f32.mrb[0].mxu0
        %v535 = vpop.f32.mrb[0].mxu0
        %v536 = vpop.f32.mrb[0].mxu0
        %537 = vdwg.mxu0
        %v538 = vpack.c.bf16 %v533, %v533
        %540 = vrot.lane.b32.xlu0 %v538, 120
        %v541 = vpop.permute.xlu0 %540
        %542 = vrot.lane.b32.xlu0 %v538, 112
        %v543 = vpop.permute.xlu0 %542
        %544 = vrot.lane.b32.xlu0 %v538, 104
        %v545 = vpop.permute.xlu0 %544
        %546 = vrot.lane.b32.xlu0 %v538, 96
        %v547 = vpop.permute.xlu0 %546
        %548 = vrot.lane.b32.xlu0 %v538, 88
        %v549 = vpop.permute.xlu0 %548
        %550 = vrot.lane.b32.xlu0 %v538, 80
        %v551 = vpop.permute.xlu0 %550
        %552 = vrot.lane.b32.xlu0 %v538, 72
        %v553 = vpop.permute.xlu0 %552
        %554 = vrot.lane.b32.xlu0 %v538, 64
        %v555 = vpop.permute.xlu0 %554
        %556 = vrot.lane.b32.xlu0 %v538, 56
        %v557 = vpop.permute.xlu0 %556
        %558 = vrot.lane.b32.xlu0 %v538, 48
        %v559 = vpop.permute.xlu0 %558
        %560 = vrot.lane.b32.xlu0 %v538, 40
        %v561 = vpop.permute.xlu0 %560
        %v562 = vld [vmem:[%s384] sm:$0xf]
        %v563 = vld [vmem:[%s4 + $0x4] sm:$0xf]
        %v564 = vld [vmem:[%s4 + $0x10] sm:$0xf]
        %v565 = vld [vmem:[%s4 + $0x1c] sm:$0xf]
        %v566 = vld [vmem:[%s4 + $0x28] sm:$0xf]
        %v567 = vunpack.c.l.bf16 %v562
        %vm568 = vcmask 64512
        %v570 = vsel %vm568, %v538, 0
        %v573 = vsel %vm568, %v547, 0
        %575 = vmatprep.subr.bf16.mxu0 0
        %576 = vmatpush1.bf16.xpose.msra.mxu0 %v573
        %577 = vmatprep.subr.bf16.mxu0 0
        %578 = vmatpush1.bf16.xpose.msra.mxu0 0
        %579 = vmatprep.subr.bf16.mxu0 0
        %580 = vmatpush1.bf16.xpose.msra.mxu0 0
        %581 = vmatprep.subr.bf16.mxu0 0
        %582 = vmatpush1.bf16.xpose.msra.mxu0 0
        %583 = vmatprep.subr.bf16.mxu0 0
        %584 = vmatpush1.bf16.xpose.msra.mxu0 0
        %585 = vmatprep.subr.bf16.mxu0 0
        %586 = vmatpush1.bf16.xpose.msra.mxu0 0
        %587 = vmatprep.subr.bf16.mxu0 0
        %588 = vmatpush1.bf16.xpose.msra.mxu0 0
        %589 = vmatprep.subr.bf16.mxu0 0
        %590 = vmatpush1.bf16.xpose.msra.mxu0 0
        %591 = vmatprep.subr.bf16.mxu0 0
        %592 = vmatpush1.bf16.xpose.msra.mxu0 0
        %593 = vmatprep.subr.bf16.mxu0 0
        %594 = vmatpush1.bf16.xpose.msra.mxu0 0
        %595 = vmatprep.subr.bf16.mxu0 0
        %596 = vmatpush1.bf16.xpose.msra.mxu0 0
        %597 = vmatprep.subr.bf16.mxu0 0
        %598 = vmatpush1.bf16.xpose.msra.mxu0 0
        %599 = vmatprep.subr.bf16.mxu0 0
        %600 = vmatpush1.bf16.xpose.msra.mxu0 0
        %601 = vmatprep.subr.bf16.mxu0 0
        %602 = vmatpush1.bf16.xpose.msra.mxu0 0
        %603 = vmatprep.subr.bf16.mxu0 0
        %604 = vmatpush1.bf16.xpose.msra.mxu0 0
        %605 = vmatprep.subr.bf16.mxu0 0
        %606 = vmatpush1.bf16.xpose.msra.mxu0 0
        %607 = vmatprep.mubr.bf16.mxu0 0
        %608 = vmatmul.mubr.bf16.gmra.mrb[0].mxu0 %v570
        %v609 = vpop.f32.mrb[0].mxu0
        %v610 = vadd.f32 %v567, %v609
        %v611 = vpop.f32.mrb[0].mxu0
        %v612 = vpop.f32.mrb[0].mxu0
        %v613 = vpop.f32.mrb[0].mxu0
        %614 = vdwg.mxu0
        %v616 = vsel %vm568, %v541, 0
        %v619 = vsel %vm568, %v549, 0
        %621 = vmatprep.subr.bf16.mxu0 0
        %622 = vmatpush1.bf16.xpose.msra.mxu0 %v619
        %623 = vmatprep.subr.bf16.mxu0 0
        %624 = vmatpush1.bf16.xpose.msra.mxu0 0
        %625 = vmatprep.subr.bf16.mxu0 0
        %626 = vmatpush1.bf16.xpose.msra.mxu0 0
        %627 = vmatprep.subr.bf16.mxu0 0
        %628 = vmatpush1.bf16.xpose.msra.mxu0 0
        %629 = vmatprep.subr.bf16.mxu0 0
        %630 = vmatpush1.bf16.xpose.msra.mxu0 0
        %631 = vmatprep.subr.bf16.mxu0 0
        %632 = vmatpush1.bf16.xpose.msra.mxu0 0
        %633 = vmatprep.subr.bf16.mxu0 0
        %634 = vmatpush1.bf16.xpose.msra.mxu0 0
        %635 = vmatprep.subr.bf16.mxu0 0
        %636 = vmatpush1.bf16.xpose.msra.mxu0 0
        %637 = vmatprep.subr.bf16.mxu0 0
        %638 = vmatpush1.bf16.xpose.msra.mxu0 0
        %639 = vmatprep.subr.bf16.mxu0 0
        %640 = vmatpush1.bf16.xpose.msra.mxu0 0
        %641 = vmatprep.subr.bf16.mxu0 0
        %642 = vmatpush1.bf16.xpose.msra.mxu0 0
        %643 = vmatprep.subr.bf16.mxu0 0
        %644 = vmatpush1.bf16.xpose.msra.mxu0 0
        %645 = vmatprep.subr.bf16.mxu0 0
        %646 = vmatpush1.bf16.xpose.msra.mxu0 0
        %647 = vmatprep.subr.bf16.mxu0 0
        %648 = vmatpush1.bf16.xpose.msra.mxu0 0
        %649 = vmatprep.subr.bf16.mxu0 0
        %650 = vmatpush1.bf16.xpose.msra.mxu0 0
        %651 = vmatprep.subr.bf16.mxu0 0
        %652 = vmatpush1.bf16.xpose.msra.mxu0 0
        %653 = vmatprep.mubr.bf16.mxu0 0
        %654 = vmatmul.mubr.bf16.gmra.mrb[0].mxu0 %v616
        %v655 = vpop.f32.mrb[0].mxu0
        %v656 = vadd.f32 %v567, %v655
        %v657 = vpop.f32.mrb[0].mxu0
        %v658 = vpop.f32.mrb[0].mxu0
        %v659 = vpop.f32.mrb[0].mxu0
        %660 = vdwg.mxu0
        %v662 = vsel %vm568, %v543, 0
        %v665 = vsel %vm568, %v551, 0
        %667 = vmatprep.subr.bf16.mxu0 0
        %668 = vmatpush1.bf16.xpose.msra.mxu0 %v665
        %669 = vmatprep.subr.bf16.mxu0 0
        %670 = vmatpush1.bf16.xpose.msra.mxu0 0
        %671 = vmatprep.subr.bf16.mxu0 0
        %672 = vmatpush1.bf16.xpose.msra.mxu0 0
        %673 = vmatprep.subr.bf16.mxu0 0
        %674 = vmatpush1.bf16.xpose.msra.mxu0 0
        %675 = vmatprep.subr.bf16.mxu0 0
        %676 = vmatpush1.bf16.xpose.msra.mxu0 0
        %677 = vmatprep.subr.bf16.mxu0 0
        %678 = vmatpush1.bf16.xpose.msra.mxu0 0
        %679 = vmatprep.subr.bf16.mxu0 0
        %680 = vmatpush1.bf16.xpose.msra.mxu0 0
        %681 = vmatprep.subr.bf16.mxu0 0
        %682 = vmatpush1.bf16.xpose.msra.mxu0 0
        %683 = vmatprep.subr.bf16.mxu0 0
        %684 = vmatpush1.bf16.xpose.msra.mxu0 0
        %685 = vmatprep.subr.bf16.mxu0 0
        %686 = vmatpush1.bf16.xpose.msra.mxu0 0
        %687 = vmatprep.subr.bf16.mxu0 0
        %688 = vmatpush1.bf16.xpose.msra.mxu0 0
        %689 = vmatprep.subr.bf16.mxu0 0
        %690 = vmatpush1.bf16.xpose.msra.mxu0 0
        %691 = vmatprep.subr.bf16.mxu0 0
        %692 = vmatpush1.bf16.xpose.msra.mxu0 0
        %693 = vmatprep.subr.bf16.mxu0 0
        %694 = vmatpush1.bf16.xpose.msra.mxu0 0
        %695 = vmatprep.subr.bf16.mxu0 0
        %696 = vmatpush1.bf16.xpose.msra.mxu0 0
        %697 = vmatprep.subr.bf16.mxu0 0
        %698 = vmatpush1.bf16.xpose.msra.mxu0 0
        %699 = vmatprep.mubr.bf16.mxu0 0
        %700 = vmatmul.mubr.bf16.gmra.mrb[0].mxu0 %v662
        %v701 = vpop.f32.mrb[0].mxu0
        %v702 = vadd.f32 %v567, %v701
        %v703 = vpop.f32.mrb[0].mxu0
        %v704 = vpop.f32.mrb[0].mxu0
        %v705 = vpop.f32.mrb[0].mxu0
        %706 = vdwg.mxu0
        %v708 = vsel %vm568, %v545, 0
        %v711 = vsel %vm568, %v553, 0
        %713 = vmatprep.subr.bf16.mxu0 0
        %714 = vmatpush1.bf16.xpose.msra.mxu0 %v711
        %715 = vmatprep.subr.bf16.mxu0 0
        %716 = vmatpush1.bf16.xpose.msra.mxu0 0
        %717 = vmatprep.subr.bf16.mxu0 0
        %718 = vmatpush1.bf16.xpose.msra.mxu0 0
        %719 = vmatprep.subr.bf16.mxu0 0
        %720 = vmatpush1.bf16.xpose.msra.mxu0 0
        %721 = vmatprep.subr.bf16.mxu0 0
        %722 = vmatpush1.bf16.xpose.msra.mxu0 0
        %723 = vmatprep.subr.bf16.mxu0 0
        %724 = vmatpush1.bf16.xpose.msra.mxu0 0
        %725 = vmatprep.subr.bf16.mxu0 0
        %726 = vmatpush1.bf16.xpose.msra.mxu0 0
        %727 = vmatprep.subr.bf16.mxu0 0
        %728 = vmatpush1.bf16.xpose.msra.mxu0 0
        %729 = vmatprep.subr.bf16.mxu0 0
        %730 = vmatpush1.bf16.xpose.msra.mxu0 0
        %731 = vmatprep.subr.bf16.mxu0 0
        %732 = vmatpush1.bf16.xpose.msra.mxu0 0
        %733 = vmatprep.subr.bf16.mxu0 0
        %734 = vmatpush1.bf16.xpose.msra.mxu0 0
        %735 = vmatprep.subr.bf16.mxu0 0
        %736 = vmatpush1.bf16.xpose.msra.mxu0 0
        %737 = vmatprep.subr.bf16.mxu0 0
        %738 = vmatpush1.bf16.xpose.msra.mxu0 0
        %739 = vmatprep.subr.bf16.mxu0 0
        %740 = vmatpush1.bf16.xpose.msra.mxu0 0
        %741 = vmatprep.subr.bf16.mxu0 0
        %742 = vmatpush1.bf16.xpose.msra.mxu0 0
        %743 = vmatprep.subr.bf16.mxu0 0
        %744 = vmatpush1.bf16.xpose.msra.mxu0 0
        %745 = vmatprep.mubr.bf16.mxu0 0
        %746 = vmatmul.mubr.bf16.gmra.mrb[0].mxu0 %v708
        %v747 = vpop.f32.mrb[0].mxu0
        %v748 = vadd.f32 %v567, %v747
        %v749 = vpop.f32.mrb[0].mxu0
        %v750 = vpop.f32.mrb[0].mxu0
        %v751 = vpop.f32.mrb[0].mxu0
        %752 = vdwg.mxu0
        %v753 = vsel %vm568, %v610, -inf
        %754 = vmax.xlane.f32.xlu0 %v753
        %v755 = vpop.xlane.xlu0 %754
        %v756 = vsel %vm568, %v656, -inf
        %757 = vmax.xlane.f32.xlu0 %v756
        %v758 = vpop.xlane.xlu0 %757
        %v759 = vsel %vm568, %v702, -inf
        %760 = vmax.xlane.f32.xlu0 %v759
        %v761 = vpop.xlane.xlu0 %760
        %v762 = vsel %vm568, %v748, -inf
        %763 = vmax.xlane.f32.xlu0 %v762
        %v764 = vpop.xlane.xlu0 %763
        %v765 = vsub.f32 %v610, %v755
        %v766 = vsub.f32 %v656, %v758
        %v767 = vsub.f32 %v702, %v761
        %v768 = vsub.f32 %v748, %v764
        %v769 = vmul.f32 %v765, 1.442695
        %v770 = vpow.pop %v769
        %v771 = vmul.f32 %v766, 1.442695
        %v772 = vpow.pop %v771
        %v773 = vmul.f32 %v767, 1.442695
        %v774 = vpow.pop %v773
        %v775 = vmul.f32 %v768, 1.442695
        %v776 = vpow.pop %v775
        %v777 = vsel %vm568, %v770, 0.0
        %778 = vadd.xlane.f32.xlu0 %v777
        %v779 = vpop.xlane.xlu0 %778
        %v780 = vsel %vm568, %v772, 0.0
        %781 = vadd.xlane.f32.xlu0 %v780
        %v782 = vpop.xlane.xlu0 %781
        %v783 = vsel %vm568, %v774, 0.0
        %784 = vadd.xlane.f32.xlu0 %v783
        %v785 = vpop.xlane.xlu0 %784
        %v786 = vsel %vm568, %v776, 0.0
        %787 = vadd.xlane.f32.xlu0 %v786
        %v788 = vpop.xlane.xlu0 %787
        %v789 = vrcp.pop %v779
        %v790 = vrcp.pop %v782
        %v791 = vrcp.pop %v785
        %v792 = vrcp.pop %v788
        %v793 = vmul.f32 %v770, %v789
        %v794 = vmul.f32 %v772, %v790
        %v795 = vmul.f32 %v774, %v791
        %v796 = vmul.f32 %v776, %v792
        %v797 = vpack.c.bf16 %v793, %v793
        %v798 = vpack.c.bf16 %v794, %v794
        %v799 = vpack.c.bf16 %v795, %v795
        %v800 = vpack.c.bf16 %v796, %v796
        %v802 = vsel %vm568, %v797, 0
        %vm804 = vcmask 1043456
        %v806 = vsel %vm804, %v555, 0
        %808 = vmatprep.subr.bf16.mxu0 0
        %809 = vmatpush1.bf16.msra.mxu0 %v806
        %810 = vmatprep.subr.bf16.mxu0 0
        %811 = vmatpush1.bf16.msra.mxu0 0
        %812 = vmatprep.subr.bf16.mxu0 0
        %813 = vmatpush1.bf16.msra.mxu0 0
        %814 = vmatprep.subr.bf16.mxu0 0
        %815 = vmatpush1.bf16.msra.mxu0 0
        %816 = vmatprep.subr.bf16.mxu0 0
        %817 = vmatpush1.bf16.msra.mxu0 0
        %818 = vmatprep.subr.bf16.mxu0 0
        %819 = vmatpush1.bf16.msra.mxu0 0
        %820 = vmatprep.subr.bf16.mxu0 0
        %821 = vmatpush1.bf16.msra.mxu0 0
        %822 = vmatprep.subr.bf16.mxu0 0
        %823 = vmatpush1.bf16.msra.mxu0 0
        %824 = vmatprep.subr.bf16.mxu0 0
        %825 = vmatpush1.bf16.msra.mxu0 0
        %826 = vmatprep.subr.bf16.mxu0 0
        %827 = vmatpush1.bf16.msra.mxu0 0
        %828 = vmatprep.subr.bf16.mxu0 0
        %829 = vmatpush1.bf16.msra.mxu0 0
        %830 = vmatprep.subr.bf16.mxu0 0
        %831 = vmatpush1.bf16.msra.mxu0 0
        %832 = vmatprep.subr.bf16.mxu0 0
        %833 = vmatpush1.bf16.msra.mxu0 0
        %834 = vmatprep.subr.bf16.mxu0 0
        %835 = vmatpush1.bf16.msra.mxu0 0
        %836 = vmatprep.subr.bf16.mxu0 0
        %837 = vmatpush1.bf16.msra.mxu0 0
        %838 = vmatprep.subr.bf16.mxu0 0
        %839 = vmatpush1.bf16.msra.mxu0 0
        %840 = vmatprep.mubr.bf16.mxu0 0
        %841 = vmatmul.mubr.bf16.gmra.mrb[0].mxu0 %v802
        %v842 = vpop.f32.mrb[0].mxu0
        %v843 = vadd.f32 0.0, %v842
        %v844 = vpop.f32.mrb[0].mxu0
        %v845 = vpop.f32.mrb[0].mxu0
        %v846 = vpop.f32.mrb[0].mxu0
        %847 = vdwg.mxu0
        %v849 = vsel %vm568, %v798, 0
        %v852 = vsel %vm804, %v557, 0
        %854 = vmatprep.subr.bf16.mxu0 0
        %855 = vmatpush1.bf16.msra.mxu0 %v852
        %856 = vmatprep.subr.bf16.mxu0 0
        %857 = vmatpush1.bf16.msra.mxu0 0
        %858 = vmatprep.subr.bf16.mxu0 0
        %859 = vmatpush1.bf16.msra.mxu0 0
        %860 = vmatprep.subr.bf16.mxu0 0
        %861 = vmatpush1.bf16.msra.mxu0 0
        %862 = vmatprep.subr.bf16.mxu0 0
        %863 = vmatpush1.bf16.msra.mxu0 0
        %864 = vmatprep.subr.bf16.mxu0 0
        %865 = vmatpush1.bf16.msra.mxu0 0
        %866 = vmatprep.subr.bf16.mxu0 0
        %867 = vmatpush1.bf16.msra.mxu0 0
        %868 = vmatprep.subr.bf16.mxu0 0
        %869 = vmatpush1.bf16.msra.mxu0 0
        %870 = vmatprep.subr.bf16.mxu0 0
        %871 = vmatpush1.bf16.msra.mxu0 0
        %872 = vmatprep.subr.bf16.mxu0 0
        %873 = vmatpush1.bf16.msra.mxu0 0
        %874 = vmatprep.subr.bf16.mxu0 0
        %875 = vmatpush1.bf16.msra.mxu0 0
        %876 = vmatprep.subr.bf16.mxu0 0
        %877 = vmatpush1.bf16.msra.mxu0 0
        %878 = vmatprep.subr.bf16.mxu0 0
        %879 = vmatpush1.bf16.msra.mxu0 0
        %880 = vmatprep.subr.bf16.mxu0 0
        %881 = vmatpush1.bf16.msra.mxu0 0
        %882 = vmatprep.subr.bf16.mxu0 0
        %883 = vmatpush1.bf16.msra.mxu0 0
        %884 = vmatprep.subr.bf16.mxu0 0
        %885 = vmatpush1.bf16.msra.mxu0 0
        %886 = vmatprep.mubr.bf16.mxu0 0
        %887 = vmatmul.mubr.bf16.gmra.mrb[0].mxu0 %v849
        %v888 = vpop.f32.mrb[0].mxu0
        %v889 = vadd.f32 0.0, %v888
        %v890 = vpop.f32.mrb[0].mxu0
        %v891 = vpop.f32.mrb[0].mxu0
        %v892 = vpop.f32.mrb[0].mxu0
        %893 = vdwg.mxu0
        %v895 = vsel %vm568, %v799, 0
        %v898 = vsel %vm804, %v559, 0
        %900 = vmatprep.subr.bf16.mxu0 0
        %901 = vmatpush1.bf16.msra.mxu0 %v898
        %902 = vmatprep.subr.bf16.mxu0 0
        %903 = vmatpush1.bf16.msra.mxu0 0
        %904 = vmatprep.subr.bf16.mxu0 0
        %905 = vmatpush1.bf16.msra.mxu0 0
        %906 = vmatprep.subr.bf16.mxu0 0
        %907 = vmatpush1.bf16.msra.mxu0 0
        %908 = vmatprep.subr.bf16.mxu0 0
        %909 = vmatpush1.bf16.msra.mxu0 0
        %910 = vmatprep.subr.bf16.mxu0 0
        %911 = vmatpush1.bf16.msra.mxu0 0
        %912 = vmatprep.subr.bf16.mxu0 0
        %913 = vmatpush1.bf16.msra.mxu0 0
        %914 = vmatprep.subr.bf16.mxu0 0
        %915 = vmatpush1.bf16.msra.mxu0 0
        %916 = vmatprep.subr.bf16.mxu0 0
        %917 = vmatpush1.bf16.msra.mxu0 0
        %918 = vmatprep.subr.bf16.mxu0 0
        %919 = vmatpush1.bf16.msra.mxu0 0
        %920 = vmatprep.subr.bf16.mxu0 0
        %921 = vmatpush1.bf16.msra.mxu0 0
        %922 = vmatprep.subr.bf16.mxu0 0
        %923 = vmatpush1.bf16.msra.mxu0 0
        %924 = vmatprep.subr.bf16.mxu0 0
        %925 = vmatpush1.bf16.msra.mxu0 0
        %926 = vmatprep.subr.bf16.mxu0 0
        %927 = vmatpush1.bf16.msra.mxu0 0
        %928 = vmatprep.subr.bf16.mxu0 0
        %929 = vmatpush1.bf16.msra.mxu0 0
        %930 = vmatprep.subr.bf16.mxu0 0
        %931 = vmatpush1.bf16.msra.mxu0 0
        %932 = vmatprep.mubr.bf16.mxu0 0
        %933 = vmatmul.mubr.bf16.gmra.mrb[0].mxu0 %v895
        %v934 = vpop.f32.mrb[0].mxu0
        %v935 = vadd.f32 0.0, %v934
        %v936 = vpop.f32.mrb[0].mxu0
        %v937 = vpop.f32.mrb[0].mxu0
        %v938 = vpop.f32.mrb[0].mxu0
        %939 = vdwg.mxu0
        %v941 = vsel %vm568, %v800, 0
        %v944 = vsel %vm804, %v561, 0
        %946 = vmatprep.subr.bf16.mxu0 0
        %947 = vmatpush1.bf16.msra.mxu0 %v944
        %948 = vmatprep.subr.bf16.mxu0 0
        %949 = vmatpush1.bf16.msra.mxu0 0
        %950 = vmatprep.subr.bf16.mxu0 0
        %951 = vmatpush1.bf16.msra.mxu0 0
        %952 = vmatprep.subr.bf16.mxu0 0
        %953 = vmatpush1.bf16.msra.mxu0 0
        %954 = vmatprep.subr.bf16.mxu0 0
        %955 = vmatpush1.bf16.msra.mxu0 0
        %956 = vmatprep.subr.bf16.mxu0 0
        %957 = vmatpush1.bf16.msra.mxu0 0
        %958 = vmatprep.subr.bf16.mxu0 0
        %959 = vmatpush1.bf16.msra.mxu0 0
        %960 = vmatprep.subr.bf16.mxu0 0
        %961 = vmatpush1.bf16.msra.mxu0 0
        %962 = vmatprep.subr.bf16.mxu0 0
        %963 = vmatpush1.bf16.msra.mxu0 0
        %964 = vmatprep.subr.bf16.mxu0 0
        %965 = vmatpush1.bf16.msra.mxu0 0
        %966 = vmatprep.subr.bf16.mxu0 0
        %967 = vmatpush1.bf16.msra.mxu0 0
        %968 = vmatprep.subr.bf16.mxu0 0
        %969 = vmatpush1.bf16.msra.mxu0 0
        %970 = vmatprep.subr.bf16.mxu0 0
        %971 = vmatpush1.bf16.msra.mxu0 0
        %972 = vmatprep.subr.bf16.mxu0 0
        %973 = vmatpush1.bf16.msra.mxu0 0
        %974 = vmatprep.subr.bf16.mxu0 0
        %975 = vmatpush1.bf16.msra.mxu0 0
        %976 = vmatprep.subr.bf16.mxu0 0
        %977 = vmatpush1.bf16.msra.mxu0 0
        %978 = vmatprep.mubr.bf16.mxu0 0
        %979 = vmatmul.mubr.bf16.gmra.mrb[0].mxu0 %v941
        %v980 = vpop.f32.mrb[0].mxu0
        %v981 = vadd.f32 0.0, %v980
        %v982 = vpop.f32.mrb[0].mxu0
        %v983 = vpop.f32.mrb[0].mxu0
        %v984 = vpop.f32.mrb[0].mxu0
        %985 = vdwg.mxu0
        %987 = vrot.lane.b32.xlu0 %v889, 8
        %v988 = vpop.permute.xlu0 %987
        %991 = vrot.lane.b32.xlu0 %v935, 16
        %v992 = vpop.permute.xlu0 %991
        %995 = vrot.lane.b32.xlu0 %v981, 24
        %v996 = vpop.permute.xlu0 %995
        %v998 = vsel %vm568, %v843, %v988
        %vm999 = vcmask 130048
        %v1000 = vsel %vm999, %v998, %v992
        %vm1001 = vcmask 195584
        %v1002 = vsel %vm1001, %v1000, %v996
        %v1003 = vpack.c.bf16 %v1002, %v1002
        %v1008 = vunpack.c.l.b16 %v563
        %v1009 = vunpack.c.l.b16 %v564
        %v1010 = vunpack.c.l.b16 %v565
        %v1011 = vunpack.c.l.b16 %v566
        %v1012 = vpack.c.b16 %v1009, %v1008
        %v1013 = vpack.c.b16 %v1011, %v1010
        %1014 = vrot.lane.b32.xlu0 %v1012, 64
        %v1015 = vpop.permute.xlu0 %1014
        %1016 = vrot.lane.b32.xlu0 %v1013, 64
        %v1017 = vpop.permute.xlu0 %1016
        %v1021 = vsel %vm452, %v1003, 0
        %1023 = vmatprep.subr.bf16.mxu0 0
        %1024 = vmatpush1.bf16.msra.mxu0 %v1015
        %1025 = vmatprep.subr.bf16.mxu0 0
        %1026 = vmatpush1.bf16.msra.mxu0 %v1017
        %1027 = vmatprep.subr.bf16.mxu0 0
        %1028 = vmatpush1.bf16.msra.mxu0 0
        %1029 = vmatprep.subr.bf16.mxu0 0
        %1030 = vmatpush1.bf16.msra.mxu0 0
        %1031 = vmatprep.subr.bf16.mxu0 0
        %1032 = vmatpush1.bf16.msra.mxu0 0
        %1033 = vmatprep.subr.bf16.mxu0 0
        %1034 = vmatpush1.bf16.msra.mxu0 0
        %1035 = vmatprep.subr.bf16.mxu0 0
        %1036 = vmatpush1.bf16.msra.mxu0 0
        %1037 = vmatprep.subr.bf16.mxu0 0
        %1038 = vmatpush1.bf16.msra.mxu0 0
        %1039 = vmatprep.subr.bf16.mxu0 0
        %1040 = vmatpush1.bf16.msra.mxu0 0
        %1041 = vmatprep.subr.bf16.mxu0 0
        %1042 = vmatpush1.bf16.msra.mxu0 0
        %1043 = vmatprep.subr.bf16.mxu0 0
        %1044 = vmatpush1.bf16.msra.mxu0 0
        %1045 = vmatprep.subr.bf16.mxu0 0
        %1046 = vmatpush1.bf16.msra.mxu0 0
        %1047 = vmatprep.subr.bf16.mxu0 0
        %1048 = vmatpush1.bf16.msra.mxu0 0
        %1049 = vmatprep.subr.bf16.mxu0 0
        %1050 = vmatpush1.bf16.msra.mxu0 0
        %1051 = vmatprep.subr.bf16.mxu0 0
        %1052 = vmatpush1.bf16.msra.mxu0 0
        %1053 = vmatprep.subr.bf16.mxu0 0
        %1054 = vmatpush1.bf16.msra.mxu0 0
        %1055 = vmatprep.mubr.bf16.mxu0 0
        %1056 = vmatmul.mubr.bf16.gmra.mrb[0].mxu0 %v1021
        %v1057 = vpop.f32.mrb[0].mxu0
        %v1058 = vadd.f32 0.0, %v1057
        %v1059 = vpop.f32.mrb[0].mxu0
        %v1060 = vpop.f32.mrb[0].mxu0
        %v1061 = vpop.f32.mrb[0].mxu0
        %1062 = vdwg.mxu0
        %v1063 = vadd.f32 %v447, %v1058
        %s1064 = sld [smem:[#allocation11 + $0x2]]
        %s1065 = sld [smem:[#allocation11 + $0x3]]
        %v1066 = vsel %vm452, %v1063, 0.0
        %1067 = vadd.xlane.f32.xlu0 %v1066
        %v1068 = vpop.xlane.xlu0 %1067
        %v1069 = vmul.f32 %v1068, %v456
        %v1070 = vsub.f32 %v1063, %v1069
        %v1071 = vmul.f32 %v1070, %v1070
        %v1072 = vsel %vm452, %v1071, 0.0
        %1073 = vadd.xlane.f32.xlu0 %v1072
        %v1074 = vpop.xlane.xlu0 %1073
        %v1075 = vmul.f32 %v1074, 0.032258064
        %v1076 = vstv %s1064
        %v1077 = vmul.f32 %v1076, %v1070
        %v1078 = vrsqrt.pop %v1075
        %v1079 = vmul.f32 %v1075, %v1078
        %vm1080 = vcmp.eq.f32.partialorder %v1075, inf
        %v1081 = vsel %vm1080, %v1075, %v1079
        %vm1082 = vcmp.eq.f32.partialorder %v1075, 0.0
        %v1083 = vand.u32 %v1075, 2147483648
        %v1084 = vsel %vm1082, %v1083, %v1081
        %v1085 = vadd.f32 %v1084, 1e-06
        %v1086 = vrcp.pop %v1085
        %v1087 = vmul.f32 %v1077, %v1086
        %v1088 = vstv %s1065
        %v1089 = vadd.f32 %v1087, %v1088
        %v1090 = vpack.c.bf16 %v1089, %v1089
        %1091 = vrot.lane.b32.xlu0 %v491, 32
        %v1092 = vpop.permute.xlu0 %1091
        %1093 = vrot.lane.b32.xlu0 %v492, 32
        %v1094 = vpop.permute.xlu0 %1093
        %v1098 = vsel %vm452, %v1090, 0
        %1100 = vmatprep.subr.bf16.mxu0 0
        %1101 = vmatpush1.bf16.msra.mxu0 %v1092
        %1102 = vmatprep.subr.bf16.mxu0 0
        %1103 = vmatpush1.bf16.msra.mxu0 %v1094
        %1104 = vmatprep.subr.bf16.mxu0 0
        %1105 = vmatpush1.bf16.msra.mxu0 0
        %1106 = vmatprep.subr.bf16.mxu0 0
        %1107 = vmatpush1.bf16.msra.mxu0 0
        %1108 = vmatprep.subr.bf16.mxu0 0
        %1109 = vmatpush1.bf16.msra.mxu0 0
        %1110 = vmatprep.subr.bf16.mxu0 0
        %1111 = vmatpush1.bf16.msra.mxu0 0
        %1112 = vmatprep.subr.bf16.mxu0 0
        %1113 = vmatpush1.bf16.msra.mxu0 0
        %1114 = vmatprep.subr.bf16.mxu0 0
        %1115 = vmatpush1.bf16.msra.mxu0 0
        %1116 = vmatprep.subr.bf16.mxu0 0
        %1117 = vmatpush1.bf16.msra.mxu0 0
        %1118 = vmatprep.subr.bf16.mxu0 0
        %1119 = vmatpush1.bf16.msra.mxu0 0
        %1120 = vmatprep.subr.bf16.mxu0 0
        %1121 = vmatpush1.bf16.msra.mxu0 0
        %1122 = vmatprep.subr.bf16.mxu0 0
        %1123 = vmatpush1.bf16.msra.mxu0 0
        %1124 = vmatprep.subr.bf16.mxu0 0
        %1125 = vmatpush1.bf16.msra.mxu0 0
        %1126 = vmatprep.subr.bf16.mxu0 0
        %1127 = vmatpush1.bf16.msra.mxu0 0
        %1128 = vmatprep.subr.bf16.mxu0 0
        %1129 = vmatpush1.bf16.msra.mxu0 0
        %1130 = vmatprep.subr.bf16.mxu0 0
        %1131 = vmatpush1.bf16.msra.mxu0 0
        %1132 = vmatprep.mubr.bf16.mxu0 0
        %1133 = vmatmul.mubr.bf16.gmra.mrb[0].mxu0 %v1098
        %v1134 = vpop.f32.mrb[0].mxu0
        %v1135 = vadd.f32 0.0, %v1134
        %v1136 = vpop.f32.mrb[0].mxu0
        %v1137 = vpop.f32.mrb[0].mxu0
        %v1138 = vpop.f32.mrb[0].mxu0
        %1139 = vdwg.mxu0
        %v1140 = vpack.c.bf16 %v1135, %v1135
        %v1143 = vunpack.c.l.b16 %v448
        %v1144 = vunpack.c.l.b16 %v449
        %v1145 = vpack.c.b16 %v1144, %v1143
        %v1149 = vsel %vm452, %v1145, 0
        %1151 = vmatprep.subr.bf16.mxu0 0
        %1152 = vmatpush1.bf16.msra.mxu0 %v1012
        %1153 = vmatprep.subr.bf16.mxu0 0
        %1154 = vmatpush1.bf16.msra.mxu0 %v1013
        %1155 = vmatprep.subr.bf16.mxu0 0
        %1156 = vmatpush1.bf16.msra.mxu0 0
        %1157 = vmatprep.subr.bf16.mxu0 0
        %1158 = vmatpush1.bf16.msra.mxu0 0
        %1159 = vmatprep.subr.bf16.mxu0 0
        %1160 = vmatpush1.bf16.msra.mxu0 0
        %1161 = vmatprep.subr.bf16.mxu0 0
        %1162 = vmatpush1.bf16.msra.mxu0 0
        %1163 = vmatprep.subr.bf16.mxu0 0
        %1164 = vmatpush1.bf16.msra.mxu0 0
        %1165 = vmatprep.subr.bf16.mxu0 0
        %1166 = vmatpush1.bf16.msra.mxu0 0
        %1167 = vmatprep.subr.bf16.mxu0 0
        %1168 = vmatpush1.bf16.msra.mxu0 0
        %1169 = vmatprep.subr.bf16.mxu0 0
        %1170 = vmatpush1.bf16.msra.mxu0 0
        %1171 = vmatprep.subr.bf16.mxu0 0
        %1172 = vmatpush1.bf16.msra.mxu0 0
        %1173 = vmatprep.subr.bf16.mxu0 0
        %1174 = vmatpush1.bf16.msra.mxu0 0
        %1175 = vmatprep.subr.bf16.mxu0 0
        %1176 = vmatpush1.bf16.msra.mxu0 0
        %1177 = vmatprep.subr.bf16.mxu0 0
        %1178 = vmatpush1.bf16.msra.mxu0 0
        %1179 = vmatprep.subr.bf16.mxu0 0
        %1180 = vmatpush1.bf16.msra.mxu0 0
        %1181 = vmatprep.subr.bf16.mxu0 0
        %1182 = vmatpush1.bf16.msra.mxu0 0
        %1183 = vmatprep.mubr.bf16.mxu0 0
        %1184 = vmatmul.mubr.bf16.gmra.mrb[0].mxu0 %v1149
        %v1185 = vpop.f32.mrb[0].mxu0
        %v1186 = vadd.f32 0.0, %v1185
        %v1187 = vpop.f32.mrb[0].mxu0
        %v1188 = vpop.f32.mrb[0].mxu0
        %v1189 = vadd.f32 0.0, %v1188
        %v1190 = vpop.f32.mrb[0].mxu0
        %1191 = vdwg.mxu0
        %v1192 = vpack.c.bf16 %v1189, %v1186
        %1194 = vrot.lane.b32.xlu0 %v1140, 120
        %v1195 = vpop.permute.xlu0 %1194
        %1196 = vrot.lane.b32.xlu0 %v1140, 112
        %v1197 = vpop.permute.xlu0 %1196
        %1198 = vrot.lane.b32.xlu0 %v1140, 104
        %v1199 = vpop.permute.xlu0 %1198
        %1201 = vrot.lane.b32.xlu0 %v1192, 120
        %v1202 = vpop.permute.xlu0 %1201
        %1203 = vrot.lane.b32.xlu0 %v1192, 112
        %v1204 = vpop.permute.xlu0 %1203
        %1205 = vrot.lane.b32.xlu0 %v1192, 104
        %v1206 = vpop.permute.xlu0 %1205
        %1207 = vrot.lane.b32.xlu0 %v1192, 96
        %v1208 = vpop.permute.xlu0 %1207
        %1210 = vrot.lane.b32.xlu0 %v1192, 88
        %v1211 = vpop.permute.xlu0 %1210
        %1213 = vrot.lane.b32.xlu0 %v1192, 80
        %v1214 = vpop.permute.xlu0 %1213
        %1216 = vrot.lane.b32.xlu0 %v1192, 72
        %v1217 = vpop.permute.xlu0 %1216
        %v1219 = vld [vmem:[%s393] sm:$0xf]
        %v1220 = vunpack.c.l.bf16 %v1219
        %v1222 = vsel %vm568, %v1140, 0
        %v1225 = vsel %vm568, %v1192, 0
        %1227 = vmatprep.subr.bf16.mxu0 0
        %1228 = vmatpush1.bf16.xpose.msra.mxu0 %v1225
        %1229 = vmatprep.subr.bf16.mxu0 0
        %1230 = vmatpush1.bf16.xpose.msra.mxu0 0
        %1231 = vmatprep.subr.bf16.mxu0 0
        %1232 = vmatpush1.bf16.xpose.msra.mxu0 0
        %1233 = vmatprep.subr.bf16.mxu0 0
        %1234 = vmatpush1.bf16.xpose.msra.mxu0 0
        %1235 = vmatprep.subr.bf16.mxu0 0
        %1236 = vmatpush1.bf16.xpose.msra.mxu0 0
        %1237 = vmatprep.subr.bf16.mxu0 0
        %1238 = vmatpush1.bf16.xpose.msra.mxu0 0
        %1239 = vmatprep.subr.bf16.mxu0 0
        %1240 = vmatpush1.bf16.xpose.msra.mxu0 0
        %1241 = vmatprep.subr.bf16.mxu0 0
        %1242 = vmatpush1.bf16.xpose.msra.mxu0 0
        %1243 = vmatprep.subr.bf16.mxu0 0
        %1244 = vmatpush1.bf16.xpose.msra.mxu0 0
        %1245 = vmatprep.subr.bf16.mxu0 0
        %1246 = vmatpush1.bf16.xpose.msra.mxu0 0
        %1247 = vmatprep.subr.bf16.mxu0 0
        %1248 = vmatpush1.bf16.xpose.msra.mxu0 0
        %1249 = vmatprep.subr.bf16.mxu0 0
        %1250 = vmatpush1.bf16.xpose.msra.mxu0 0
        %1251 = vmatprep.subr.bf16.mxu0 0
        %1252 = vmatpush1.bf16.xpose.msra.mxu0 0
        %1253 = vmatprep.subr.bf16.mxu0 0
        %1254 = vmatpush1.bf16.xpose.msra.mxu0 0
        %1255 = vmatprep.subr.bf16.mxu0 0
        %1256 = vmatpush1.bf16.xpose.msra.mxu0 0
        %1257 = vmatprep.subr.bf16.mxu0 0
        %1258 = vmatpush1.bf16.xpose.msra.mxu0 0
        %1259 = vmatprep.mubr.bf16.mxu0 0
        %1260 = vmatmul.mubr.bf16.gmra.mrb[0].mxu0 %v1222
        %v1261 = vpop.f32.mrb[0].mxu0
        %v1262 = vadd.f32 %v1220, %v1261
        %v1263 = vpop.f32.mrb[0].mxu0
        %v1264 = vpop.f32.mrb[0].mxu0
        %v1265 = vpop.f32.mrb[0].mxu0
        %1266 = vdwg.mxu0
        %v1268 = vsel %vm568, %v1195, 0
        %v1271 = vsel %vm568, %v1202, 0
        %1273 = vmatprep.subr.bf16.mxu0 0
        %1274 = vmatpush1.bf16.xpose.msra.mxu0 %v1271
        %1275 = vmatprep.subr.bf16.mxu0 0
        %1276 = vmatpush1.bf16.xpose.msra.mxu0 0
        %1277 = vmatprep.subr.bf16.mxu0 0
        %1278 = vmatpush1.bf16.xpose.msra.mxu0 0
        %1279 = vmatprep.subr.bf16.mxu0 0
        %1280 = vmatpush1.bf16.xpose.msra.mxu0 0
        %1281 = vmatprep.subr.bf16.mxu0 0
        %1282 = vmatpush1.bf16.xpose.msra.mxu0 0
        %1283 = vmatprep.subr.bf16.mxu0 0
        %1284 = vmatpush1.bf16.xpose.msra.mxu0 0
        %1285 = vmatprep.subr.bf16.mxu0 0
        %1286 = vmatpush1.bf16.xpose.msra.mxu0 0
        %1287 = vmatprep.subr.bf16.mxu0 0
        %1288 = vmatpush1.bf16.xpose.msra.mxu0 0
        %1289 = vmatprep.subr.bf16.mxu0 0
        %1290 = vmatpush1.bf16.xpose.msra.mxu0 0
        %1291 = vmatprep.subr.bf16.mxu0 0
        %1292 = vmatpush1.bf16.xpose.msra.mxu0 0
        %1293 = vmatprep.subr.bf16.mxu0 0
        %1294 = vmatpush1.bf16.xpose.msra.mxu0 0
        %1295 = vmatprep.subr.bf16.mxu0 0
        %1296 = vmatpush1.bf16.xpose.msra.mxu0 0
        %1297 = vmatprep.subr.bf16.mxu0 0
        %1298 = vmatpush1.bf16.xpose.msra.mxu0 0
        %1299 = vmatprep.subr.bf16.mxu0 0
        %1300 = vmatpush1.bf16.xpose.msra.mxu0 0
        %1301 = vmatprep.subr.bf16.mxu0 0
        %1302 = vmatpush1.bf16.xpose.msra.mxu0 0
        %1303 = vmatprep.subr.bf16.mxu0 0
        %1304 = vmatpush1.bf16.xpose.msra.mxu0 0
        %1305 = vmatprep.mubr.bf16.mxu0 0
        %1306 = vmatmul.mubr.bf16.gmra.mrb[0].mxu0 %v1268
        %v1307 = vpop.f32.mrb[0].mxu0
        %v1308 = vadd.f32 %v1220, %v1307
        %v1309 = vpop.f32.mrb[0].mxu0
        %v1310 = vpop.f32.mrb[0].mxu0
        %v1311 = vpop.f32.mrb[0].mxu0
        %1312 = vdwg.mxu0
        %v1314 = vsel %vm568, %v1197, 0
        %v1317 = vsel %vm568, %v1204, 0
        %1319 = vmatprep.subr.bf16.mxu0 0
        %1320 = vmatpush1.bf16.xpose.msra.mxu0 %v1317
        %1321 = vmatprep.subr.bf16.mxu0 0
        %1322 = vmatpush1.bf16.xpose.msra.mxu0 0
        %1323 = vmatprep.subr.bf16.mxu0 0
        %1324 = vmatpush1.bf16.xpose.msra.mxu0 0
        %1325 = vmatprep.subr.bf16.mxu0 0
        %1326 = vmatpush1.bf16.xpose.msra.mxu0 0
        %1327 = vmatprep.subr.bf16.mxu0 0
        %1328 = vmatpush1.bf16.xpose.msra.mxu0 0
        %1329 = vmatprep.subr.bf16.mxu0 0
        %1330 = vmatpush1.bf16.xpose.msra.mxu0 0
        %1331 = vmatprep.subr.bf16.mxu0 0
        %1332 = vmatpush1.bf16.xpose.msra.mxu0 0
        %1333 = vmatprep.subr.bf16.mxu0 0
        %1334 = vmatpush1.bf16.xpose.msra.mxu0 0
        %1335 = vmatprep.subr.bf16.mxu0 0
        %1336 = vmatpush1.bf16.xpose.msra.mxu0 0
        %1337 = vmatprep.subr.bf16.mxu0 0
        %1338 = vmatpush1.bf16.xpose.msra.mxu0 0
        %1339 = vmatprep.subr.bf16.mxu0 0
        %1340 = vmatpush1.bf16.xpose.msra.mxu0 0
        %1341 = vmatprep.subr.bf16.mxu0 0
        %1342 = vmatpush1.bf16.xpose.msra.mxu0 0
        %1343 = vmatprep.subr.bf16.mxu0 0
        %1344 = vmatpush1.bf16.xpose.msra.mxu0 0
        %1345 = vmatprep.subr.bf16.mxu0 0
        %1346 = vmatpush1.bf16.xpose.msra.mxu0 0
        %1347 = vmatprep.subr.bf16.mxu0 0
        %1348 = vmatpush1.bf16.xpose.msra.mxu0 0
        %1349 = vmatprep.subr.bf16.mxu0 0
        %1350 = vmatpush1.bf16.xpose.msra.mxu0 0
        %1351 = vmatprep.mubr.bf16.mxu0 0
        %1352 = vmatmul.mubr.bf16.gmra.mrb[0].mxu0 %v1314
        %v1353 = vpop.f32.mrb[0].mxu0
        %v1354 = vadd.f32 %v1220, %v1353
        %v1355 = vpop.f32.mrb[0].mxu0
        %v1356 = vpop.f32.mrb[0].mxu0
        %v1357 = vpop.f32.mrb[0].mxu0
        %1358 = vdwg.mxu0
        %v1360 = vsel %vm568, %v1199, 0
        %v1363 = vsel %vm568, %v1206, 0
        %1365 = vmatprep.subr.bf16.mxu0 0
        %1366 = vmatpush1.bf16.xpose.msra.mxu0 %v1363
        %1367 = vmatprep.subr.bf16.mxu0 0
        %1368 = vmatpush1.bf16.xpose.msra.mxu0 0
        %1369 = vmatprep.subr.bf16.mxu0 0
        %1370 = vmatpush1.bf16.xpose.msra.mxu0 0
        %1371 = vmatprep.subr.bf16.mxu0 0
        %1372 = vmatpush1.bf16.xpose.msra.mxu0 0
        %1373 = vmatprep.subr.bf16.mxu0 0
        %1374 = vmatpush1.bf16.xpose.msra.mxu0 0
        %1375 = vmatprep.subr.bf16.mxu0 0
        %1376 = vmatpush1.bf16.xpose.msra.mxu0 0
        %1377 = vmatprep.subr.bf16.mxu0 0
        %1378 = vmatpush1.bf16.xpose.msra.mxu0 0
        %1379 = vmatprep.subr.bf16.mxu0 0
        %1380 = vmatpush1.bf16.xpose.msra.mxu0 0
        %1381 = vmatprep.subr.bf16.mxu0 0
        %1382 = vmatpush1.bf16.xpose.msra.mxu0 0
        %1383 = vmatprep.subr.bf16.mxu0 0
        %1384 = vmatpush1.bf16.xpose.msra.mxu0 0
        %1385 = vmatprep.subr.bf16.mxu0 0
        %1386 = vmatpush1.bf16.xpose.msra.mxu0 0
        %1387 = vmatprep.subr.bf16.mxu0 0
        %1388 = vmatpush1.bf16.xpose.msra.mxu0 0
        %1389 = vmatprep.subr.bf16.mxu0 0
        %1390 = vmatpush1.bf16.xpose.msra.mxu0 0
        %1391 = vmatprep.subr.bf16.mxu0 0
        %1392 = vmatpush1.bf16.xpose.msra.mxu0 0
        %1393 = vmatprep.subr.bf16.mxu0 0
        %1394 = vmatpush1.bf16.xpose.msra.mxu0 0
        %1395 = vmatprep.subr.bf16.mxu0 0
        %1396 = vmatpush1.bf16.xpose.msra.mxu0 0
        %1397 = vmatprep.mubr.bf16.mxu0 0
        %1398 = vmatmul.mubr.bf16.gmra.mrb[0].mxu0 %v1360
        %v1399 = vpop.f32.mrb[0].mxu0
        %v1400 = vadd.f32 %v1220, %v1399
        %v1401 = vpop.f32.mrb[0].mxu0
        %v1402 = vpop.f32.mrb[0].mxu0
        %v1403 = vpop.f32.mrb[0].mxu0
        %1404 = vdwg.mxu0
        %v1405 = vsel %vm999, %v1262, -inf
        %1406 = vmax.xlane.f32.xlu0 %v1405
        %v1407 = vpop.xlane.xlu0 %1406
        %v1408 = vsel %vm999, %v1308, -inf
        %1409 = vmax.xlane.f32.xlu0 %v1408
        %v1410 = vpop.xlane.xlu0 %1409
        %v1411 = vsel %vm999, %v1354, -inf
        %1412 = vmax.xlane.f32.xlu0 %v1411
        %v1413 = vpop.xlane.xlu0 %1412
        %v1414 = vsel %vm999, %v1400, -inf
        %1415 = vmax.xlane.f32.xlu0 %v1414
        %v1416 = vpop.xlane.xlu0 %1415
        %v1417 = vsub.f32 %v1262, %v1407
        %v1418 = vsub.f32 %v1308, %v1410
        %v1419 = vsub.f32 %v1354, %v1413
        %v1420 = vsub.f32 %v1400, %v1416
        %v1421 = vmul.f32 %v1417, 1.442695
        %v1422 = vpow.pop %v1421
        %v1423 = vmul.f32 %v1418, 1.442695
        %v1424 = vpow.pop %v1423
        %v1425 = vmul.f32 %v1419, 1.442695
        %v1426 = vpow.pop %v1425
        %v1427 = vmul.f32 %v1420, 1.442695
        %v1428 = vpow.pop %v1427
        %v1429 = vsel %vm999, %v1422, 0.0
        %1430 = vadd.xlane.f32.xlu0 %v1429
        %v1431 = vpop.xlane.xlu0 %1430
        %v1432 = vsel %vm999, %v1424, 0.0
        %1433 = vadd.xlane.f32.xlu0 %v1432
        %v1434 = vpop.xlane.xlu0 %1433
        %v1435 = vsel %vm999, %v1426, 0.0
        %1436 = vadd.xlane.f32.xlu0 %v1435
        %v1437 = vpop.xlane.xlu0 %1436
        %v1438 = vsel %vm999, %v1428, 0.0
        %1439 = vadd.xlane.f32.xlu0 %v1438
        %v1440 = vpop.xlane.xlu0 %1439
        %v1441 = vrcp.pop %v1431
        %v1442 = vrcp.pop %v1434
        %v1443 = vrcp.pop %v1437
        %v1444 = vrcp.pop %v1440
        %v1445 = vmul.f32 %v1422, %v1441
        %v1446 = vmul.f32 %v1424, %v1442
        %v1447 = vmul.f32 %v1426, %v1443
        %v1448 = vmul.f32 %v1428, %v1444
        %v1449 = vpack.c.bf16 %v1445, %v1445
        %v1450 = vpack.c.bf16 %v1446, %v1446
        %v1451 = vpack.c.bf16 %v1447, %v1447
        %v1452 = vpack.c.bf16 %v1448, %v1448
        %v1454 = vsel %vm999, %v1449, 0
        %1456 = vmatprep.subr.bf16.mxu0 0
        %1457 = vmatpush1.bf16.msra.mxu0 %v1208
        %1458 = vmatprep.subr.bf16.mxu0 0
        %1459 = vmatpush1.bf16.msra.mxu0 0
        %1460 = vmatprep.subr.bf16.mxu0 0
        %1461 = vmatpush1.bf16.msra.mxu0 0
        %1462 = vmatprep.subr.bf16.mxu0 0
        %1463 = vmatpush1.bf16.msra.mxu0 0
        %1464 = vmatprep.subr.bf16.mxu0 0
        %1465 = vmatpush1.bf16.msra.mxu0 0
        %1466 = vmatprep.subr.bf16.mxu0 0
        %1467 = vmatpush1.bf16.msra.mxu0 0
        %1468 = vmatprep.subr.bf16.mxu0 0
        %1469 = vmatpush1.bf16.msra.mxu0 0
        %1470 = vmatprep.subr.bf16.mxu0 0
        %1471 = vmatpush1.bf16.msra.mxu0 0
        %1472 = vmatprep.subr.bf16.mxu0 0
        %1473 = vmatpush1.bf16.msra.mxu0 0
        %1474 = vmatprep.subr.bf16.mxu0 0
        %1475 = vmatpush1.bf16.msra.mxu0 0
        %1476 = vmatprep.subr.bf16.mxu0 0
        %1477 = vmatpush1.bf16.msra.mxu0 0
        %1478 = vmatprep.subr.bf16.mxu0 0
        %1479 = vmatpush1.bf16.msra.mxu0 0
        %1480 = vmatprep.subr.bf16.mxu0 0
        %1481 = vmatpush1.bf16.msra.mxu0 0
        %1482 = vmatprep.subr.bf16.mxu0 0
        %1483 = vmatpush1.bf16.msra.mxu0 0
        %1484 = vmatprep.subr.bf16.mxu0 0
        %1485 = vmatpush1.bf16.msra.mxu0 0
        %1486 = vmatprep.subr.bf16.mxu0 0
        %1487 = vmatpush1.bf16.msra.mxu0 0
        %1488 = vmatprep.mubr.bf16.mxu0 0
        %1489 = vmatmul.mubr.bf16.gmra.mrb[0].mxu0 %v1454
        %v1490 = vpop.f32.mrb[0].mxu0
        %v1491 = vadd.f32 0.0, %v1490
        %v1492 = vpop.f32.mrb[0].mxu0
        %v1493 = vpop.f32.mrb[0].mxu0
        %v1494 = vpop.f32.mrb[0].mxu0
        %1495 = vdwg.mxu0
        %v1497 = vsel %vm999, %v1450, 0
        %1499 = vmatprep.subr.bf16.mxu0 0
        %1500 = vmatpush1.bf16.msra.mxu0 %v1211
        %1501 = vmatprep.subr.bf16.mxu0 0
        %1502 = vmatpush1.bf16.msra.mxu0 0
        %1503 = vmatprep.subr.bf16.mxu0 0
        %1504 = vmatpush1.bf16.msra.mxu0 0
        %1505 = vmatprep.subr.bf16.mxu0 0
        %1506 = vmatpush1.bf16.msra.mxu0 0
        %1507 = vmatprep.subr.bf16.mxu0 0
        %1508 = vmatpush1.bf16.msra.mxu0 0
        %1509 = vmatprep.subr.bf16.mxu0 0
        %1510 = vmatpush1.bf16.msra.mxu0 0
        %1511 = vmatprep.subr.bf16.mxu0 0
        %1512 = vmatpush1.bf16.msra.mxu0 0
        %1513 = vmatprep.subr.bf16.mxu0 0
        %1514 = vmatpush1.bf16.msra.mxu0 0
        %1515 = vmatprep.subr.bf16.mxu0 0
        %1516 = vmatpush1.bf16.msra.mxu0 0
        %1517 = vmatprep.subr.bf16.mxu0 0
        %1518 = vmatpush1.bf16.msra.mxu0 0
        %1519 = vmatprep.subr.bf16.mxu0 0
        %1520 = vmatpush1.bf16.msra.mxu0 0
        %1521 = vmatprep.subr.bf16.mxu0 0
        %1522 = vmatpush1.bf16.msra.mxu0 0
        %1523 = vmatprep.subr.bf16.mxu0 0
        %1524 = vmatpush1.bf16.msra.mxu0 0
        %1525 = vmatprep.subr.bf16.mxu0 0
        %1526 = vmatpush1.bf16.msra.mxu0 0
        %1527 = vmatprep.subr.bf16.mxu0 0
        %1528 = vmatpush1.bf16.msra.mxu0 0
        %1529 = vmatprep.subr.bf16.mxu0 0
        %1530 = vmatpush1.bf16.msra.mxu0 0
        %1531 = vmatprep.mubr.bf16.mxu0 0
        %1532 = vmatmul.mubr.bf16.gmra.mrb[0].mxu0 %v1497
        %v1533 = vpop.f32.mrb[0].mxu0
        %v1534 = vadd.f32 0.0, %v1533
        %v1535 = vpop.f32.mrb[0].mxu0
        %v1536 = vpop.f32.mrb[0].mxu0
        %v1537 = vpop.f32.mrb[0].mxu0
        %1538 = vdwg.mxu0
        %v1540 = vsel %vm999, %v1451, 0
        %1542 = vmatprep.subr.bf16.mxu0 0
        %1543 = vmatpush1.bf16.msra.mxu0 %v1214
        %1544 = vmatprep.subr.bf16.mxu0 0
        %1545 = vmatpush1.bf16.msra.mxu0 0
        %1546 = vmatprep.subr.bf16.mxu0 0
        %1547 = vmatpush1.bf16.msra.mxu0 0
        %1548 = vmatprep.subr.bf16.mxu0 0
        %1549 = vmatpush1.bf16.msra.mxu0 0
        %1550 = vmatprep.subr.bf16.mxu0 0
        %1551 = vmatpush1.bf16.msra.mxu0 0
        %1552 = vmatprep.subr.bf16.mxu0 0
        %1553 = vmatpush1.bf16.msra.mxu0 0
        %1554 = vmatprep.subr.bf16.mxu0 0
        %1555 = vmatpush1.bf16.msra.mxu0 0
        %1556 = vmatprep.subr.bf16.mxu0 0
        %1557 = vmatpush1.bf16.msra.mxu0 0
        %1558 = vmatprep.subr.bf16.mxu0 0
        %1559 = vmatpush1.bf16.msra.mxu0 0
        %1560 = vmatprep.subr.bf16.mxu0 0
        %1561 = vmatpush1.bf16.msra.mxu0 0
        %1562 = vmatprep.subr.bf16.mxu0 0
        %1563 = vmatpush1.bf16.msra.mxu0 0
        %1564 = vmatprep.subr.bf16.mxu0 0
        %1565 = vmatpush1.bf16.msra.mxu0 0
        %1566 = vmatprep.subr.bf16.mxu0 0
        %1567 = vmatpush1.bf16.msra.mxu0 0
        %1568 = vmatprep.subr.bf16.mxu0 0
        %1569 = vmatpush1.bf16.msra.mxu0 0
        %1570 = vmatprep.subr.bf16.mxu0 0
        %1571 = vmatpush1.bf16.msra.mxu0 0
        %1572 = vmatprep.subr.bf16.mxu0 0
        %1573 = vmatpush1.bf16.msra.mxu0 0
        %1574 = vmatprep.mubr.bf16.mxu0 0
        %1575 = vmatmul.mubr.bf16.gmra.mrb[0].mxu0 %v1540
        %v1576 = vpop.f32.mrb[0].mxu0
        %v1577 = vadd.f32 0.0, %v1576
        %v1578 = vpop.f32.mrb[0].mxu0
        %v1579 = vpop.f32.mrb[0].mxu0
        %v1580 = vpop.f32.mrb[0].mxu0
        %1581 = vdwg.mxu0
        %v1583 = vsel %vm999, %v1452, 0
        %1585 = vmatprep.subr.bf16.mxu0 0
        %1586 = vmatpush1.bf16.msra.mxu0 %v1217
        %1587 = vmatprep.subr.bf16.mxu0 0
        %1588 = vmatpush1.bf16.msra.mxu0 0
        %1589 = vmatprep.subr.bf16.mxu0 0
        %1590 = vmatpush1.bf16.msra.mxu0 0
        %1591 = vmatprep.subr.bf16.mxu0 0
        %1592 = vmatpush1.bf16.msra.mxu0 0
        %1593 = vmatprep.subr.bf16.mxu0 0
        %1594 = vmatpush1.bf16.msra.mxu0 0
        %1595 = vmatprep.subr.bf16.mxu0 0
        %1596 = vmatpush1.bf16.msra.mxu0 0
        %1597 = vmatprep.subr.bf16.mxu0 0
        %1598 = vmatpush1.bf16.msra.mxu0 0
        %1599 = vmatprep.subr.bf16.mxu0 0
        %1600 = vmatpush1.bf16.msra.mxu0 0
        %1601 = vmatprep.subr.bf16.mxu0 0
        %1602 = vmatpush1.bf16.msra.mxu0 0
        %1603 = vmatprep.subr.bf16.mxu0 0
        %1604 = vmatpush1.bf16.msra.mxu0 0
        %1605 = vmatprep.subr.bf16.mxu0 0
        %1606 = vmatpush1.bf16.msra.mxu0 0
        %1607 = vmatprep.subr.bf16.mxu0 0
        %1608 = vmatpush1.bf16.msra.mxu0 0
        %1609 = vmatprep.subr.bf16.mxu0 0
        %1610 = vmatpush1.bf16.msra.mxu0 0
        %1611 = vmatprep.subr.bf16.mxu0 0
        %1612 = vmatpush1.bf16.msra.mxu0 0
        %1613 = vmatprep.subr.bf16.mxu0 0
        %1614 = vmatpush1.bf16.msra.mxu0 0
        %1615 = vmatprep.subr.bf16.mxu0 0
        %1616 = vmatpush1.bf16.msra.mxu0 0
        %1617 = vmatprep.mubr.bf16.mxu0 0
        %1618 = vmatmul.mubr.bf16.gmra.mrb[0].mxu0 %v1583
        %v1619 = vpop.f32.mrb[0].mxu0
        %v1620 = vadd.f32 0.0, %v1619
        %v1621 = vpop.f32.mrb[0].mxu0
        %v1622 = vpop.f32.mrb[0].mxu0
        %v1623 = vpop.f32.mrb[0].mxu0
        %1624 = vdwg.mxu0
        %1626 = vrot.lane.b32.xlu0 %v1534, 8
        %v1627 = vpop.permute.xlu0 %1626
        %1630 = vrot.lane.b32.xlu0 %v1577, 16
        %v1631 = vpop.permute.xlu0 %1630
        %1634 = vrot.lane.b32.xlu0 %v1620, 24
        %v1635 = vpop.permute.xlu0 %1634
        %v1637 = vsel %vm568, %v1491, %v1627
        %v1638 = vsel %vm999, %v1637, %v1631
        %v1639 = vsel %vm1001, %v1638, %v1635
        %v1640 = vpack.c.bf16 %v1639, %v1639
        %1641 = vrot.lane.b32.xlu0 %v1012, 32
        %v1642 = vpop.permute.xlu0 %1641
        %1643 = vrot.lane.b32.xlu0 %v1013, 32
        %v1644 = vpop.permute.xlu0 %1643
        %v1648 = vsel %vm452, %v1640, 0
        %1650 = vmatprep.subr.bf16.mxu0 0
        %1651 = vmatpush1.bf16.msra.mxu0 %v1642
        %1652 = vmatprep.subr.bf16.mxu0 0
        %1653 = vmatpush1.bf16.msra.mxu0 %v1644
        %1654 = vmatprep.subr.bf16.mxu0 0
        %1655 = vmatpush1.bf16.msra.mxu0 0
        %1656 = vmatprep.subr.bf16.mxu0 0
        %1657 = vmatpush1.bf16.msra.mxu0 0
        %1658 = vmatprep.subr.bf16.mxu0 0
        %1659 = vmatpush1.bf16.msra.mxu0 0
        %1660 = vmatprep.subr.bf16.mxu0 0
        %1661 = vmatpush1.bf16.msra.mxu0 0
        %1662 = vmatprep.subr.bf16.mxu0 0
        %1663 = vmatpush1.bf16.msra.mxu0 0
        %1664 = vmatprep.subr.bf16.mxu0 0
        %1665 = vmatpush1.bf16.msra.mxu0 0
        %1666 = vmatprep.subr.bf16.mxu0 0
        %1667 = vmatpush1.bf16.msra.mxu0 0
        %1668 = vmatprep.subr.bf16.mxu0 0
        %1669 = vmatpush1.bf16.msra.mxu0 0
        %1670 = vmatprep.subr.bf16.mxu0 0
        %1671 = vmatpush1.bf16.msra.mxu0 0
        %1672 = vmatprep.subr.bf16.mxu0 0
        %1673 = vmatpush1.bf16.msra.mxu0 0
        %1674 = vmatprep.subr.bf16.mxu0 0
        %1675 = vmatpush1.bf16.msra.mxu0 0
        %1676 = vmatprep.subr.bf16.mxu0 0
        %1677 = vmatpush1.bf16.msra.mxu0 0
        %1678 = vmatprep.subr.bf16.mxu0 0
        %1679 = vmatpush1.bf16.msra.mxu0 0
        %1680 = vmatprep.subr.bf16.mxu0 0
        %1681 = vmatpush1.bf16.msra.mxu0 0
        %1682 = vmatprep.mubr.bf16.mxu0 0
        %1683 = vmatmul.mubr.bf16.gmra.mrb[0].mxu0 %v1648
        %v1684 = vpop.f32.mrb[0].mxu0
        %v1685 = vadd.f32 0.0, %v1684
        %v1686 = vpop.f32.mrb[0].mxu0
        %v1687 = vpop.f32.mrb[0].mxu0
        %v1688 = vpop.f32.mrb[0].mxu0
        %1689 = vdwg.mxu0
        %v1690 = vadd.f32 %v1063, %v1685
        %s1691 = sld [smem:[#allocation11 + $0x4]]
        %s1692 = sld [smem:[#allocation11 + $0x5]]
        %v1693 = vsel %vm452, %v1690, 0.0
        %1694 = vadd.xlane.f32.xlu0 %v1693
        %v1695 = vpop.xlane.xlu0 %1694
        %v1696 = vmul.f32 %v1695, %v456
        %v1697 = vsub.f32 %v1690, %v1696
        %v1698 = vmul.f32 %v1697, %v1697
        %v1699 = vsel %vm452, %v1698, 0.0
        %1700 = vadd.xlane.f32.xlu0 %v1699
        %v1701 = vpop.xlane.xlu0 %1700
        %v1702 = vmul.f32 %v1701, 0.032258064
        %v1703 = vstv %s1691
        %v1704 = vmul.f32 %v1703, %v1697
        %v1705 = vrsqrt.pop %v1702
        %v1706 = vmul.f32 %v1702, %v1705
        %vm1707 = vcmp.eq.f32.partialorder %v1702, inf
        %v1708 = vsel %vm1707, %v1702, %v1706
        %vm1709 = vcmp.eq.f32.partialorder %v1702, 0.0
        %v1710 = vand.u32 %v1702, 2147483648
        %v1711 = vsel %vm1709, %v1710, %v1708
        %v1712 = vadd.f32 %v1711, 1e-06
        %v1713 = vrcp.pop %v1712
        %v1714 = vmul.f32 %v1704, %v1713
        %v1715 = vstv %s1692
        %v1716 = vadd.f32 %v1714, %v1715
        %v1717 = vpack.c.bf16 %v1716, %v1716
        %v1718 = vld [vmem:[%s4 + $0x8] sm:$0xf]
        %v1719 = vld [vmem:[%s4 + $0x14] sm:$0xf]
        %v1720 = vld [vmem:[%s4 + $0x20] sm:$0xf]
        %v1721 = vld [vmem:[%s4 + $0x2c] sm:$0xf]
        %v1722 = vld [vmem:[%s6] sm:$0x1]
        %v1724 = vlaneseq
        %v1725 = vshrl.u32 %v1724, 7
        %v1726 = vsub.s32 0, %v1725
        %v1727 = vrot.slane %v1722, %v1726
        %v1733 = vunpack.c.l.b16 %v1718
        %v1734 = vunpack.c.l.b16 %v1719
        %v1735 = vunpack.c.l.b16 %v1720
        %v1736 = vunpack.c.l.b16 %v1721
        %v1737 = vpack.c.b16 %v1734, %v1733
        %v1738 = vpack.c.b16 %v1736, %v1735
        %v1742 = vsel %vm452, %v1717, 0
        %1744 = vmatprep.subr.bf16.mxu0 0
        %1745 = vmatpush1.bf16.msra.mxu0 %v1737
        %1746 = vmatprep.subr.bf16.mxu0 0
        %1747 = vmatpush1.bf16.msra.mxu0 %v1738
        %1748 = vmatprep.subr.bf16.mxu0 0
        %1749 = vmatpush1.bf16.msra.mxu0 0
        %1750 = vmatprep.subr.bf16.mxu0 0
        %1751 = vmatpush1.bf16.msra.mxu0 0
        %1752 = vmatprep.subr.bf16.mxu0 0
        %1753 = vmatpush1.bf16.msra.mxu0 0
        %1754 = vmatprep.subr.bf16.mxu0 0
        %1755 = vmatpush1.bf16.msra.mxu0 0
        %1756 = vmatprep.subr.bf16.mxu0 0
        %1757 = vmatpush1.bf16.msra.mxu0 0
        %1758 = vmatprep.subr.bf16.mxu0 0
        %1759 = vmatpush1.bf16.msra.mxu0 0
        %1760 = vmatprep.subr.bf16.mxu0 0
        %1761 = vmatpush1.bf16.msra.mxu0 0
        %1762 = vmatprep.subr.bf16.mxu0 0
        %1763 = vmatpush1.bf16.msra.mxu0 0
        %1764 = vmatprep.subr.bf16.mxu0 0
        %1765 = vmatpush1.bf16.msra.mxu0 0
        %1766 = vmatprep.subr.bf16.mxu0 0
        %1767 = vmatpush1.bf16.msra.mxu0 0
        %1768 = vmatprep.subr.bf16.mxu0 0
        %1769 = vmatpush1.bf16.msra.mxu0 0
        %1770 = vmatprep.subr.bf16.mxu0 0
        %1771 = vmatpush1.bf16.msra.mxu0 0
        %1772 = vmatprep.subr.bf16.mxu0 0
        %1773 = vmatpush1.bf16.msra.mxu0 0
        %1774 = vmatprep.subr.bf16.mxu0 0
        %1775 = vmatpush1.bf16.msra.mxu0 0
        %1776 = vmatprep.mubr.bf16.mxu0 0
        %1777 = vmatmul.mubr.bf16.gmra.mrb[0].mxu0 %v1742
        %v1778 = vpop.f32.mrb[0].mxu0
        %v1779 = vadd.f32 %v1727, %v1778
        %v1780 = vpop.f32.mrb[0].mxu0
        %v1781 = vpop.f32.mrb[0].mxu0
        %v1782 = vpop.f32.mrb[0].mxu0
        %1783 = vdwg.mxu0
        %v1784 = vmax.f32 %v1779, 0.0
        %v1785 = vpack.c.bf16 %v1784, %v1784
        %v1786 = vld [vmem:[%s5] sm:$0xf]
        %v1787 = vld [vmem:[%s5 + $0x4] sm:$0xf]
        %v1788 = vld [vmem:[%s5 + $0x8] sm:$0xf]
        %v1789 = vld [vmem:[%s5 + $0xc] sm:$0xf]
        %v1790 = vld [vmem:[%s5 + $0x10] sm:$0xf]
        %v1791 = vld [vmem:[%s5 + $0x14] sm:$0xf]
        %v1792 = vld [vmem:[%s5 + $0x18] sm:$0xf]
        %v1793 = vld [vmem:[%s5 + $0x1c] sm:$0xf]
        %v1802 = vunpack.c.l.b16 %v1786
        %v1803 = vunpack.c.l.b16 %v1787
        %v1804 = vunpack.c.l.b16 %v1788
        %v1805 = vunpack.c.l.b16 %v1789
        %v1806 = vunpack.c.l.b16 %v1790
        %v1807 = vunpack.c.l.b16 %v1791
        %v1808 = vunpack.c.l.b16 %v1792
        %v1809 = vunpack.c.l.b16 %v1793
        %v1810 = vpack.c.b16 %v1803, %v1802
        %v1811 = vpack.c.b16 %v1805, %v1804
        %v1812 = vpack.c.b16 %v1807, %v1806
        %v1813 = vpack.c.b16 %v1809, %v1808
        %1818 = vrot.lane.b32.xlu0 %v1727, 64
        %v1819 = vpop.permute.xlu0 %1818
        %vm1821 = vcmask 523264
        %v1823 = vsel %vm1821, %v1785, 0
        %1825 = vmatprep.subr.bf16.mxu0 0
        %1826 = vmatpush1.bf16.msra.mxu0 %v1810
        %1827 = vmatprep.subr.bf16.mxu0 0
        %1828 = vmatpush1.bf16.msra.mxu0 %v1811
        %1829 = vmatprep.subr.bf16.mxu0 0
        %1830 = vmatpush1.bf16.msra.mxu0 %v1812
        %1831 = vmatprep.subr.bf16.mxu0 0
        %1832 = vmatpush1.bf16.msra.mxu0 %v1813
        %1833 = vmatprep.subr.bf16.mxu0 0
        %1834 = vmatpush1.bf16.msra.mxu0 0
        %1835 = vmatprep.subr.bf16.mxu0 0
        %1836 = vmatpush1.bf16.msra.mxu0 0
        %1837 = vmatprep.subr.bf16.mxu0 0
        %1838 = vmatpush1.bf16.msra.mxu0 0
        %1839 = vmatprep.subr.bf16.mxu0 0
        %1840 = vmatpush1.bf16.msra.mxu0 0
        %1841 = vmatprep.subr.bf16.mxu0 0
        %1842 = vmatpush1.bf16.msra.mxu0 0
        %1843 = vmatprep.subr.bf16.mxu0 0
        %1844 = vmatpush1.bf16.msra.mxu0 0
        %1845 = vmatprep.subr.bf16.mxu0 0
        %1846 = vmatpush1.bf16.msra.mxu0 0
        %1847 = vmatprep.subr.bf16.mxu0 0
        %1848 = vmatpush1.bf16.msra.mxu0 0
        %1849 = vmatprep.subr.bf16.mxu0 0
        %1850 = vmatpush1.bf16.msra.mxu0 0
        %1851 = vmatprep.subr.bf16.mxu0 0
        %1852 = vmatpush1.bf16.msra.mxu0 0
        %1853 = vmatprep.subr.bf16.mxu0 0
        %1854 = vmatpush1.bf16.msra.mxu0 0
        %1855 = vmatprep.subr.bf16.mxu0 0
        %1856 = vmatpush1.bf16.msra.mxu0 0
        %1857 = vmatprep.mubr.bf16.mxu0 0
        %1858 = vmatmul.mubr.bf16.gmra.mrb[0].mxu0 %v1823
        %v1859 = vpop.f32.mrb[0].mxu0
        %v1860 = vadd.f32 %v1819, %v1859
        %v1861 = vpop.f32.mrb[0].mxu0
        %v1862 = vpop.f32.mrb[0].mxu0
        %v1863 = vpop.f32.mrb[0].mxu0
        %1864 = vdwg.mxu0
        %v1865 = vadd.f32 %v1690, %v1860
        %1866 = vst.msk [vmem:[%s445] sm:$0xff] %vm452, %v1865
        %s1867 = sand.u32 %s228, 1
        %s1868 = scalar_lea.sflag [#allocation4], %s1867
        %s1869 = sand.u32 %s228, 1
        %s1870 = smul.addr %s1869, 8
        %s1871 = scalar_lea.vmem [#allocation12], %s1870
        // Predicated region
        $region73: #{tpu_custom_call.1} parent=51 // pred_check
          %p1872 = pneg %p238
        $region74: #{tpu_custom_call.1} parent=51 // pred_check_branch
          %1874 = sbr.rel (%p1872) target = $region76
        $region75: #{tpu_custom_call.1} parent=51 // pred_region
          %s1876 = ssub.s32 128, 128
          %1877 = vsyncadd %s1868, %s1876
          %s1878 = smul.addr %s32, 128
          %s1879 = scalar_lea.hbm %s8, %s1878
          %s1881 = sshll.u32 %s1871, 4
          %s1882 = int_to_ptr.vmem [resolvable:$true] %s1881
          %1884 = dma.vmem_to_hbm [thread:$0]  %s1882, 128, %s1879, %s1868
        $region76: #{tpu_custom_call.1} parent=51 // pred_fallthru
          _
      $region52: #{tpu_custom_call.1} parent=5 // pred_fallthru
        _
      %p1885 = scmp.le.s32.totalorder 2, %s27
      // Predicated region
      $region77: #{tpu_custom_call.1} parent=5 // pred_check
        %p1886 = pneg %p1885
      $region78: #{tpu_custom_call.1} parent=5 // pred_check_branch
        %1888 = sbr.rel (%p1886) target = $region80
      $region79: #{tpu_custom_call.1} parent=5 // pred_region
        %s1889 = ssub.s32 %s27, 2
        // Predicated region
        $region81: #{tpu_custom_call.1} parent=79 // pred_check
          %p1890 = pneg %p244
        $region82: #{tpu_custom_call.1} parent=79 // pred_check_branch
          %1892 = sbr.rel (%p1890) target = $region84
        $region83: #{tpu_custom_call.1} parent=79 // pred_region
          %s1893 = sand.u32 %s229, 1
          %s1894 = scalar_lea.sflag [#allocation4], %s1893
          %s1895 = sand.u32 %s229, 1
          %s1896 = smul.addr %s1895, 8
          %s1897 = scalar_lea.vmem [#allocation12], %s1896
          %1898 = dma.done %s1894, 128
        $region84: #{tpu_custom_call.1} parent=79 // pred_fallthru
          _
      $region80: #{tpu_custom_call.1} parent=5 // pred_fallthru
        _
    $region6: #{tpu_custom_call.1} parent=1 // loop_footer
      %s31 = sadd.s32 1, %s27
    $region7: #{tpu_custom_call.1} parent=1 // loop_footer_branch
      %26 = sbr.rel target = $region3
    $region8: #{tpu_custom_call.1} parent=1 // loop_exit
      _
    %1899 = vsyncpa [#allocation3], 1
    %s1900 = scalar_lea.sflag [#allocation3], 1
    %1901 = vsyncpa %s1900, 1
    %1902 = vsyncpa [#allocation7], 1
    %s1903 = scalar_lea.sflag [#allocation7], 1
    %1904 = vsyncpa %s1903, 1
    %1905 = vsyncpa [#allocation10], 1
    %s1906 = scalar_lea.sflag [#allocation10], 1
    %1907 = vsyncpa %s1906, 1
    %1908 = vsyncpa [#allocation4], 1
    %s1909 = scalar_lea.sflag [#allocation4], 1
    %1910 = vsyncpa %s1909, 1
    %1911 = vsyncpa [#allocation5], 1
    %s1912 = scalar_lea.sflag [#allocation5], 1
    %1913 = vsyncpa %s1912, 1

// kernel: tpu_custom_call.1
$region0: #{tpu_custom_call.1}
  #allocation0 [shape = 'u32[]', space=smem, size = 0x4, offset = 0x4, fixed_abs, tag = 'smem constant byte address 0x4 - core index']
  #allocation1 [shape = 'u32[144,128]{1,0:T(1,128)}', space=vmem, size = 0x12000, scoped, tag = 'internal scratch']
  %s0 = inlined_call_operand.hbm [shape: f32[2,8,32], index: 0, kind: input, shape index: {}]
  %s1 = inlined_call_operand.hbm [shape: bf16[2,16,32], index: 1, kind: input, shape index: {}]
  %s2 = inlined_call_operand.hbm [shape: bf16[2,8,8], index: 2, kind: input, shape index: {}]
  %s3 = inlined_call_operand.hbm [shape: bf16[2,8,16], index: 3, kind: input, shape index: {}]
  %s4 = inlined_call_operand.vmem [shape: bf16[32,320], index: 4, kind: input, shape index: {}]
  %s5 = inlined_call_operand.vmem [shape: bf16[64,32], index: 5, kind: input, shape index: {}]
  %s6 = inlined_call_operand.vmem [shape: f32[1,96], index: 6, kind: input, shape index: {}]
  %s7 = inlined_call_operand.vmem [shape: f32[6], index: 7, kind: input, shape index: {}]
  %s8 = inlined_call_operand.hbm [shape: f32[2,8,32], index: 8, kind: output, shape index: {}]
  %s9 = sld [smem:[#allocation0]]
  $region85: #{tpu_custom_call.1} parent=0
    _
  %s11 = ssub.s32 1, %s9
  %s12 = scalar_select 0, %s11, %s9
  $region1: #{tpu_custom_call.1} parent=0
    #allocation2 [shape = 'u8[8192]{0}', space=vmem, size = 0x2000, scoped, tag = 'input window, operand 0']
    #allocation3 [shape = 's32[2]{0}', space=sflag, size = 0x8, scoped, tag = 'scoped memory for tpu_custom_call.1']
    #allocation4 [shape = 's32[2]{0}', space=sflag, size = 0x8, scoped, tag = 'scoped memory for tpu_custom_call.1']
    #allocation5 [shape = 's32[2]{0}', space=sflag, size = 0x8, scoped, tag = 'scoped memory for tpu_custom_call.1']
    #allocation6 [shape = 'u8[8192]{0}', space=vmem, size = 0x2000, scoped, tag = 'input window, operand 1']
    #allocation7 [shape = 's32[2]{0}', space=sflag, size = 0x8, scoped, tag = 'scoped memory for tpu_custom_call.1']
    #allocation8 [shape = 'u8[4096]{0}', space=vmem, size = 0x1000, scoped, tag = 'input window, operand 2']
    #allocation9 [shape = 'u8[4096]{0}', space=vmem, size = 0x1000, scoped, tag = 'input window, operand 3']
    #allocation10 [shape = 's32[2]{0}', space=sflag, size = 0x8, scoped, tag = 'scoped memory for tpu_custom_call.1']
    #allocation11 [shape = 'u8[512]{0}', space=smem, size = 0x200, scoped, tag = 'input window, operand 7, single buffered']
    #allocation12 [shape = 'u8[8192]{0}', space=vmem, size = 0x2000, scoped, tag = 'output window, operand 0']
    %13 = vsyncpa [#allocation3], 0
    %s14 = scalar_lea.sflag [#allocation3], 1
    %15 = vsyncpa %s14, 0
    %16 = vsyncpa [#allocation7], 0
    %s17 = scalar_lea.sflag [#allocation7], 1
    %18 = vsyncpa %s17, 0
    %19 = vsyncpa [#allocation10], 0
    %s20 = scalar_lea.sflag [#allocation10], 1
    %21 = vsyncpa %s20, 0
    %22 = vsyncpa [#allocation5], 0
    %23 = vsyncpa [#allocation4], 0
    %s24 = scalar_lea.sflag [#allocation4], 1
    %25 = vsyncpa %s24, 0
    loop: start=0, step=1, limit=4
    $region2: #{tpu_custom_call.1} parent=1 // loop_pre_header
      _
    $region3: #{tpu_custom_call.1} parent=1 // loop_header
      %s27 = sphi 0, %s31
      %p28 = scmp.ge.s32.totalorder %s27, 4
      %s37 = sphi 0, %s39
      %s40 = sphi 0, %s37
      %s41 = sphi 0, %s40
      %s57 = sphi 0, %s41
      %s63 = sphi 0, %s65
      %s66 = sphi 0, %s63
      %s67 = sphi 0, %s66
      %s83 = sphi 0, %s67
      %s89 = sphi 0, %s91
      %s92 = sphi 0, %s89
      %s93 = sphi 0, %s92
      %s109 = sphi 0, %s93
      %s115 = sphi 0, %s117
      %s118 = sphi 0, %s115
      %s119 = sphi 0, %s118
      %s135 = sphi 0, %s119
      %s139 = sphi 0, %s139
      %s141 = sphi 0, %s139
      %s142 = sphi 0, %s141
      %s156 = sphi 0, %s142
      %s160 = sphi 0, %s160
      %s162 = sphi 0, %s160
      %s163 = sphi 0, %s162
      %s177 = sphi 0, %s163
      %s181 = sphi 0, %s181
      %s183 = sphi 0, %s181
      %s184 = sphi 0, %s183
      %s198 = sphi 0, %s184
      %s202 = sphi 0, %s202
      %s204 = sphi 0, %s202
      %s205 = sphi 0, %s204
      %s219 = sphi 0, %s205
      %s225 = sphi 0, %s227
      %s228 = sphi 0, %s225
      %s229 = sphi 0, %s228
      %s245 = sphi 0, %s229
    $region4: #{tpu_custom_call.1} parent=1 // loop_header_branch
      %30 = sbr.rel (%p28) target = $region8
    $region5: #{tpu_custom_call.1} parent=1 // loop_body
      %s32 = ssub.s32 %s27, 1
      %s33 = ssub.s32 %s27, 2
      %s34 = sadd.s32 %s27, 1
      %s35 = ssub.s32 %s27, %s34
      %p36 = scmp.eq.s32.totalorder %s35, 0
      %s38 = sadd.s32 %s37, 1
      %s39 = scalar_select %p36, %s37, %s38
      %p42 = pneg %p36
      %p43 = scmp.eq.s32.totalorder %s27, 1
      %p44 = por %p42, %p43
      %p45 = scmp.ne.s32.totalorder %s37, %s40
      %p46 = scmp.eq.s32.totalorder %s27, 0
      %p47 = por %p45, %p46
      %p48 = scmp.ne.s32.totalorder %s37, %s40
      %p49 = scmp.eq.s32.totalorder %s32, 1
      %p50 = por %p48, %p49
      %p51 = scmp.ne.s32.totalorder %s40, %s41
      %p52 = scmp.eq.s32.totalorder %s32, 0
      %p53 = por %p51, %p52
      %p54 = scmp.ne.s32.totalorder %s40, %s41
      %p55 = scmp.eq.s32.totalorder %s33, 1
      %p56 = por %p54, %p55
      %p58 = scmp.ne.s32.totalorder %s41, %s57
      %p59 = scmp.eq.s32.totalorder %s33, 0
      %p60 = por %p58, %p59
      %s61 = ssub.s32 %s27, %s34
      %p62 = scmp.eq.s32.totalorder %s61, 0
      %s64 = sadd.s32 %s63, 1
      %s65 = scalar_select %p62, %s63, %s64
      %p68 = pneg %p62
      %p69 = scmp.eq.s32.totalorder %s27, 1
      %p70 = por %p68, %p69
      %p71 = scmp.ne.s32.totalorder %s63, %s66
      %p72 = scmp.eq.s32.totalorder %s27, 0
      %p73 = por %p71, %p72
      %p74 = scmp.ne.s32.totalorder %s63, %s66
      %p75 = scmp.eq.s32.totalorder %s32, 1
      %p76 = por %p74, %p75
      %p77 = scmp.ne.s32.totalorder %s66, %s67
      %p78 = scmp.eq.s32.totalorder %s32, 0
      %p79 = por %p77, %p78
      %p80 = scmp.ne.s32.totalorder %s66, %s67
      %p81 = scmp.eq.s32.totalorder %s33, 1
      %p82 = por %p80, %p81
      %p84 = scmp.ne.s32.totalorder %s67, %s83
      %p85 = scmp.eq.s32.totalorder %s33, 0
      %p86 = por %p84, %p85
      %s87 = ssub.s32 %s27, %s34
      %p88 = scmp.eq.s32.totalorder %s87, 0
      %s90 = sadd.s32 %s89, 1
      %s91 = scalar_select %p88, %s89, %s90
      %p94 = pneg %p88
      %p95 = scmp.eq.s32.totalorder %s27, 1
      %p96 = por %p94, %p95
      %p97 = scmp.ne.s32.totalorder %s89, %s92
      %p98 = scmp.eq.s32.totalorder %s27, 0
      %p99 = por %p97, %p98
      %p100 = scmp.ne.s32.totalorder %s89, %s92
      %p101 = scmp.eq.s32.totalorder %s32, 1
      %p102 = por %p100, %p101
      %p103 = scmp.ne.s32.totalorder %s92, %s93
      %p104 = scmp.eq.s32.totalorder %s32, 0
      %p105 = por %p103, %p104
      %p106 = scmp.ne.s32.totalorder %s92, %s93
      %p107 = scmp.eq.s32.totalorder %s33, 1
      %p108 = por %p106, %p107
      %p110 = scmp.ne.s32.totalorder %s93, %s109
      %p111 = scmp.eq.s32.totalorder %s33, 0
      %p112 = por %p110, %p111
      %s113 = ssub.s32 %s27, %s34
      %p114 = scmp.eq.s32.totalorder %s113, 0
      %s116 = sadd.s32 %s115, 1
      %s117 = scalar_select %p114, %s115, %s116
      %p120 = pneg %p114
      %p121 = scmp.eq.s32.totalorder %s27, 1
      %p122 = por %p120, %p121
      %p123 = scmp.ne.s32.totalorder %s115, %s118
      %p124 = scmp.eq.s32.totalorder %s27, 0
      %p125 = por %p123, %p124
      %p126 = scmp.ne.s32.totalorder %s115, %s118
      %p127 = scmp.eq.s32.totalorder %s32, 1
      %p128 = por %p126, %p127
      %p129 = scmp.ne.s32.totalorder %s118, %s119
      %p130 = scmp.eq.s32.totalorder %s32, 0
      %p131 = por %p129, %p130
      %p132 = scmp.ne.s32.totalorder %s118, %s119
      %p133 = scmp.eq.s32.totalorder %s33, 1
      %p134 = por %p132, %p133
      %p136 = scmp.ne.s32.totalorder %s119, %s135
      %p137 = scmp.eq.s32.totalorder %s33, 0
      %p138 = por %p136, %p137
      %s140 = sadd.s32 %s139, 1
      %p143 = scmp.eq.s32.totalorder %s27, 1
      %p144 = scmp.ne.s32.totalorder %s139, %s141
      %p145 = scmp.eq.s32.totalorder %s27, 0
      %p146 = por %p144, %p145
      %p147 = scmp.ne.s32.totalorder %s139, %s141
      %p148 = scmp.eq.s32.totalorder %s32, 1
      %p149 = por %p147, %p148
      %p150 = scmp.ne.s32.totalorder %s141, %s142
      %p151 = scmp.eq.s32.totalorder %s32, 0
      %p152 = por %p150, %p151
      %p153 = scmp.ne.s32.totalorder %s141, %s142
      %p154 = scmp.eq.s32.totalorder %s33, 1
      %p155 = por %p153, %p154
      %p157 = scmp.ne.s32.totalorder %s142, %s156
      %p158 = scmp.eq.s32.totalorder %s33, 0
      %p159 = por %p157, %p158
      %s161 = sadd.s32 %s160, 1
      %p164 = scmp.eq.s32.totalorder %s27, 1
      %p165 = scmp.ne.s32.totalorder %s160, %s162
      %p166 = scmp.eq.s32.totalorder %s27, 0
      %p167 = por %p165, %p166
      %p168 = scmp.ne.s32.totalorder %s160, %s162
      %p169 = scmp.eq.s32.totalorder %s32, 1
      %p170 = por %p168, %p169
      %p171 = scmp.ne.s32.totalorder %s162, %s163
      %p172 = scmp.eq.s32.totalorder %s32, 0
      %p173 = por %p171, %p172
      %p174 = scmp.ne.s32.totalorder %s162, %s163
      %p175 = scmp.eq.s32.totalorder %s33, 1
      %p176 = por %p174, %p175
      %p178 = scmp.ne.s32.totalorder %s163, %s177
      %p179 = scmp.eq.s32.totalorder %s33, 0
      %p180 = por %p178, %p179
      %s182 = sadd.s32 %s181, 1
      %p185 = scmp.eq.s32.totalorder %s27, 1
      %p186 = scmp.ne.s32.totalorder %s181, %s183
      %p187 = scmp.eq.s32.totalorder %s27, 0
      %p188 = por %p186, %p187
      %p189 = scmp.ne.s32.totalorder %s181, %s183
      %p190 = scmp.eq.s32.totalorder %s32, 1
      %p191 = por %p189, %p190
      %p192 = scmp.ne.s32.totalorder %s183, %s184
      %p193 = scmp.eq.s32.totalorder %s32, 0
      %p194 = por %p192, %p193
      %p195 = scmp.ne.s32.totalorder %s183, %s184
      %p196 = scmp.eq.s32.totalorder %s33, 1
      %p197 = por %p195, %p196
      %p199 = scmp.ne.s32.totalorder %s184, %s198
      %p200 = scmp.eq.s32.totalorder %s33, 0
      %p201 = por %p199, %p200
      %s203 = sadd.s32 %s202, 1
      %p206 = scmp.eq.s32.totalorder %s27, 1
      %p207 = scmp.ne.s32.totalorder %s202, %s204
      %p208 = scmp.eq.s32.totalorder %s27, 0
      %p209 = por %p207, %p208
      %p210 = scmp.ne.s32.totalorder %s202, %s204
      %p211 = scmp.eq.s32.totalorder %s32, 1
      %p212 = por %p210, %p211
      %p213 = scmp.ne.s32.totalorder %s204, %s205
      %p214 = scmp.eq.s32.totalorder %s32, 0
      %p215 = por %p213, %p214
      %p216 = scmp.ne.s32.totalorder %s204, %s205
      %p217 = scmp.eq.s32.totalorder %s33, 1
      %p218 = por %p216, %p217
      %p220 = scmp.ne.s32.totalorder %s205, %s219
      %p221 = scmp.eq.s32.totalorder %s33, 0
      %p222 = por %p220, %p221
      %s223 = ssub.s32 %s27, %s34
      %p224 = scmp.eq.s32.totalorder %s223, 0
      %s226 = sadd.s32 %s225, 1
      %s227 = scalar_select %p224, %s225, %s226
      %p230 = pneg %p224
      %p231 = scmp.eq.s32.totalorder %s27, 1
      %p232 = por %p230, %p231
      %p233 = scmp.ne.s32.totalorder %s225, %s228
      %p234 = scmp.eq.s32.totalorder %s27, 0
      %p235 = por %p233, %p234
      %p236 = scmp.ne.s32.totalorder %s225, %s228
      %p237 = scmp.eq.s32.totalorder %s32, 1
      %p238 = por %p236, %p237
      %p239 = scmp.ne.s32.totalorder %s228, %s229
      %p240 = scmp.eq.s32.totalorder %s32, 0
      %p241 = por %p239, %p240
      %p242 = scmp.ne.s32.totalorder %s228, %s229
      %p243 = scmp.eq.s32.totalorder %s33, 1
      %p244 = por %p242, %p243
      %p246 = scmp.ne.s32.totalorder %s229, %s245
      %p247 = scmp.eq.s32.totalorder %s33, 0
      %p248 = por %p246, %p247
      %p249 = scmp.le.s32.totalorder 1, %s27
      %p250 = scmp.lt.s32.totalorder %s27, 3
      %p251 = pnand %p249, %p250
      %p252 = pneg %p251
      // Predicated region
      $region9: #{tpu_custom_call.1} parent=5 // pred_check
        _
      $region10: #{tpu_custom_call.1} parent=5 // pred_check_branch
        %254 = sbr.rel (%p251) target = $region12
      $region11: #{tpu_custom_call.1} parent=5 // pred_region
        %s255 = ssub.s32 %s27, 1
        // Predicated region
        $region13: #{tpu_custom_call.1} parent=11 // pred_check
          %p256 = pneg %p152
        $region14: #{tpu_custom_call.1} parent=11 // pred_check_branch
          %258 = sbr.rel (%p256) target = $region16
        $region15: #{tpu_custom_call.1} parent=11 // pred_region
          _
        $region16: #{tpu_custom_call.1} parent=11 // pred_fallthru
          _
        // Predicated region
        $region17: #{tpu_custom_call.1} parent=11 // pred_check
          %p259 = pneg %p173
        $region18: #{tpu_custom_call.1} parent=11 // pred_check_branch
          %261 = sbr.rel (%p259) target = $region20
        $region19: #{tpu_custom_call.1} parent=11 // pred_region
          _
        $region20: #{tpu_custom_call.1} parent=11 // pred_fallthru
          _
        // Predicated region
        $region21: #{tpu_custom_call.1} parent=11 // pred_check
          %p262 = pneg %p194
        $region22: #{tpu_custom_call.1} parent=11 // pred_check_branch
          %264 = sbr.rel (%p262) target = $region24
        $region23: #{tpu_custom_call.1} parent=11 // pred_region
          _
        $region24: #{tpu_custom_call.1} parent=11 // pred_fallthru
          _
        // Predicated region
        $region25: #{tpu_custom_call.1} parent=11 // pred_check
          %p265 = pneg %p215
        $region26: #{tpu_custom_call.1} parent=11 // pred_check_branch
          %267 = sbr.rel (%p265) target = $region28
        $region27: #{tpu_custom_call.1} parent=11 // pred_region
          %s269 = ssub.s32 16, 16
          %270 = vsyncadd [#allocation5], %s269
          %s272 = sshll.u32 %s7, 4
          %s273 = int_to_ptr.vmem [resolvable:$true] %s272
          %275 = dma.vmem_to_smem %s273, 16, [#allocation11], [#allocation5]
        $region28: #{tpu_custom_call.1} parent=11 // pred_fallthru
          _
      $region12: #{tpu_custom_call.1} parent=5 // pred_fallthru
        _
      %p276 = scmp.lt.s32.totalorder %s27, 2
      // Predicated region
      $region29: #{tpu_custom_call.1} parent=5 // pred_check
        %p277 = pneg %p276
      $region30: #{tpu_custom_call.1} parent=5 // pred_check_branch
        %279 = sbr.rel (%p277) target = $region32
      $region31: #{tpu_custom_call.1} parent=5 // pred_region
        // Predicated region
        $region33: #{tpu_custom_call.1} parent=31 // pred_check
          %p280 = pneg %p47
        $region34: #{tpu_custom_call.1} parent=31 // pred_check_branch
          %282 = sbr.rel (%p280) target = $region36
        $region35: #{tpu_custom_call.1} parent=31 // pred_region
          %s283 = sand.u32 %s37, 1
          %s284 = scalar_lea.sflag [#allocation3], %s283
          %s285 = sand.u32 %s37, 1
          %s286 = smul.addr %s285, 8
          %s287 = scalar_lea.vmem [#allocation2], %s286
          %s289 = ssub.s32 128, 128
          %290 = vsyncadd %s284, %s289
          %s291 = smul.addr %s27, 128
          %s292 = scalar_lea.hbm %s0, %s291
          %s294 = sshll.u32 %s287, 4
          %s295 = int_to_ptr.vmem [resolvable:$true] %s294
          %297 = dma.hbm_to_vmem [thread:$0]  %s292, 128, %s295, %s284
        $region36: #{tpu_custom_call.1} parent=31 // pred_fallthru
          _
        // Predicated region
        $region37: #{tpu_custom_call.1} parent=31 // pred_check
          %p298 = pneg %p73
        $region38: #{tpu_custom_call.1} parent=31 // pred_check_branch
          %300 = sbr.rel (%p298) target = $region40
        $region39: #{tpu_custom_call.1} parent=31 // pred_region
          %s301 = sand.u32 %s27, 1
          %s302 = scalar_lea.sflag [#allocation7], %s301
          %s303 = sand.u32 %s63, 1
          %s304 = smul.addr %s303, 8
          %s305 = scalar_lea.vmem [#allocation6], %s304
          %s307 = ssub.s32 128, 128
          %308 = vsyncadd %s302, %s307
          %s309 = smul.addr %s27, 2
          %s310 = smul.addr %s309, 64
          %s311 = scalar_lea.hbm %s1, %s310
          %s312 = sshll.u32 %s305, 4
          %s313 = int_to_ptr.vmem [resolvable:$true] %s312
          %318 = dma.hbm_to_vmem [thread:$0]  %s311, 128, %s313, %s302, 64, 64, 4
        $region40: #{tpu_custom_call.1} parent=31 // pred_fallthru
          _
        // Predicated region
        $region41: #{tpu_custom_call.1} parent=31 // pred_check
          %p319 = pneg %p99
        $region42: #{tpu_custom_call.1} parent=31 // pred_check_branch
          %321 = sbr.rel (%p319) target = $region44
        $region43: #{tpu_custom_call.1} parent=31 // pred_region
          %s322 = sand.u32 %s27, 1
          %s323 = scalar_lea.sflag [#allocation7], %s322
          %s324 = sand.u32 %s89, 1
          %s325 = smul.addr %s324, 4
          %s326 = scalar_lea.vmem [#allocation8], %s325
          %s328 = ssub.s32 64, 64
          %329 = vsyncadd %s323, %s328
          %s330 = smul.addr %s27, 64
          %s331 = scalar_lea.hbm %s2, %s330
          %s333 = sshll.u32 %s326, 4
          %s334 = int_to_ptr.vmem [resolvable:$true] %s333
          %336 = dma.hbm_to_vmem [thread:$0]  %s331, 64, %s334, %s323
        $region44: #{tpu_custom_call.1} parent=31 // pred_fallthru
          _
        // Predicated region
        $region45: #{tpu_custom_call.1} parent=31 // pred_check
          %p337 = pneg %p125
        $region46: #{tpu_custom_call.1} parent=31 // pred_check_branch
          %339 = sbr.rel (%p337) target = $region48
        $region47: #{tpu_custom_call.1} parent=31 // pred_region
          %s340 = sand.u32 %s115, 1
          %s341 = scalar_lea.sflag [#allocation10], %s340
          %s342 = sand.u32 %s115, 1
          %s343 = smul.addr %s342, 4
          %s344 = scalar_lea.vmem [#allocation9], %s343
          %s346 = ssub.s32 64, 64
          %347 = vsyncadd %s341, %s346
          %s348 = smul.addr %s27, 64
          %s349 = scalar_lea.hbm %s3, %s348
          %s351 = sshll.u32 %s344, 4
          %s352 = int_to_ptr.vmem [resolvable:$true] %s351
          %354 = dma.hbm_to_vmem [thread:$0]  %s349, 64, %s352, %s341
        $region48: #{tpu_custom_call.1} parent=31 // pred_fallthru
          _
      $region32: #{tpu_custom_call.1} parent=5 // pred_fallthru
        _
      %p355 = scmp.le.s32.totalorder 1, %s27
      %p356 = scmp.lt.s32.totalorder %s27, 3
      %p357 = pnand %p355, %p356
      %p358 = pneg %p357
      // Predicated region
      $region49: #{tpu_custom_call.1} parent=5 // pred_check
        _
      $region50: #{tpu_custom_call.1} parent=5 // pred_check_branch
        %360 = sbr.rel (%p357) target = $region52
      $region51: #{tpu_custom_call.1} parent=5 // pred_region
        %s361 = ssub.s32 %s27, 1
        %s362 = sand.u32 %s40, 1
        %s363 = scalar_lea.sflag [#allocation3], %s362
        %s364 = sand.u32 %s40, 1
        %s365 = smul.addr %s364, 8
        %s366 = scalar_lea.vmem [#allocation2], %s365
        // Predicated region
        $region53: #{tpu_custom_call.1} parent=51 // pred_check
          %p367 = pneg %p53
        $region54: #{tpu_custom_call.1} parent=51 // pred_check_branch
          %369 = sbr.rel (%p367) target = $region56
        $region55: #{tpu_custom_call.1} parent=51 // pred_region
          %370 = dma.done %s363, 128
        $region56: #{tpu_custom_call.1} parent=51 // pred_fallthru
          _
        %s371 = sand.u32 %s32, 1
        %s372 = scalar_lea.sflag [#allocation7], %s371
        %s373 = sand.u32 %s66, 1
        %s374 = smul.addr %s373, 8
        %s375 = scalar_lea.vmem [#allocation6], %s374
        // Predicated region
        $region57: #{tpu_custom_call.1} parent=51 // pred_check
          %p376 = pneg %p79
        $region58: #{tpu_custom_call.1} parent=51 // pred_check_branch
          %378 = sbr.rel (%p376) target = $region60
        $region59: #{tpu_custom_call.1} parent=51 // pred_region
          %379 = dma.done %s372, 128
        $region60: #{tpu_custom_call.1} parent=51 // pred_fallthru
          _
        %s380 = sand.u32 %s32, 1
        %s381 = scalar_lea.sflag [#allocation7], %s380
        %s382 = sand.u32 %s92, 1
        %s383 = smul.addr %s382, 4
        %s384 = scalar_lea.vmem [#allocation8], %s383
        // Predicated region
        $region61: #{tpu_custom_call.1} parent=51 // pred_check
          %p385 = pneg %p105
        $region62: #{tpu_custom_call.1} parent=51 // pred_check_branch
          %387 = sbr.rel (%p385) target = $region64
        $region63: #{tpu_custom_call.1} parent=51 // pred_region
          %388 = dma.done %s381, 64
        $region64: #{tpu_custom_call.1} parent=51 // pred_fallthru
          _
        %s389 = sand.u32 %s118, 1
        %s390 = scalar_lea.sflag [#allocation10], %s389
        %s391 = sand.u32 %s118, 1
        %s392 = smul.addr %s391, 4
        %s393 = scalar_lea.vmem [#allocation9], %s392
        // Predicated region
        $region65: #{tpu_custom_call.1} parent=51 // pred_check
          %p394 = pneg %p131
        $region66: #{tpu_custom_call.1} parent=51 // pred_check_branch
          %396 = sbr.rel (%p394) target = $region68
        $region67: #{tpu_custom_call.1} parent=51 // pred_region
          %397 = dma.done %s390, 64
        $region68: #{tpu_custom_call.1} parent=51 // pred_fallthru
          _
        // Predicated region
        $region69: #{tpu_custom_call.1} parent=51 // pred_check
          %p398 = pneg %p215
        $region70: #{tpu_custom_call.1} parent=51 // pred_check_branch
          %400 = sbr.rel (%p398) target = $region72
        $region71: #{tpu_custom_call.1} parent=51 // pred_region
          %401 = dma.done [#allocation5], 16
        $region72: #{tpu_custom_call.1} parent=51 // pred_fallthru
          _
        %402 = sfence
        %s403 = sand.u32 %s40, 1
        %s404 = scalar_lea.sflag [#allocation3], %s403
        %s405 = sand.u32 %s40, 1
        %s406 = smul.addr %s405, 8
        %s407 = scalar_lea.vmem [#allocation2], %s406
        %p408 = pneg %p53
        %p409 = pneg %p50
        %s410 = sand.u32 %s32, 1
        %s411 = scalar_lea.sflag [#allocation7], %s410
        %s412 = sand.u32 %s66, 1
        %s413 = smul.addr %s412, 8
        %s414 = scalar_lea.vmem [#allocation6], %s413
        %p415 = pneg %p79
        %p416 = pneg %p76
        %s417 = sand.u32 %s32, 1
        %s418 = scalar_lea.sflag [#allocation7], %s417
        %s419 = sand.u32 %s92, 1
        %s420 = smul.addr %s419, 4
        %s421 = scalar_lea.vmem [#allocation8], %s420
        %p422 = pneg %p105
        %p423 = pneg %p102
        %s424 = sand.u32 %s118, 1
        %s425 = scalar_lea.sflag [#allocation10], %s424
        %s426 = sand.u32 %s118, 1
        %s427 = smul.addr %s426, 4
        %s428 = scalar_lea.vmem [#allocation9], %s427
        %p429 = pneg %p131
        %p430 = pneg %p128
        %p431 = pneg %p152
        %p432 = pneg %p149
        %p433 = pneg %p173
        %p434 = pneg %p170
        %p435 = pneg %p194
        %p436 = pneg %p191
        %p437 = pneg %p215
        %p438 = pneg %p212
        %p439 = pneg %p241
        %p440 = pneg %p238
        %s441 = sand.u32 %s228, 1
        %s442 = scalar_lea.sflag [#allocation4], %s441
        %s443 = sand.u32 %s228, 1
        %s444 = smul.addr %s443, 8
        %s445 = scalar_lea.vmem [#allocation12], %s444
        %v447 = vld [vmem:[%s366] sm:$0xff]
        %v448 = vld [vmem:[%s375] sm:$0xf]
        %v449 = vld [vmem:[%s375 + $0x4] sm:$0xf]
        %s450 = sld [smem:[#allocation11]]
        %s451 = sld [smem:[#allocation11 + $0x1]]
        %vm452 = vcmask 261120
        %v453 = vsel %vm452, %v447, 0.0
        %454 = vadd.xlane.f32.xlu0 %v453
        %v455 = vpop.xlane.xlu0 %454
        %v456 = vrcp.pop 32.0
        %v457 = vmul.f32 %v455, %v456
        %v458 = vsub.f32 %v447, %v457
        %v459 = vmul.f32 %v458, %v458
        %v460 = vsel %vm452, %v459, 0.0
        %461 = vadd.xlane.f32.xlu0 %v460
        %v462 = vpop.xlane.xlu0 %461
        %v463 = vmul.f32 %v462, 0.032258064
        %v464 = vstv %s450
        %v465 = vmul.f32 %v464, %v458
        %v466 = vrsqrt.pop %v463
        %v467 = vmul.f32 %v463, %v466
        %vm468 = vcmp.eq.f32.partialorder %v463, inf
        %v469 = vsel %vm468, %v463, %v467
        %vm470 = vcmp.eq.f32.partialorder %v463, 0.0
        %v471 = vand.u32 %v463, 2147483648
        %v472 = vsel %vm470, %v471, %v469
        %v473 = vadd.f32 %v472, 1e-06
        %v474 = vrcp.pop %v473
        %v475 = vmul.f32 %v465, %v474
        %v476 = vstv %s451
        %v477 = vadd.f32 %v475, %v476
        %v478 = vpack.c.bf16 %v477, %v477
        %v479 = vld [vmem:[%s4] sm:$0xf]
        %v480 = vld [vmem:[%s4 + $0xc] sm:$0xf]
        %v481 = vld [vmem:[%s4 + $0x18] sm:$0xf]
        %v482 = vld [vmem:[%s4 + $0x24] sm:$0xf]
        %v487 = vunpack.c.l.b16 %v479
        %v488 = vunpack.c.l.b16 %v480
        %v489 = vunpack.c.l.b16 %v481
        %v490 = vunpack.c.l.b16 %v482
        %v491 = vpack.c.b16 %v488, %v487
        %v492 = vpack.c.b16 %v490, %v489
        %v496 = vsel %vm452, %v478, 0
        %498 = vmatprep.subr.bf16.mxu0 0
        %499 = vmatpush1.bf16.msra.mxu0 %v491
        %500 = vmatprep.subr.bf16.mxu0 0
        %501 = vmatpush1.bf16.msra.mxu0 %v492
        %502 = vmatprep.subr.bf16.mxu0 0
        %503 = vmatpush1.bf16.msra.mxu0 0
        %504 = vmatprep.subr.bf16.mxu0 0
        %505 = vmatpush1.bf16.msra.mxu0 0
        %506 = vmatprep.subr.bf16.mxu0 0
        %507 = vmatpush1.bf16.msra.mxu0 0
        %508 = vmatprep.subr.bf16.mxu0 0
        %509 = vmatpush1.bf16.msra.mxu0 0
        %510 = vmatprep.subr.bf16.mxu0 0
        %511 = vmatpush1.bf16.msra.mxu0 0
        %512 = vmatprep.subr.bf16.mxu0 0
        %513 = vmatpush1.bf16.msra.mxu0 0
        %514 = vmatprep.subr.bf16.mxu0 0
        %515 = vmatpush1.bf16.msra.mxu0 0
        %516 = vmatprep.subr.bf16.mxu0 0
        %517 = vmatpush1.bf16.msra.mxu0 0
        %518 = vmatprep.subr.bf16.mxu0 0
        %519 = vmatpush1.bf16.msra.mxu0 0
        %520 = vmatprep.subr.bf16.mxu0 0
        %521 = vmatpush1.bf16.msra.mxu0 0
        %522 = vmatprep.subr.bf16.mxu0 0
        %523 = vmatpush1.bf16.msra.mxu0 0
        %524 = vmatprep.subr.bf16.mxu0 0
        %525 = vmatpush1.bf16.msra.mxu0 0
        %526 = vmatprep.subr.bf16.mxu0 0
        %527 = vmatpush1.bf16.msra.mxu0 0
        %528 = vmatprep.subr.bf16.mxu0 0
        %529 = vmatpush1.bf16.msra.mxu0 0
        %530 = vmatprep.mubr.bf16.mxu0 0
        %531 = vmatmul.mubr.bf16.gmra.mrb[0].mxu0 %v496
        %v532 = vpop.f32.mrb[0].mxu0
        %v533 = vadd.f32 0.0, %v532
        %v534 = vpop.f32.mrb[0].mxu0
        %v535 = vpop.f32.mrb[0].mxu0
        %v536 = vpop.f32.mrb[0].mxu0
        %537 = vdwg.mxu0
        %v538 = vpack.c.bf16 %v533, %v533
        %540 = vrot.lane.b32.xlu0 %v538, 120
        %v541 = vpop.permute.xlu0 %540
        %542 = vrot.lane.b32.xlu0 %v538, 112
        %v543 = vpop.permute.xlu0 %542
        %544 = vrot.lane.b32.xlu0 %v538, 104
        %v545 = vpop.permute.xlu0 %544
        %546 = vrot.lane.b32.xlu0 %v538, 96
        %v547 = vpop.permute.xlu0 %546
        %548 = vrot.lane.b32.xlu0 %v538, 88
        %v549 = vpop.permute.xlu0 %548
        %550 = vrot.lane.b32.xlu0 %v538, 80
        %v551 = vpop.permute.xlu0 %550
        %552 = vrot.lane.b32.xlu0 %v538, 72
        %v553 = vpop.permute.xlu0 %552
        %554 = vrot.lane.b32.xlu0 %v538, 64
        %v555 = vpop.permute.xlu0 %554
        %556 = vrot.lane.b32.xlu0 %v538, 56
        %v557 = vpop.permute.xlu0 %556
        %558 = vrot.lane.b32.xlu0 %v538, 48
        %v559 = vpop.permute.xlu0 %558
        %560 = vrot.lane.b32.xlu0 %v538, 40
        %v561 = vpop.permute.xlu0 %560
        %v562 = vld [vmem:[%s384] sm:$0xf]
        %v563 = vld [vmem:[%s4 + $0x4] sm:$0xf]
        %v564 = vld [vmem:[%s4 + $0x10] sm:$0xf]
        %v565 = vld [vmem:[%s4 + $0x1c] sm:$0xf]
        %v566 = vld [vmem:[%s4 + $0x28] sm:$0xf]
        %v567 = vunpack.c.l.bf16 %v562
        %vm568 = vcmask 64512
        %v570 = vsel %vm568, %v538, 0
        %v573 = vsel %vm568, %v547, 0
        %575 = vmatprep.subr.bf16.mxu0 0
        %576 = vmatpush1.bf16.xpose.msra.mxu0 %v573
        %577 = vmatprep.subr.bf16.mxu0 0
        %578 = vmatpush1.bf16.xpose.msra.mxu0 0
        %579 = vmatprep.subr.bf16.mxu0 0
        %580 = vmatpush1.bf16.xpose.msra.mxu0 0
        %581 = vmatprep.subr.bf16.mxu0 0
        %582 = vmatpush1.bf16.xpose.msra.mxu0 0
        %583 = vmatprep.subr.bf16.mxu0 0
        %584 = vmatpush1.bf16.xpose.msra.mxu0 0
        %585 = vmatprep.subr.bf16.mxu0 0
        %586 = vmatpush1.bf16.xpose.msra.mxu0 0
        %587 = vmatprep.subr.bf16.mxu0 0
        %588 = vmatpush1.bf16.xpose.msra.mxu0 0
        %589 = vmatprep.subr.bf16.mxu0 0
        %590 = vmatpush1.bf16.xpose.msra.mxu0 0
        %591 = vmatprep.subr.bf16.mxu0 0
        %592 = vmatpush1.bf16.xpose.msra.mxu0 0
        %593 = vmatprep.subr.bf16.mxu0 0
        %594 = vmatpush1.bf16.xpose.msra.mxu0 0
        %595 = vmatprep.subr.bf16.mxu0 0
        %596 = vmatpush1.bf16.xpose.msra.mxu0 0
        %597 = vmatprep.subr.bf16.mxu0 0
        %598 = vmatpush1.bf16.xpose.msra.mxu0 0
        %599 = vmatprep.subr.bf16.mxu0 0
        %600 = vmatpush1.bf16.xpose.msra.mxu0 0
        %601 = vmatprep.subr.bf16.mxu0 0
        %602 = vmatpush1.bf16.xpose.msra.mxu0 0
        %603 = vmatprep.subr.bf16.mxu0 0
        %604 = vmatpush1.bf16.xpose.msra.mxu0 0
        %605 = vmatprep.subr.bf16.mxu0 0
        %606 = vmatpush1.bf16.xpose.msra.mxu0 0
        %607 = vmatprep.mubr.bf16.mxu0 0
        %608 = vmatmul.mubr.bf16.gmra.mrb[0].mxu0 %v570
        %v609 = vpop.f32.mrb[0].mxu0
        %v610 = vadd.f32 %v567, %v609
        %v611 = vpop.f32.mrb[0].mxu0
        %v612 = vpop.f32.mrb[0].mxu0
        %v613 = vpop.f32.mrb[0].mxu0
        %614 = vdwg.mxu0
        %v616 = vsel %vm568, %v541, 0
        %v619 = vsel %vm568, %v549, 0
        %621 = vmatprep.subr.bf16.mxu0 0
        %622 = vmatpush1.bf16.xpose.msra.mxu0 %v619
        %623 = vmatprep.subr.bf16.mxu0 0
        %624 = vmatpush1.bf16.xpose.msra.mxu0 0
        %625 = vmatprep.subr.bf16.mxu0 0
        %626 = vmatpush1.bf16.xpose.msra.mxu0 0
        %627 = vmatprep.subr.bf16.mxu0 0
        %628 = vmatpush1.bf16.xpose.msra.mxu0 0
        %629 = vmatprep.subr.bf16.mxu0 0
        %630 = vmatpush1.bf16.xpose.msra.mxu0 0
        %631 = vmatprep.subr.bf16.mxu0 0
        %632 = vmatpush1.bf16.xpose.msra.mxu0 0
        %633 = vmatprep.subr.bf16.mxu0 0
        %634 = vmatpush1.bf16.xpose.msra.mxu0 0
        %635 = vmatprep.subr.bf16.mxu0 0
        %636 = vmatpush1.bf16.xpose.msra.mxu0 0
        %637 = vmatprep.subr.bf16.mxu0 0
        %638 = vmatpush1.bf16.xpose.msra.mxu0 0
        %639 = vmatprep.subr.bf16.mxu0 0
        %640 = vmatpush1.bf16.xpose.msra.mxu0 0
        %641 = vmatprep.subr.bf16.mxu0 0
        %642 = vmatpush1.bf16.xpose.msra.mxu0 0
        %643 = vmatprep.subr.bf16.mxu0 0
        %644 = vmatpush1.bf16.xpose.msra.mxu0 0
        %645 = vmatprep.subr.bf16.mxu0 0
        %646 = vmatpush1.bf16.xpose.msra.mxu0 0
        %647 = vmatprep.subr.bf16.mxu0 0
        %648 = vmatpush1.bf16.xpose.msra.mxu0 0
        %649 = vmatprep.subr.bf16.mxu0 0
        %650 = vmatpush1.bf16.xpose.msra.mxu0 0
        %651 = vmatprep.subr.bf16.mxu0 0
        %652 = vmatpush1.bf16.xpose.msra.mxu0 0
        %653 = vmatprep.mubr.bf16.mxu0 0
        %654 = vmatmul.mubr.bf16.gmra.mrb[0].mxu0 %v616
        %v655 = vpop.f32.mrb[0].mxu0
        %v656 = vadd.f32 %v567, %v655
        %v657 = vpop.f32.mrb[0].mxu0
        %v658 = vpop.f32.mrb[0].mxu0
        %v659 = vpop.f32.mrb[0].mxu0
        %660 = vdwg.mxu0
        %v662 = vsel %vm568, %v543, 0
        %v665 = vsel %vm568, %v551, 0
        %667 = vmatprep.subr.bf16.mxu0 0
        %668 = vmatpush1.bf16.xpose.msra.mxu0 %v665
        %669 = vmatprep.subr.bf16.mxu0 0
        %670 = vmatpush1.bf16.xpose.msra.mxu0 0
        %671 = vmatprep.subr.bf16.mxu0 0
        %672 = vmatpush1.bf16.xpose.msra.mxu0 0
        %673 = vmatprep.subr.bf16.mxu0 0
        %674 = vmatpush1.bf16.xpose.msra.mxu0 0
        %675 = vmatprep.subr.bf16.mxu0 0
        %676 = vmatpush1.bf16.xpose.msra.mxu0 0
        %677 = vmatprep.subr.bf16.mxu0 0
        %678 = vmatpush1.bf16.xpose.msra.mxu0 0
        %679 = vmatprep.subr.bf16.mxu0 0
        %680 = vmatpush1.bf16.xpose.msra.mxu0 0
        %681 = vmatprep.subr.bf16.mxu0 0
        %682 = vmatpush1.bf16.xpose.msra.mxu0 0
        %683 = vmatprep.subr.bf16.mxu0 0
        %684 = vmatpush1.bf16.xpose.msra.mxu0 0
        %685 = vmatprep.subr.bf16.mxu0 0
        %686 = vmatpush1.bf16.xpose.msra.mxu0 0
        %687 = vmatprep.subr.bf16.mxu0 0
        %688 = vmatpush1.bf16.xpose.msra.mxu0 0
        %689 = vmatprep.subr.bf16.mxu0 0
        %690 = vmatpush1.bf16.xpose.msra.mxu0 0
        %691 = vmatprep.subr.bf16.mxu0 0
        %692 = vmatpush1.bf16.xpose.msra.mxu0 0
        %693 = vmatprep.subr.bf16.mxu0 0
        %694 = vmatpush1.bf16.xpose.msra.mxu0 0
        %695 = vmatprep.subr.bf16.mxu0 0
        %696 = vmatpush1.bf16.xpose.msra.mxu0 0
        %697 = vmatprep.subr.bf16.mxu0 0
        %698 = vmatpush1.bf16.xpose.msra.mxu0 0
        %699 = vmatprep.mubr.bf16.mxu0 0
        %700 = vmatmul.mubr.bf16.gmra.mrb[0].mxu0 %v662
        %v701 = vpop.f32.mrb[0].mxu0
        %v702 = vadd.f32 %v567, %v701
        %v703 = vpop.f32.mrb[0].mxu0
        %v704 = vpop.f32.mrb[0].mxu0
        %v705 = vpop.f32.mrb[0].mxu0
        %706 = vdwg.mxu0
        %v708 = vsel %vm568, %v545, 0
        %v711 = vsel %vm568, %v553, 0
        %713 = vmatprep.subr.bf16.mxu0 0
        %714 = vmatpush1.bf16.xpose.msra.mxu0 %v711
        %715 = vmatprep.subr.bf16.mxu0 0
        %716 = vmatpush1.bf16.xpose.msra.mxu0 0
        %717 = vmatprep.subr.bf16.mxu0 0
        %718 = vmatpush1.bf16.xpose.msra.mxu0 0
        %719 = vmatprep.subr.bf16.mxu0 0
        %720 = vmatpush1.bf16.xpose.msra.mxu0 0
        %721 = vmatprep.subr.bf16.mxu0 0
        %722 = vmatpush1.bf16.xpose.msra.mxu0 0
        %723 = vmatprep.subr.bf16.mxu0 0
        %724 = vmatpush1.bf16.xpose.msra.mxu0 0
        %725 = vmatprep.subr.bf16.mxu0 0
        %726 = vmatpush1.bf16.xpose.msra.mxu0 0
        %727 = vmatprep.subr.bf16.mxu0 0
        %728 = vmatpush1.bf16.xpose.msra.mxu0 0
        %729 = vmatprep.subr.bf16.mxu0 0
        %730 = vmatpush1.bf16.xpose.msra.mxu0 0
        %731 = vmatprep.subr.bf16.mxu0 0
        %732 = vmatpush1.bf16.xpose.msra.mxu0 0
        %733 = vmatprep.subr.bf16.mxu0 0
        %734 = vmatpush1.bf16.xpose.msra.mxu0 0
        %735 = vmatprep.subr.bf16.mxu0 0
        %736 = vmatpush1.bf16.xpose.msra.mxu0 0
        %737 = vmatprep.subr.bf16.mxu0 0
        %738 = vmatpush1.bf16.xpose.msra.mxu0 0
        %739 = vmatprep.subr.bf16.mxu0 0
        %740 = vmatpush1.bf16.xpose.msra.mxu0 0
        %741 = vmatprep.subr.bf16.mxu0 0
        %742 = vmatpush1.bf16.xpose.msra.mxu0 0
        %743 = vmatprep.subr.bf16.mxu0 0
        %744 = vmatpush1.bf16.xpose.msra.mxu0 0
        %745 = vmatprep.mubr.bf16.mxu0 0
        %746 = vmatmul.mubr.bf16.gmra.mrb[0].mxu0 %v708
        %v747 = vpop.f32.mrb[0].mxu0
        %v748 = vadd.f32 %v567, %v747
        %v749 = vpop.f32.mrb[0].mxu0
        %v750 = vpop.f32.mrb[0].mxu0
        %v751 = vpop.f32.mrb[0].mxu0
        %752 = vdwg.mxu0
        %v753 = vsel %vm568, %v610, -inf
        %754 = vmax.xlane.f32.xlu0 %v753
        %v755 = vpop.xlane.xlu0 %754
        %v756 = vsel %vm568, %v656, -inf
        %757 = vmax.xlane.f32.xlu0 %v756
        %v758 = vpop.xlane.xlu0 %757
        %v759 = vsel %vm568, %v702, -inf
        %760 = vmax.xlane.f32.xlu0 %v759
        %v761 = vpop.xlane.xlu0 %760
        %v762 = vsel %vm568, %v748, -inf
        %763 = vmax.xlane.f32.xlu0 %v762
        %v764 = vpop.xlane.xlu0 %763
        %v765 = vsub.f32 %v610, %v755
        %v766 = vsub.f32 %v656, %v758
        %v767 = vsub.f32 %v702, %v761
        %v768 = vsub.f32 %v748, %v764
        %v769 = vmul.f32 %v765, 1.442695
        %v770 = vpow.pop %v769
        %v771 = vmul.f32 %v766, 1.442695
        %v772 = vpow.pop %v771
        %v773 = vmul.f32 %v767, 1.442695
        %v774 = vpow.pop %v773
        %v775 = vmul.f32 %v768, 1.442695
        %v776 = vpow.pop %v775
        %v777 = vsel %vm568, %v770, 0.0
        %778 = vadd.xlane.f32.xlu0 %v777
        %v779 = vpop.xlane.xlu0 %778
        %v780 = vsel %vm568, %v772, 0.0
        %781 = vadd.xlane.f32.xlu0 %v780
        %v782 = vpop.xlane.xlu0 %781
        %v783 = vsel %vm568, %v774, 0.0
        %784 = vadd.xlane.f32.xlu0 %v783
        %v785 = vpop.xlane.xlu0 %784
        %v786 = vsel %vm568, %v776, 0.0
        %787 = vadd.xlane.f32.xlu0 %v786
        %v788 = vpop.xlane.xlu0 %787
        %v789 = vrcp.pop %v779
        %v790 = vrcp.pop %v782
        %v791 = vrcp.pop %v785
        %v792 = vrcp.pop %v788
        %v793 = vmul.f32 %v770, %v789
        %v794 = vmul.f32 %v772, %v790
        %v795 = vmul.f32 %v774, %v791
        %v796 = vmul.f32 %v776, %v792
        %v797 = vpack.c.bf16 %v793, %v793
        %v798 = vpack.c.bf16 %v794, %v794
        %v799 = vpack.c.bf16 %v795, %v795
        %v800 = vpack.c.bf16 %v796, %v796
        %v802 = vsel %vm568, %v797, 0
        %vm804 = vcmask 1043456
        %v806 = vsel %vm804, %v555, 0
        %808 = vmatprep.subr.bf16.mxu0 0
        %809 = vmatpush1.bf16.msra.mxu0 %v806
        %810 = vmatprep.subr.bf16.mxu0 0
        %811 = vmatpush1.bf16.msra.mxu0 0
        %812 = vmatprep.subr.bf16.mxu0 0
        %813 = vmatpush1.bf16.msra.mxu0 0
        %814 = vmatprep.subr.bf16.mxu0 0
        %815 = vmatpush1.bf16.msra.mxu0 0
        %816 = vmatprep.subr.bf16.mxu0 0
        %817 = vmatpush1.bf16.msra.mxu0 0
        %818 = vmatprep.subr.bf16.mxu0 0
        %819 = vmatpush1.bf16.msra.mxu0 0
        %820 = vmatprep.subr.bf16.mxu0 0
        %821 = vmatpush1.bf16.msra.mxu0 0
        %822 = vmatprep.subr.bf16.mxu0 0
        %823 = vmatpush1.bf16.msra.mxu0 0
        %824 = vmatprep.subr.bf16.mxu0 0
        %825 = vmatpush1.bf16.msra.mxu0 0
        %826 = vmatprep.subr.bf16.mxu0 0
        %827 = vmatpush1.bf16.msra.mxu0 0
        %828 = vmatprep.subr.bf16.mxu0 0
        %829 = vmatpush1.bf16.msra.mxu0 0
        %830 = vmatprep.subr.bf16.mxu0 0
        %831 = vmatpush1.bf16.msra.mxu0 0
        %832 = vmatprep.subr.bf16.mxu0 0
        %833 = vmatpush1.bf16.msra.mxu0 0
        %834 = vmatprep.subr.bf16.mxu0 0
        %835 = vmatpush1.bf16.msra.mxu0 0
        %836 = vmatprep.subr.bf16.mxu0 0
        %837 = vmatpush1.bf16.msra.mxu0 0
        %838 = vmatprep.subr.bf16.mxu0 0
        %839 = vmatpush1.bf16.msra.mxu0 0
        %840 = vmatprep.mubr.bf16.mxu0 0
        %841 = vmatmul.mubr.bf16.gmra.mrb[0].mxu0 %v802
        %v842 = vpop.f32.mrb[0].mxu0
        %v843 = vadd.f32 0.0, %v842
        %v844 = vpop.f32.mrb[0].mxu0
        %v845 = vpop.f32.mrb[0].mxu0
        %v846 = vpop.f32.mrb[0].mxu0
        %847 = vdwg.mxu0
        %v849 = vsel %vm568, %v798, 0
        %v852 = vsel %vm804, %v557, 0
        %854 = vmatprep.subr.bf16.mxu0 0
        %855 = vmatpush1.bf16.msra.mxu0 %v852
        %856 = vmatprep.subr.bf16.mxu0 0
        %857 = vmatpush1.bf16.msra.mxu0 0
        %858 = vmatprep.subr.bf16.mxu0 0
        %859 = vmatpush1.bf16.msra.mxu0 0
        %860 = vmatprep.subr.bf16.mxu0 0
        %861 = vmatpush1.bf16.msra.mxu0 0
        %862 = vmatprep.subr.bf16.mxu0 0
        %863 = vmatpush1.bf16.msra.mxu0 0
        %864 = vmatprep.subr.bf16.mxu0 0
        %865 = vmatpush1.bf16.msra.mxu0 0
        %866 = vmatprep.subr.bf16.mxu0 0
        %867 = vmatpush1.bf16.msra.mxu0 0
        %868 = vmatprep.subr.bf16.mxu0 0
        %869 = vmatpush1.bf16.msra.mxu0 0
        %870 = vmatprep.subr.bf16.mxu0 0
        %871 = vmatpush1.bf16.msra.mxu0 0
        %872 = vmatprep.subr.bf16.mxu0 0
        %873 = vmatpush1.bf16.msra.mxu0 0
        %874 = vmatprep.subr.bf16.mxu0 0
        %875 = vmatpush1.bf16.msra.mxu0 0
        %876 = vmatprep.subr.bf16.mxu0 0
        %877 = vmatpush1.bf16.msra.mxu0 0
        %878 = vmatprep.subr.bf16.mxu0 0
        %879 = vmatpush1.bf16.msra.mxu0 0
        %880 = vmatprep.subr.bf16.mxu0 0
        %881 = vmatpush1.bf16.msra.mxu0 0
        %882 = vmatprep.subr.bf16.mxu0 0
        %883 = vmatpush1.bf16.msra.mxu0 0
        %884 = vmatprep.subr.bf16.mxu0 0
        %885 = vmatpush1.bf16.msra.mxu0 0
        %886 = vmatprep.mubr.bf16.mxu0 0
        %887 = vmatmul.mubr.bf16.gmra.mrb[0].mxu0 %v849
        %v888 = vpop.f32.mrb[0].mxu0
        %v889 = vadd.f32 0.0, %v888
        %v890 = vpop.f32.mrb[0].mxu0
        %v891 = vpop.f32.mrb[0].mxu0
        %v892 = vpop.f32.mrb[0].mxu0
        %893 = vdwg.mxu0
        %v895 = vsel %vm568, %v799, 0
        %v898 = vsel %vm804, %v559, 0
        %900 = vmatprep.subr.bf16.mxu0 0
        %901 = vmatpush1.bf16.msra.mxu0 %v898
        %902 = vmatprep.subr.bf16.mxu0 0
        %903 = vmatpush1.bf16.msra.mxu0 0
        %904 = vmatprep.subr.bf16.mxu0 0
        %905 = vmatpush1.bf16.msra.mxu0 0
        %906 = vmatprep.subr.bf16.mxu0 0
        %907 = vmatpush1.bf16.msra.mxu0 0
        %908 = vmatprep.subr.bf16.mxu0 0
        %909 = vmatpush1.bf16.msra.mxu0 0
        %910 = vmatprep.subr.bf16.mxu0 0
        %911 = vmatpush1.bf16.msra.mxu0 0
        %912 = vmatprep.subr.bf16.mxu0 0
        %913 = vmatpush1.bf16.msra.mxu0 0
        %914 = vmatprep.subr.bf16.mxu0 0
        %915 = vmatpush1.bf16.msra.mxu0 0
        %916 = vmatprep.subr.bf16.mxu0 0
        %917 = vmatpush1.bf16.msra.mxu0 0
        %918 = vmatprep.subr.bf16.mxu0 0
        %919 = vmatpush1.bf16.msra.mxu0 0
        %920 = vmatprep.subr.bf16.mxu0 0
        %921 = vmatpush1.bf16.msra.mxu0 0
        %922 = vmatprep.subr.bf16.mxu0 0
        %923 = vmatpush1.bf16.msra.mxu0 0
        %924 = vmatprep.subr.bf16.mxu0 0
        %925 = vmatpush1.bf16.msra.mxu0 0
        %926 = vmatprep.subr.bf16.mxu0 0
        %927 = vmatpush1.bf16.msra.mxu0 0
        %928 = vmatprep.subr.bf16.mxu0 0
        %929 = vmatpush1.bf16.msra.mxu0 0
        %930 = vmatprep.subr.bf16.mxu0 0
        %931 = vmatpush1.bf16.msra.mxu0 0
        %932 = vmatprep.mubr.bf16.mxu0 0
        %933 = vmatmul.mubr.bf16.gmra.mrb[0].mxu0 %v895
        %v934 = vpop.f32.mrb[0].mxu0
        %v935 = vadd.f32 0.0, %v934
        %v936 = vpop.f32.mrb[0].mxu0
        %v937 = vpop.f32.mrb[0].mxu0
        %v938 = vpop.f32.mrb[0].mxu0
        %939 = vdwg.mxu0
        %v941 = vsel %vm568, %v800, 0
        %v944 = vsel %vm804, %v561, 0
        %946 = vmatprep.subr.bf16.mxu0 0
        %947 = vmatpush1.bf16.msra.mxu0 %v944
        %948 = vmatprep.subr.bf16.mxu0 0
        %949 = vmatpush1.bf16.msra.mxu0 0
        %950 = vmatprep.subr.bf16.mxu0 0
        %951 = vmatpush1.bf16.msra.mxu0 0
        %952 = vmatprep.subr.bf16.mxu0 0
        %953 = vmatpush1.bf16.msra.mxu0 0
        %954 = vmatprep.subr.bf16.mxu0 0
        %955 = vmatpush1.bf16.msra.mxu0 0
        %956 = vmatprep.subr.bf16.mxu0 0
        %957 = vmatpush1.bf16.msra.mxu0 0
        %958 = vmatprep.subr.bf16.mxu0 0
        %959 = vmatpush1.bf16.msra.mxu0 0
        %960 = vmatprep.subr.bf16.mxu0 0
        %961 = vmatpush1.bf16.msra.mxu0 0
        %962 = vmatprep.subr.bf16.mxu0 0
        %963 = vmatpush1.bf16.msra.mxu0 0
        %964 = vmatprep.subr.bf16.mxu0 0
        %965 = vmatpush1.bf16.msra.mxu0 0
        %966 = vmatprep.subr.bf16.mxu0 0
        %967 = vmatpush1.bf16.msra.mxu0 0
        %968 = vmatprep.subr.bf16.mxu0 0
        %969 = vmatpush1.bf16.msra.mxu0 0
        %970 = vmatprep.subr.bf16.mxu0 0
        %971 = vmatpush1.bf16.msra.mxu0 0
        %972 = vmatprep.subr.bf16.mxu0 0
        %973 = vmatpush1.bf16.msra.mxu0 0
        %974 = vmatprep.subr.bf16.mxu0 0
        %975 = vmatpush1.bf16.msra.mxu0 0
        %976 = vmatprep.subr.bf16.mxu0 0
        %977 = vmatpush1.bf16.msra.mxu0 0
        %978 = vmatprep.mubr.bf16.mxu0 0
        %979 = vmatmul.mubr.bf16.gmra.mrb[0].mxu0 %v941
        %v980 = vpop.f32.mrb[0].mxu0
        %v981 = vadd.f32 0.0, %v980
        %v982 = vpop.f32.mrb[0].mxu0
        %v983 = vpop.f32.mrb[0].mxu0
        %v984 = vpop.f32.mrb[0].mxu0
        %985 = vdwg.mxu0
        %987 = vrot.lane.b32.xlu0 %v889, 8
        %v988 = vpop.permute.xlu0 %987
        %991 = vrot.lane.b32.xlu0 %v935, 16
        %v992 = vpop.permute.xlu0 %991
        %995 = vrot.lane.b32.xlu0 %v981, 24
        %v996 = vpop.permute.xlu0 %995
        %v998 = vsel %vm568, %v843, %v988
        %vm999 = vcmask 130048
        %v1000 = vsel %vm999, %v998, %v992
        %vm1001 = vcmask 195584
        %v1002 = vsel %vm1001, %v1000, %v996
        %v1003 = vpack.c.bf16 %v1002, %v1002
        %v1008 = vunpack.c.l.b16 %v563
        %v1009 = vunpack.c.l.b16 %v564
        %v1010 = vunpack.c.l.b16 %v565
        %v1011 = vunpack.c.l.b16 %v566
        %v1012 = vpack.c.b16 %v1009, %v1008
        %v1013 = vpack.c.b16 %v1011, %v1010
        %1014 = vrot.lane.b32.xlu0 %v1012, 64
        %v1015 = vpop.permute.xlu0 %1014
        %1016 = vrot.lane.b32.xlu0 %v1013, 64
        %v1017 = vpop.permute.xlu0 %1016
        %v1021 = vsel %vm452, %v1003, 0
        %1023 = vmatprep.subr.bf16.mxu0 0
        %1024 = vmatpush1.bf16.msra.mxu0 %v1015
        %1025 = vmatprep.subr.bf16.mxu0 0
        %1026 = vmatpush1.bf16.msra.mxu0 %v1017
        %1027 = vmatprep.subr.bf16.mxu0 0
        %1028 = vmatpush1.bf16.msra.mxu0 0
        %1029 = vmatprep.subr.bf16.mxu0 0
        %1030 = vmatpush1.bf16.msra.mxu0 0
        %1031 = vmatprep.subr.bf16.mxu0 0
        %1032 = vmatpush1.bf16.msra.mxu0 0
        %1033 = vmatprep.subr.bf16.mxu0 0
        %1034 = vmatpush1.bf16.msra.mxu0 0
        %1035 = vmatprep.subr.bf16.mxu0 0
        %1036 = vmatpush1.bf16.msra.mxu0 0
        %1037 = vmatprep.subr.bf16.mxu0 0
        %1038 = vmatpush1.bf16.msra.mxu0 0
        %1039 = vmatprep.subr.bf16.mxu0 0
        %1040 = vmatpush1.bf16.msra.mxu0 0
        %1041 = vmatprep.subr.bf16.mxu0 0
        %1042 = vmatpush1.bf16.msra.mxu0 0
        %1043 = vmatprep.subr.bf16.mxu0 0
        %1044 = vmatpush1.bf16.msra.mxu0 0
        %1045 = vmatprep.subr.bf16.mxu0 0
        %1046 = vmatpush1.bf16.msra.mxu0 0
        %1047 = vmatprep.subr.bf16.mxu0 0
        %1048 = vmatpush1.bf16.msra.mxu0 0
        %1049 = vmatprep.subr.bf16.mxu0 0
        %1050 = vmatpush1.bf16.msra.mxu0 0
        %1051 = vmatprep.subr.bf16.mxu0 0
        %1052 = vmatpush1.bf16.msra.mxu0 0
        %1053 = vmatprep.subr.bf16.mxu0 0
        %1054 = vmatpush1.bf16.msra.mxu0 0
        %1055 = vmatprep.mubr.bf16.mxu0 0
        %1056 = vmatmul.mubr.bf16.gmra.mrb[0].mxu0 %v1021
        %v1057 = vpop.f32.mrb[0].mxu0
        %v1058 = vadd.f32 0.0, %v1057
        %v1059 = vpop.f32.mrb[0].mxu0
        %v1060 = vpop.f32.mrb[0].mxu0
        %v1061 = vpop.f32.mrb[0].mxu0
        %1062 = vdwg.mxu0
        %v1063 = vadd.f32 %v447, %v1058
        %s1064 = sld [smem:[#allocation11 + $0x2]]
        %s1065 = sld [smem:[#allocation11 + $0x3]]
        %v1066 = vsel %vm452, %v1063, 0.0
        %1067 = vadd.xlane.f32.xlu0 %v1066
        %v1068 = vpop.xlane.xlu0 %1067
        %v1069 = vmul.f32 %v1068, %v456
        %v1070 = vsub.f32 %v1063, %v1069
        %v1071 = vmul.f32 %v1070, %v1070
        %v1072 = vsel %vm452, %v1071, 0.0
        %1073 = vadd.xlane.f32.xlu0 %v1072
        %v1074 = vpop.xlane.xlu0 %1073
        %v1075 = vmul.f32 %v1074, 0.032258064
        %v1076 = vstv %s1064
        %v1077 = vmul.f32 %v1076, %v1070
        %v1078 = vrsqrt.pop %v1075
        %v1079 = vmul.f32 %v1075, %v1078
        %vm1080 = vcmp.eq.f32.partialorder %v1075, inf
        %v1081 = vsel %vm1080, %v1075, %v1079
        %vm1082 = vcmp.eq.f32.partialorder %v1075, 0.0
        %v1083 = vand.u32 %v1075, 2147483648
        %v1084 = vsel %vm1082, %v1083, %v1081
        %v1085 = vadd.f32 %v1084, 1e-06
        %v1086 = vrcp.pop %v1085
        %v1087 = vmul.f32 %v1077, %v1086
        %v1088 = vstv %s1065
        %v1089 = vadd.f32 %v1087, %v1088
        %v1090 = vpack.c.bf16 %v1089, %v1089
        %1091 = vrot.lane.b32.xlu0 %v491, 32
        %v1092 = vpop.permute.xlu0 %1091
        %1093 = vrot.lane.b32.xlu0 %v492, 32
        %v1094 = vpop.permute.xlu0 %1093
        %v1098 = vsel %vm452, %v1090, 0
        %1100 = vmatprep.subr.bf16.mxu0 0
        %1101 = vmatpush1.bf16.msra.mxu0 %v1092
        %1102 = vmatprep.subr.bf16.mxu0 0
        %1103 = vmatpush1.bf16.msra.mxu0 %v1094
        %1104 = vmatprep.subr.bf16.mxu0 0
        %1105 = vmatpush1.bf16.msra.mxu0 0
        %1106 = vmatprep.subr.bf16.mxu0 0
        %1107 = vmatpush1.bf16.msra.mxu0 0
        %1108 = vmatprep.subr.bf16.mxu0 0
        %1109 = vmatpush1.bf16.msra.mxu0 0
        %1110 = vmatprep.subr.bf16.mxu0 0
        %1111 = vmatpush1.bf16.msra.mxu0 0
        %1112 = vmatprep.subr.bf16.mxu0 0
        %1113 = vmatpush1.bf16.msra.mxu0 0
        %1114 = vmatprep.subr.bf16.mxu0 0
        %1115 = vmatpush1.bf16.msra.mxu0 0
        %1116 = vmatprep.subr.bf16.mxu0 0
        %1117 = vmatpush1.bf16.msra.mxu0 0
        %1118 = vmatprep.subr.bf16.mxu0 0
        %1119 = vmatpush1.bf16.msra.mxu0 0
        %1120 = vmatprep.subr.bf16.mxu0 0
        %1121 = vmatpush1.bf16.msra.mxu0 0
        %1122 = vmatprep.subr.bf16.mxu0 0
        %1123 = vmatpush1.bf16.msra.mxu0 0
        %1124 = vmatprep.subr.bf16.mxu0 0
        %1125 = vmatpush1.bf16.msra.mxu0 0
        %1126 = vmatprep.subr.bf16.mxu0 0
        %1127 = vmatpush1.bf16.msra.mxu0 0
        %1128 = vmatprep.subr.bf16.mxu0 0
        %1129 = vmatpush1.bf16.msra.mxu0 0
        %1130 = vmatprep.subr.bf16.mxu0 0
        %1131 = vmatpush1.bf16.msra.mxu0 0
        %1132 = vmatprep.mubr.bf16.mxu0 0
        %1133 = vmatmul.mubr.bf16.gmra.mrb[0].mxu0 %v1098
        %v1134 = vpop.f32.mrb[0].mxu0
        %v1135 = vadd.f32 0.0, %v1134
        %v1136 = vpop.f32.mrb[0].mxu0
        %v1137 = vpop.f32.mrb[0].mxu0
        %v1138 = vpop.f32.mrb[0].mxu0
        %1139 = vdwg.mxu0
        %v1140 = vpack.c.bf16 %v1135, %v1135
        %v1143 = vunpack.c.l.b16 %v448
        %v1144 = vunpack.c.l.b16 %v449
        %v1145 = vpack.c.b16 %v1144, %v1143
        %v1149 = vsel %vm452, %v1145, 0
        %1151 = vmatprep.subr.bf16.mxu0 0
        %1152 = vmatpush1.bf16.msra.mxu0 %v1012
        %1153 = vmatprep.subr.bf16.mxu0 0
        %1154 = vmatpush1.bf16.msra.mxu0 %v1013
        %1155 = vmatprep.subr.bf16.mxu0 0
        %1156 = vmatpush1.bf16.msra.mxu0 0
        %1157 = vmatprep.subr.bf16.mxu0 0
        %1158 = vmatpush1.bf16.msra.mxu0 0
        %1159 = vmatprep.subr.bf16.mxu0 0
        %1160 = vmatpush1.bf16.msra.mxu0 0
        %1161 = vmatprep.subr.bf16.mxu0 0
        %1162 = vmatpush1.bf16.msra.mxu0 0
        %1163 = vmatprep.subr.bf16.mxu0 0
        %1164 = vmatpush1.bf16.msra.mxu0 0
        %1165 = vmatprep.subr.bf16.mxu0 0
        %1166 = vmatpush1.bf16.msra.mxu0 0
        %1167 = vmatprep.subr.bf16.mxu0 0
        %1168 = vmatpush1.bf16.msra.mxu0 0
        %1169 = vmatprep.subr.bf16.mxu0 0
        %1170 = vmatpush1.bf16.msra.mxu0 0
        %1171 = vmatprep.subr.bf16.mxu0 0
        %1172 = vmatpush1.bf16.msra.mxu0 0
        %1173 = vmatprep.subr.bf16.mxu0 0
        %1174 = vmatpush1.bf16.msra.mxu0 0
        %1175 = vmatprep.subr.bf16.mxu0 0
        %1176 = vmatpush1.bf16.msra.mxu0 0
        %1177 = vmatprep.subr.bf16.mxu0 0
        %1178 = vmatpush1.bf16.msra.mxu0 0
        %1179 = vmatprep.subr.bf16.mxu0 0
        %1180 = vmatpush1.bf16.msra.mxu0 0
        %1181 = vmatprep.subr.bf16.mxu0 0
        %1182 = vmatpush1.bf16.msra.mxu0 0
        %1183 = vmatprep.mubr.bf16.mxu0 0
        %1184 = vmatmul.mubr.bf16.gmra.mrb[0].mxu0 %v1149
        %v1185 = vpop.f32.mrb[0].mxu0
        %v1186 = vadd.f32 0.0, %v1185
        %v1187 = vpop.f32.mrb[0].mxu0
        %v1188 = vpop.f32.mrb[0].mxu0
        %v1189 = vadd.f32 0.0, %v1188
        %v1190 = vpop.f32.mrb[0].mxu0
        %1191 = vdwg.mxu0
        %v1192 = vpack.c.bf16 %v1189, %v1186
        %1194 = vrot.lane.b32.xlu0 %v1140, 120
        %v1195 = vpop.permute.xlu0 %1194
        %1196 = vrot.lane.b32.xlu0 %v1140, 112
        %v1197 = vpop.permute.xlu0 %1196
        %1198 = vrot.lane.b32.xlu0 %v1140, 104
        %v1199 = vpop.permute.xlu0 %1198
        %1201 = vrot.lane.b32.xlu0 %v1192, 120
        %v1202 = vpop.permute.xlu0 %1201
        %1203 = vrot.lane.b32.xlu0 %v1192, 112
        %v1204 = vpop.permute.xlu0 %1203
        %1205 = vrot.lane.b32.xlu0 %v1192, 104
        %v1206 = vpop.permute.xlu0 %1205
        %1207 = vrot.lane.b32.xlu0 %v1192, 96
        %v1208 = vpop.permute.xlu0 %1207
        %1210 = vrot.lane.b32.xlu0 %v1192, 88
        %v1211 = vpop.permute.xlu0 %1210
        %1213 = vrot.lane.b32.xlu0 %v1192, 80
        %v1214 = vpop.permute.xlu0 %1213
        %1216 = vrot.lane.b32.xlu0 %v1192, 72
        %v1217 = vpop.permute.xlu0 %1216
        %v1219 = vld [vmem:[%s393] sm:$0xf]
        %v1220 = vunpack.c.l.bf16 %v1219
        %v1222 = vsel %vm568, %v1140, 0
        %v1225 = vsel %vm568, %v1192, 0
        %1227 = vmatprep.subr.bf16.mxu0 0
        %1228 = vmatpush1.bf16.xpose.msra.mxu0 %v1225
        %1229 = vmatprep.subr.bf16.mxu0 0
        %1230 = vmatpush1.bf16.xpose.msra.mxu0 0
        %1231 = vmatprep.subr.bf16.mxu0 0
        %1232 = vmatpush1.bf16.xpose.msra.mxu0 0
        %1233 = vmatprep.subr.bf16.mxu0 0
        %1234 = vmatpush1.bf16.xpose.msra.mxu0 0
        %1235 = vmatprep.subr.bf16.mxu0 0
        %1236 = vmatpush1.bf16.xpose.msra.mxu0 0
        %1237 = vmatprep.subr.bf16.mxu0 0
        %1238 = vmatpush1.bf16.xpose.msra.mxu0 0
        %1239 = vmatprep.subr.bf16.mxu0 0
        %1240 = vmatpush1.bf16.xpose.msra.mxu0 0
        %1241 = vmatprep.subr.bf16.mxu0 0
        %1242 = vmatpush1.bf16.xpose.msra.mxu0 0
        %1243 = vmatprep.subr.bf16.mxu0 0
        %1244 = vmatpush1.bf16.xpose.msra.mxu0 0
        %1245 = vmatprep.subr.bf16.mxu0 0
        %1246 = vmatpush1.bf16.xpose.msra.mxu0 0
        %1247 = vmatprep.subr.bf16.mxu0 0
        %1248 = vmatpush1.bf16.xpose.msra.mxu0 0
        %1249 = vmatprep.subr.bf16.mxu0 0
        %1250 = vmatpush1.bf16.xpose.msra.mxu0 0
        %1251 = vmatprep.subr.bf16.mxu0 0
        %1252 = vmatpush1.bf16.xpose.msra.mxu0 0
        %1253 = vmatprep.subr.bf16.mxu0 0
        %1254 = vmatpush1.bf16.xpose.msra.mxu0 0
        %1255 = vmatprep.subr.bf16.mxu0 0
        %1256 = vmatpush1.bf16.xpose.msra.mxu0 0
        %1257 = vmatprep.subr.bf16.mxu0 0
        %1258 = vmatpush1.bf16.xpose.msra.mxu0 0
        %1259 = vmatprep.mubr.bf16.mxu0 0
        %1260 = vmatmul.mubr.bf16.gmra.mrb[0].mxu0 %v1222
        %v1261 = vpop.f32.mrb[0].mxu0
        %v1262 = vadd.f32 %v1220, %v1261
        %v1263 = vpop.f32.mrb[0].mxu0
        %v1264 = vpop.f32.mrb[0].mxu0
        %v1265 = vpop.f32.mrb[0].mxu0
        %1266 = vdwg.mxu0
        %v1268 = vsel %vm568, %v1195, 0
        %v1271 = vsel %vm568, %v1202, 0
        %1273 = vmatprep.subr.bf16.mxu0 0
        %1274 = vmatpush1.bf16.xpose.msra.mxu0 %v1271
        %1275 = vmatprep.subr.bf16.mxu0 0
        %1276 = vmatpush1.bf16.xpose.msra.mxu0 0
        %1277 = vmatprep.subr.bf16.mxu0 0
        %1278 = vmatpush1.bf16.xpose.msra.mxu0 0
        %1279 = vmatprep.subr.bf16.mxu0 0
        %1280 = vmatpush1.bf16.xpose.msra.mxu0 0
        %1281 = vmatprep.subr.bf16.mxu0 0
        %1282 = vmatpush1.bf16.xpose.msra.mxu0 0
        %1283 = vmatprep.subr.bf16.mxu0 0
        %1284 = vmatpush1.bf16.xpose.msra.mxu0 0
        %1285 = vmatprep.subr.bf16.mxu0 0
        %1286 = vmatpush1.bf16.xpose.msra.mxu0 0
        %1287 = vmatprep.subr.bf16.mxu0 0
        %1288 = vmatpush1.bf16.xpose.msra.mxu0 0
        %1289 = vmatprep.subr.bf16.mxu0 0
        %1290 = vmatpush1.bf16.xpose.msra.mxu0 0
        %1291 = vmatprep.subr.bf16.mxu0 0
        %1292 = vmatpush1.bf16.xpose.msra.mxu0 0
        %1293 = vmatprep.subr.bf16.mxu0 0
        %1294 = vmatpush1.bf16.xpose.msra.mxu0 0
        %1295 = vmatprep.subr.bf16.mxu0 0
        %1296 = vmatpush1.bf16.xpose.msra.mxu0 0
        %1297 = vmatprep.subr.bf16.mxu0 0
        %1298 = vmatpush1.bf16.xpose.msra.mxu0 0
        %1299 = vmatprep.subr.bf16.mxu0 0
        %1300 = vmatpush1.bf16.xpose.msra.mxu0 0
        %1301 = vmatprep.subr.bf16.mxu0 0
        %1302 = vmatpush1.bf16.xpose.msra.mxu0 0
        %1303 = vmatprep.subr.bf16.mxu0 0
        %1304 = vmatpush1.bf16.xpose.msra.mxu0 0
        %1305 = vmatprep.mubr.bf16.mxu0 0
        %1306 = vmatmul.mubr.bf16.gmra.mrb[0].mxu0 %v1268
        %v1307 = vpop.f32.mrb[0].mxu0
        %v1308 = vadd.f32 %v1220, %v1307
        %v1309 = vpop.f32.mrb[0].mxu0
        %v1310 = vpop.f32.mrb[0].mxu0
        %v1311 = vpop.f32.mrb[0].mxu0
        %1312 = vdwg.mxu0
        %v1314 = vsel %vm568, %v1197, 0
        %v1317 = vsel %vm568, %v1204, 0
        %1319 = vmatprep.subr.bf16.mxu0 0
        %1320 = vmatpush1.bf16.xpose.msra.mxu0 %v1317
        %1321 = vmatprep.subr.bf16.mxu0 0
        %1322 = vmatpush1.bf16.xpose.msra.mxu0 0
        %1323 = vmatprep.subr.bf16.mxu0 0
        %1324 = vmatpush1.bf16.xpose.msra.mxu0 0
        %1325 = vmatprep.subr.bf16.mxu0 0
        %1326 = vmatpush1.bf16.xpose.msra.mxu0 0
        %1327 = vmatprep.subr.bf16.mxu0 0
        %1328 = vmatpush1.bf16.xpose.msra.mxu0 0
        %1329 = vmatprep.subr.bf16.mxu0 0
        %1330 = vmatpush1.bf16.xpose.msra.mxu0 0
        %1331 = vmatprep.subr.bf16.mxu0 0
        %1332 = vmatpush1.bf16.xpose.msra.mxu0 0
        %1333 = vmatprep.subr.bf16.mxu0 0
        %1334 = vmatpush1.bf16.xpose.msra.mxu0 0
        %1335 = vmatprep.subr.bf16.mxu0 0
        %1336 = vmatpush1.bf16.xpose.msra.mxu0 0
        %1337 = vmatprep.subr.bf16.mxu0 0
        %1338 = vmatpush1.bf16.xpose.msra.mxu0 0
        %1339 = vmatprep.subr.bf16.mxu0 0
        %1340 = vmatpush1.bf16.xpose.msra.mxu0 0
        %1341 = vmatprep.subr.bf16.mxu0 0
        %1342 = vmatpush1.bf16.xpose.msra.mxu0 0
        %1343 = vmatprep.subr.bf16.mxu0 0
        %1344 = vmatpush1.bf16.xpose.msra.mxu0 0
        %1345 = vmatprep.subr.bf16.mxu0 0
        %1346 = vmatpush1.bf16.xpose.msra.mxu0 0
        %1347 = vmatprep.subr.bf16.mxu0 0
        %1348 = vmatpush1.bf16.xpose.msra.mxu0 0
        %1349 = vmatprep.subr.bf16.mxu0 0
        %1350 = vmatpush1.bf16.xpose.msra.mxu0 0
        %1351 = vmatprep.mubr.bf16.mxu0 0
        %1352 = vmatmul.mubr.bf16.gmra.mrb[0].mxu0 %v1314
        %v1353 = vpop.f32.mrb[0].mxu0
        %v1354 = vadd.f32 %v1220, %v1353
        %v1355 = vpop.f32.mrb[0].mxu0
        %v1356 = vpop.f32.mrb[0].mxu0
        %v1357 = vpop.f32.mrb[0].mxu0
        %1358 = vdwg.mxu0
        %v1360 = vsel %vm568, %v1199, 0
        %v1363 = vsel %vm568, %v1206, 0
        %1365 = vmatprep.subr.bf16.mxu0 0
        %1366 = vmatpush1.bf16.xpose.msra.mxu0 %v1363
        %1367 = vmatprep.subr.bf16.mxu0 0
        %1368 = vmatpush1.bf16.xpose.msra.mxu0 0
        %1369 = vmatprep.subr.bf16.mxu0 0
        %1370 = vmatpush1.bf16.xpose.msra.mxu0 0
        %1371 = vmatprep.subr.bf16.mxu0 0
        %1372 = vmatpush1.bf16.xpose.msra.mxu0 0
        %1373 = vmatprep.subr.bf16.mxu0 0
        %1374 = vmatpush1.bf16.xpose.msra.mxu0 0
        %1375 = vmatprep.subr.bf16.mxu0 0
        %1376 = vmatpush1.bf16.xpose.msra.mxu0 0
        %1377 = vmatprep.subr.bf16.mxu0 0
        %1378 = vmatpush1.bf16.xpose.msra.mxu0 0
        %1379 = vmatprep.subr.bf16.mxu0 0
        %1380 = vmatpush1.bf16.xpose.msra.mxu0 0
        %1381 = vmatprep.subr.bf16.mxu0 0
        %1382 = vmatpush1.bf16.xpose.msra.mxu0 0
        %1383 = vmatprep.subr.bf16.mxu0 0
        %1384 = vmatpush1.bf16.xpose.msra.mxu0 0
        %1385 = vmatprep.subr.bf16.mxu0 0
        %1386 = vmatpush1.bf16.xpose.msra.mxu0 0
        %1387 = vmatprep.subr.bf16.mxu0 0
        %1388 = vmatpush1.bf16.xpose.msra.mxu0 0
        %1389 = vmatprep.subr.bf16.mxu0 0
        %1390 = vmatpush1.bf16.xpose.msra.mxu0 0
        %1391 = vmatprep.subr.bf16.mxu0 0
        %1392 = vmatpush1.bf16.xpose.msra.mxu0 0
        %1393 = vmatprep.subr.bf16.mxu0 0
        %1394 = vmatpush1.bf16.xpose.msra.mxu0 0
        %1395 = vmatprep.subr.bf16.mxu0 0
        %1396 = vmatpush1.bf16.xpose.msra.mxu0 0
        %1397 = vmatprep.mubr.bf16.mxu0 0
        %1398 = vmatmul.mubr.bf16.gmra.mrb[0].mxu0 %v1360
        %v1399 = vpop.f32.mrb[0].mxu0
        %v1400 = vadd.f32 %v1220, %v1399
        %v1401 = vpop.f32.mrb[0].mxu0
        %v1402 = vpop.f32.mrb[0].mxu0
        %v1403 = vpop.f32.mrb[0].mxu0
        %1404 = vdwg.mxu0
        %v1405 = vsel %vm999, %v1262, -inf
        %1406 = vmax.xlane.f32.xlu0 %v1405
        %v1407 = vpop.xlane.xlu0 %1406
        %v1408 = vsel %vm999, %v1308, -inf
        %1409 = vmax.xlane.f32.xlu0 %v1408
        %v1410 = vpop.xlane.xlu0 %1409
        %v1411 = vsel %vm999, %v1354, -inf
        %1412 = vmax.xlane.f32.xlu0 %v1411
        %v1413 = vpop.xlane.xlu0 %1412
        %v1414 = vsel %vm999, %v1400, -inf
        %1415 = vmax.xlane.f32.xlu0 %v1414
        %v1416 = vpop.xlane.xlu0 %1415
        %v1417 = vsub.f32 %v1262, %v1407
        %v1418 = vsub.f32 %v1308, %v1410
        %v1419 = vsub.f32 %v1354, %v1413
        %v1420 = vsub.f32 %v1400, %v1416
        %v1421 = vmul.f32 %v1417, 1.442695
        %v1422 = vpow.pop %v1421
        %v1423 = vmul.f32 %v1418, 1.442695
        %v1424 = vpow.pop %v1423
        %v1425 = vmul.f32 %v1419, 1.442695
        %v1426 = vpow.pop %v1425
        %v1427 = vmul.f32 %v1420, 1.442695
        %v1428 = vpow.pop %v1427
        %v1429 = vsel %vm999, %v1422, 0.0
        %1430 = vadd.xlane.f32.xlu0 %v1429
        %v1431 = vpop.xlane.xlu0 %1430
        %v1432 = vsel %vm999, %v1424, 0.0
        %1433 = vadd.xlane.f32.xlu0 %v1432
        %v1434 = vpop.xlane.xlu0 %1433
        %v1435 = vsel %vm999, %v1426, 0.0
        %1436 = vadd.xlane.f32.xlu0 %v1435
        %v1437 = vpop.xlane.xlu0 %1436
        %v1438 = vsel %vm999, %v1428, 0.0
        %1439 = vadd.xlane.f32.xlu0 %v1438
        %v1440 = vpop.xlane.xlu0 %1439
        %v1441 = vrcp.pop %v1431
        %v1442 = vrcp.pop %v1434
        %v1443 = vrcp.pop %v1437
        %v1444 = vrcp.pop %v1440
        %v1445 = vmul.f32 %v1422, %v1441
        %v1446 = vmul.f32 %v1424, %v1442
        %v1447 = vmul.f32 %v1426, %v1443
        %v1448 = vmul.f32 %v1428, %v1444
        %v1449 = vpack.c.bf16 %v1445, %v1445
        %v1450 = vpack.c.bf16 %v1446, %v1446
        %v1451 = vpack.c.bf16 %v1447, %v1447
        %v1452 = vpack.c.bf16 %v1448, %v1448
        %v1454 = vsel %vm999, %v1449, 0
        %1456 = vmatprep.subr.bf16.mxu0 0
        %1457 = vmatpush1.bf16.msra.mxu0 %v1208
        %1458 = vmatprep.subr.bf16.mxu0 0
        %1459 = vmatpush1.bf16.msra.mxu0 0
        %1460 = vmatprep.subr.bf16.mxu0 0
        %1461 = vmatpush1.bf16.msra.mxu0 0
        %1462 = vmatprep.subr.bf16.mxu0 0
        %1463 = vmatpush1.bf16.msra.mxu0 0
        %1464 = vmatprep.subr.bf16.mxu0 0
        %1465 = vmatpush1.bf16.msra.mxu0 0
        %1466 = vmatprep.subr.bf16.mxu0 0
        %1467 = vmatpush1.bf16.msra.mxu0 0
        %1468 = vmatprep.subr.bf16.mxu0 0
        %1469 = vmatpush1.bf16.msra.mxu0 0
        %1470 = vmatprep.subr.bf16.mxu0 0
        %1471 = vmatpush1.bf16.msra.mxu0 0
        %1472 = vmatprep.subr.bf16.mxu0 0
        %1473 = vmatpush1.bf16.msra.mxu0 0
        %1474 = vmatprep.subr.bf16.mxu0 0
        %1475 = vmatpush1.bf16.msra.mxu0 0
        %1476 = vmatprep.subr.bf16.mxu0 0
        %1477 = vmatpush1.bf16.msra.mxu0 0
        %1478 = vmatprep.subr.bf16.mxu0 0
        %1479 = vmatpush1.bf16.msra.mxu0 0
        %1480 = vmatprep.subr.bf16.mxu0 0
        %1481 = vmatpush1.bf16.msra.mxu0 0
        %1482 = vmatprep.subr.bf16.mxu0 0
        %1483 = vmatpush1.bf16.msra.mxu0 0
        %1484 = vmatprep.subr.bf16.mxu0 0
        %1485 = vmatpush1.bf16.msra.mxu0 0
        %1486 = vmatprep.subr.bf16.mxu0 0
        %1487 = vmatpush1.bf16.msra.mxu0 0
        %1488 = vmatprep.mubr.bf16.mxu0 0
        %1489 = vmatmul.mubr.bf16.gmra.mrb[0].mxu0 %v1454
        %v1490 = vpop.f32.mrb[0].mxu0
        %v1491 = vadd.f32 0.0, %v1490
        %v1492 = vpop.f32.mrb[0].mxu0
        %v1493 = vpop.f32.mrb[0].mxu0
        %v1494 = vpop.f32.mrb[0].mxu0
        %1495 = vdwg.mxu0
        %v1497 = vsel %vm999, %v1450, 0
        %1499 = vmatprep.subr.bf16.mxu0 0
        %1500 = vmatpush1.bf16.msra.mxu0 %v1211
        %1501 = vmatprep.subr.bf16.mxu0 0
        %1502 = vmatpush1.bf16.msra.mxu0 0
        %1503 = vmatprep.subr.bf16.mxu0 0
        %1504 = vmatpush1.bf16.msra.mxu0 0
        %1505 = vmatprep.subr.bf16.mxu0 0
        %1506 = vmatpush1.bf16.msra.mxu0 0
        %1507 = vmatprep.subr.bf16.mxu0 0
        %1508 = vmatpush1.bf16.msra.mxu0 0
        %1509 = vmatprep.subr.bf16.mxu0 0
        %1510 = vmatpush1.bf16.msra.mxu0 0
        %1511 = vmatprep.subr.bf16.mxu0 0
        %1512 = vmatpush1.bf16.msra.mxu0 0
        %1513 = vmatprep.subr.bf16.mxu0 0
        %1514 = vmatpush1.bf16.msra.mxu0 0
        %1515 = vmatprep.subr.bf16.mxu0 0
        %1516 = vmatpush1.bf16.msra.mxu0 0
        %1517 = vmatprep.subr.bf16.mxu0 0
        %1518 = vmatpush1.bf16.msra.mxu0 0
        %1519 = vmatprep.subr.bf16.mxu0 0
        %1520 = vmatpush1.bf16.msra.mxu0 0
        %1521 = vmatprep.subr.bf16.mxu0 0
        %1522 = vmatpush1.bf16.msra.mxu0 0
        %1523 = vmatprep.subr.bf16.mxu0 0
        %1524 = vmatpush1.bf16.msra.mxu0 0
        %1525 = vmatprep.subr.bf16.mxu0 0
        %1526 = vmatpush1.bf16.msra.mxu0 0
        %1527 = vmatprep.subr.bf16.mxu0 0
        %1528 = vmatpush1.bf16.msra.mxu0 0
        %1529 = vmatprep.subr.bf16.mxu0 0
        %1530 = vmatpush1.bf16.msra.mxu0 0
        %1531 = vmatprep.mubr.bf16.mxu0 0
        %1532 = vmatmul.mubr.bf16.gmra.mrb[0].mxu0 %v1497
        %v1533 = vpop.f32.mrb[0].mxu0
        %v1534 = vadd.f32 0.0, %v1533
        %v1535 = vpop.f32.mrb[0].mxu0
        %v1536 = vpop.f32.mrb[0].mxu0
        %v1537 = vpop.f32.mrb[0].mxu0
        %1538 = vdwg.mxu0
        %v1540 = vsel %vm999, %v1451, 0
        %1542 = vmatprep.subr.bf16.mxu0 0
        %1543 = vmatpush1.bf16.msra.mxu0 %v1214
        %1544 = vmatprep.subr.bf16.mxu0 0
        %1545 = vmatpush1.bf16.msra.mxu0 0
        %1546 = vmatprep.subr.bf16.mxu0 0
        %1547 = vmatpush1.bf16.msra.mxu0 0
        %1548 = vmatprep.subr.bf16.mxu0 0
        %1549 = vmatpush1.bf16.msra.mxu0 0
        %1550 = vmatprep.subr.bf16.mxu0 0
        %1551 = vmatpush1.bf16.msra.mxu0 0
        %1552 = vmatprep.subr.bf16.mxu0 0
        %1553 = vmatpush1.bf16.msra.mxu0 0
        %1554 = vmatprep.subr.bf16.mxu0 0
        %1555 = vmatpush1.bf16.msra.mxu0 0
        %1556 = vmatprep.subr.bf16.mxu0 0
        %1557 = vmatpush1.bf16.msra.mxu0 0
        %1558 = vmatprep.subr.bf16.mxu0 0
        %1559 = vmatpush1.bf16.msra.mxu0 0
        %1560 = vmatprep.subr.bf16.mxu0 0
        %1561 = vmatpush1.bf16.msra.mxu0 0
        %1562 = vmatprep.subr.bf16.mxu0 0
        %1563 = vmatpush1.bf16.msra.mxu0 0
        %1564 = vmatprep.subr.bf16.mxu0 0
        %1565 = vmatpush1.bf16.msra.mxu0 0
        %1566 = vmatprep.subr.bf16.mxu0 0
        %1567 = vmatpush1.bf16.msra.mxu0 0
        %1568 = vmatprep.subr.bf16.mxu0 0
        %1569 = vmatpush1.bf16.msra.mxu0 0
        %1570 = vmatprep.subr.bf16.mxu0 0
        %1571 = vmatpush1.bf16.msra.mxu0 0
        %1572 = vmatprep.subr.bf16.mxu0 0
        %1573 = vmatpush1.bf16.msra.mxu0 0
        %1574 = vmatprep.mubr.bf16.mxu0 0
        %1575 = vmatmul.mubr.bf16.gmra.mrb[0].mxu0 %v1540
        %v1576 = vpop.f32.mrb[0].mxu0
        %v1577 = vadd.f32 0.0, %v1576
        %v1578 = vpop.f32.mrb[0].mxu0
        %v1579 = vpop.f32.mrb[0].mxu0
        %v1580 = vpop.f32.mrb[0].mxu0
        %1581 = vdwg.mxu0
        %v1583 = vsel %vm999, %v1452, 0
        %1585 = vmatprep.subr.bf16.mxu0 0
        %1586 = vmatpush1.bf16.msra.mxu0 %v1217
        %1587 = vmatprep.subr.bf16.mxu0 0
        %1588 = vmatpush1.bf16.msra.mxu0 0
        %1589 = vmatprep.subr.bf16.mxu0 0
        %1590 = vmatpush1.bf16.msra.mxu0 0
        %1591 = vmatprep.subr.bf16.mxu0 0
        %1592 = vmatpush1.bf16.msra.mxu0 0
        %1593 = vmatprep.subr.bf16.mxu0 0
        %1594 = vmatpush1.bf16.msra.mxu0 0
        %1595 = vmatprep.subr.bf16.mxu0 0
        %1596 = vmatpush1.bf16.msra.mxu0 0
        %1597 = vmatprep.subr.bf16.mxu0 0
        %1598 = vmatpush1.bf16.msra.mxu0 0
        %1599 = vmatprep.subr.bf16.mxu0 0
        %1600 = vmatpush1.bf16.msra.mxu0 0
        %1601 = vmatprep.subr.bf16.mxu0 0
        %1602 = vmatpush1.bf16.msra.mxu0 0
        %1603 = vmatprep.subr.bf16.mxu0 0
        %1604 = vmatpush1.bf16.msra.mxu0 0
        %1605 = vmatprep.subr.bf16.mxu0 0
        %1606 = vmatpush1.bf16.msra.mxu0 0
        %1607 = vmatprep.subr.bf16.mxu0 0
        %1608 = vmatpush1.bf16.msra.mxu0 0
        %1609 = vmatprep.subr.bf16.mxu0 0
        %1610 = vmatpush1.bf16.msra.mxu0 0
        %1611 = vmatprep.subr.bf16.mxu0 0
        %1612 = vmatpush1.bf16.msra.mxu0 0
        %1613 = vmatprep.subr.bf16.mxu0 0
        %1614 = vmatpush1.bf16.msra.mxu0 0
        %1615 = vmatprep.subr.bf16.mxu0 0
        %1616 = vmatpush1.bf16.msra.mxu0 0
        %1617 = vmatprep.mubr.bf16.mxu0 0
        %1618 = vmatmul.mubr.bf16.gmra.mrb[0].mxu0 %v1583
        %v1619 = vpop.f32.mrb[0].mxu0
        %v1620 = vadd.f32 0.0, %v1619
        %v1621 = vpop.f32.mrb[0].mxu0
        %v1622 = vpop.f32.mrb[0].mxu0
        %v1623 = vpop.f32.mrb[0].mxu0
        %1624 = vdwg.mxu0
        %1626 = vrot.lane.b32.xlu0 %v1534, 8
        %v1627 = vpop.permute.xlu0 %1626
        %1630 = vrot.lane.b32.xlu0 %v1577, 16
        %v1631 = vpop.permute.xlu0 %1630
        %1634 = vrot.lane.b32.xlu0 %v1620, 24
        %v1635 = vpop.permute.xlu0 %1634
        %v1637 = vsel %vm568, %v1491, %v1627
        %v1638 = vsel %vm999, %v1637, %v1631
        %v1639 = vsel %vm1001, %v1638, %v1635
        %v1640 = vpack.c.bf16 %v1639, %v1639
        %1641 = vrot.lane.b32.xlu0 %v1012, 32
        %v1642 = vpop.permute.xlu0 %1641
        %1643 = vrot.lane.b32.xlu0 %v1013, 32
        %v1644 = vpop.permute.xlu0 %1643
        %v1648 = vsel %vm452, %v1640, 0
        %1650 = vmatprep.subr.bf16.mxu0 0
        %1651 = vmatpush1.bf16.msra.mxu0 %v1642
        %1652 = vmatprep.subr.bf16.mxu0 0
        %1653 = vmatpush1.bf16.msra.mxu0 %v1644
        %1654 = vmatprep.subr.bf16.mxu0 0
        %1655 = vmatpush1.bf16.msra.mxu0 0
        %1656 = vmatprep.subr.bf16.mxu0 0
        %1657 = vmatpush1.bf16.msra.mxu0 0
        %1658 = vmatprep.subr.bf16.mxu0 0
        %1659 = vmatpush1.bf16.msra.mxu0 0
        %1660 = vmatprep.subr.bf16.mxu0 0
        %1661 = vmatpush1.bf16.msra.mxu0 0
        %1662 = vmatprep.subr.bf16.mxu0 0
        %1663 = vmatpush1.bf16.msra.mxu0 0
        %1664 = vmatprep.subr.bf16.mxu0 0
        %1665 = vmatpush1.bf16.msra.mxu0 0
        %1666 = vmatprep.subr.bf16.mxu0 0
        %1667 = vmatpush1.bf16.msra.mxu0 0
        %1668 = vmatprep.subr.bf16.mxu0 0
        %1669 = vmatpush1.bf16.msra.mxu0 0
        %1670 = vmatprep.subr.bf16.mxu0 0
        %1671 = vmatpush1.bf16.msra.mxu0 0
        %1672 = vmatprep.subr.bf16.mxu0 0
        %1673 = vmatpush1.bf16.msra.mxu0 0
        %1674 = vmatprep.subr.bf16.mxu0 0
        %1675 = vmatpush1.bf16.msra.mxu0 0
        %1676 = vmatprep.subr.bf16.mxu0 0
        %1677 = vmatpush1.bf16.msra.mxu0 0
        %1678 = vmatprep.subr.bf16.mxu0 0
        %1679 = vmatpush1.bf16.msra.mxu0 0
        %1680 = vmatprep.subr.bf16.mxu0 0
        %1681 = vmatpush1.bf16.msra.mxu0 0
        %1682 = vmatprep.mubr.bf16.mxu0 0
        %1683 = vmatmul.mubr.bf16.gmra.mrb[0].mxu0 %v1648
        %v1684 = vpop.f32.mrb[0].mxu0
        %v1685 = vadd.f32 0.0, %v1684
        %v1686 = vpop.f32.mrb[0].mxu0
        %v1687 = vpop.f32.mrb[0].mxu0
        %v1688 = vpop.f32.mrb[0].mxu0
        %1689 = vdwg.mxu0
        %v1690 = vadd.f32 %v1063, %v1685
        %s1691 = sld [smem:[#allocation11 + $0x4]]
        %s1692 = sld [smem:[#allocation11 + $0x5]]
        %v1693 = vsel %vm452, %v1690, 0.0
        %1694 = vadd.xlane.f32.xlu0 %v1693
        %v1695 = vpop.xlane.xlu0 %1694
        %v1696 = vmul.f32 %v1695, %v456
        %v1697 = vsub.f32 %v1690, %v1696
        %v1698 = vmul.f32 %v1697, %v1697
        %v1699 = vsel %vm452, %v1698, 0.0
        %1700 = vadd.xlane.f32.xlu0 %v1699
        %v1701 = vpop.xlane.xlu0 %1700
        %v1702 = vmul.f32 %v1701, 0.032258064
        %v1703 = vstv %s1691
        %v1704 = vmul.f32 %v1703, %v1697
        %v1705 = vrsqrt.pop %v1702
        %v1706 = vmul.f32 %v1702, %v1705
        %vm1707 = vcmp.eq.f32.partialorder %v1702, inf
        %v1708 = vsel %vm1707, %v1702, %v1706
        %vm1709 = vcmp.eq.f32.partialorder %v1702, 0.0
        %v1710 = vand.u32 %v1702, 2147483648
        %v1711 = vsel %vm1709, %v1710, %v1708
        %v1712 = vadd.f32 %v1711, 1e-06
        %v1713 = vrcp.pop %v1712
        %v1714 = vmul.f32 %v1704, %v1713
        %v1715 = vstv %s1692
        %v1716 = vadd.f32 %v1714, %v1715
        %v1717 = vpack.c.bf16 %v1716, %v1716
        %v1718 = vld [vmem:[%s4 + $0x8] sm:$0xf]
        %v1719 = vld [vmem:[%s4 + $0x14] sm:$0xf]
        %v1720 = vld [vmem:[%s4 + $0x20] sm:$0xf]
        %v1721 = vld [vmem:[%s4 + $0x2c] sm:$0xf]
        %v1722 = vld [vmem:[%s6] sm:$0x1]
        %v1724 = vlaneseq
        %v1725 = vshrl.u32 %v1724, 7
        %v1726 = vsub.s32 0, %v1725
        %v1727 = vrot.slane %v1722, %v1726
        %v1733 = vunpack.c.l.b16 %v1718
        %v1734 = vunpack.c.l.b16 %v1719
        %v1735 = vunpack.c.l.b16 %v1720
        %v1736 = vunpack.c.l.b16 %v1721
        %v1737 = vpack.c.b16 %v1734, %v1733
        %v1738 = vpack.c.b16 %v1736, %v1735
        %v1742 = vsel %vm452, %v1717, 0
        %1744 = vmatprep.subr.bf16.mxu0 0
        %1745 = vmatpush1.bf16.msra.mxu0 %v1737
        %1746 = vmatprep.subr.bf16.mxu0 0
        %1747 = vmatpush1.bf16.msra.mxu0 %v1738
        %1748 = vmatprep.subr.bf16.mxu0 0
        %1749 = vmatpush1.bf16.msra.mxu0 0
        %1750 = vmatprep.subr.bf16.mxu0 0
        %1751 = vmatpush1.bf16.msra.mxu0 0
        %1752 = vmatprep.subr.bf16.mxu0 0
        %1753 = vmatpush1.bf16.msra.mxu0 0
        %1754 = vmatprep.subr.bf16.mxu0 0
        %1755 = vmatpush1.bf16.msra.mxu0 0
        %1756 = vmatprep.subr.bf16.mxu0 0
        %1757 = vmatpush1.bf16.msra.mxu0 0
        %1758 = vmatprep.subr.bf16.mxu0 0
        %1759 = vmatpush1.bf16.msra.mxu0 0
        %1760 = vmatprep.subr.bf16.mxu0 0
        %1761 = vmatpush1.bf16.msra.mxu0 0
        %1762 = vmatprep.subr.bf16.mxu0 0
        %1763 = vmatpush1.bf16.msra.mxu0 0
        %1764 = vmatprep.subr.bf16.mxu0 0
        %1765 = vmatpush1.bf16.msra.mxu0 0
        %1766 = vmatprep.subr.bf16.mxu0 0
        %1767 = vmatpush1.bf16.msra.mxu0 0
        %1768 = vmatprep.subr.bf16.mxu0 0
        %1769 = vmatpush1.bf16.msra.mxu0 0
        %1770 = vmatprep.subr.bf16.mxu0 0
        %1771 = vmatpush1.bf16.msra.mxu0 0
        %1772 = vmatprep.subr.bf16.mxu0 0
        %1773 = vmatpush1.bf16.msra.mxu0 0
        %1774 = vmatprep.subr.bf16.mxu0 0
        %1775 = vmatpush1.bf16.msra.mxu0 0
        %1776 = vmatprep.mubr.bf16.mxu0 0
        %1777 = vmatmul.mubr.bf16.gmra.mrb[0].mxu0 %v1742
        %v1778 = vpop.f32.mrb[0].mxu0
        %v1779 = vadd.f32 %v1727, %v1778
        %v1780 = vpop.f32.mrb[0].mxu0
        %v1781 = vpop.f32.mrb[0].mxu0
        %v1782 = vpop.f32.mrb[0].mxu0
        %1783 = vdwg.mxu0
        %v1784 = vmax.f32 %v1779, 0.0
        %v1785 = vpack.c.bf16 %v1784, %v1784
        %v1786 = vld [vmem:[%s5] sm:$0xf]
        %v1787 = vld [vmem:[%s5 + $0x4] sm:$0xf]
        %v1788 = vld [vmem:[%s5 + $0x8] sm:$0xf]
        %v1789 = vld [vmem:[%s5 + $0xc] sm:$0xf]
        %v1790 = vld [vmem:[%s5 + $0x10] sm:$0xf]
        %v1791 = vld [vmem:[%s5 + $0x14] sm:$0xf]
        %v1792 = vld [vmem:[%s5 + $0x18] sm:$0xf]
        %v1793 = vld [vmem:[%s5 + $0x1c] sm:$0xf]
        %v1802 = vunpack.c.l.b16 %v1786
        %v1803 = vunpack.c.l.b16 %v1787
        %v1804 = vunpack.c.l.b16 %v1788
        %v1805 = vunpack.c.l.b16 %v1789
        %v1806 = vunpack.c.l.b16 %v1790
        %v1807 = vunpack.c.l.b16 %v1791
        %v1808 = vunpack.c.l.b16 %v1792
        %v1809 = vunpack.c.l.b16 %v1793
        %v1810 = vpack.c.b16 %v1803, %v1802
        %v1811 = vpack.c.b16 %v1805, %v1804
        %v1812 = vpack.c.b16 %v1807, %v1806
        %v1813 = vpack.c.b16 %v1809, %v1808
        %1818 = vrot.lane.b32.xlu0 %v1727, 64
        %v1819 = vpop.permute.xlu0 %1818
        %vm1821 = vcmask 523264
        %v1823 = vsel %vm1821, %v1785, 0
        %1825 = vmatprep.subr.bf16.mxu0 0
        %1826 = vmatpush1.bf16.msra.mxu0 %v1810
        %1827 = vmatprep.subr.bf16.mxu0 0
        %1828 = vmatpush1.bf16.msra.mxu0 %v1811
        %1829 = vmatprep.subr.bf16.mxu0 0
        %1830 = vmatpush1.bf16.msra.mxu0 %v1812
        %1831 = vmatprep.subr.bf16.mxu0 0
        %1832 = vmatpush1.bf16.msra.mxu0 %v1813
        %1833 = vmatprep.subr.bf16.mxu0 0
        %1834 = vmatpush1.bf16.msra.mxu0 0
        %1835 = vmatprep.subr.bf16.mxu0 0
        %1836 = vmatpush1.bf16.msra.mxu0 0
        %1837 = vmatprep.subr.bf16.mxu0 0
        %1838 = vmatpush1.bf16.msra.mxu0 0
        %1839 = vmatprep.subr.bf16.mxu0 0
        %1840 = vmatpush1.bf16.msra.mxu0 0
        %1841 = vmatprep.subr.bf16.mxu0 0
        %1842 = vmatpush1.bf16.msra.mxu0 0
        %1843 = vmatprep.subr.bf16.mxu0 0
        %1844 = vmatpush1.bf16.msra.mxu0 0
        %1845 = vmatprep.subr.bf16.mxu0 0
        %1846 = vmatpush1.bf16.msra.mxu0 0
        %1847 = vmatprep.subr.bf16.mxu0 0
        %1848 = vmatpush1.bf16.msra.mxu0 0
        %1849 = vmatprep.subr.bf16.mxu0 0
        %1850 = vmatpush1.bf16.msra.mxu0 0
        %1851 = vmatprep.subr.bf16.mxu0 0
        %1852 = vmatpush1.bf16.msra.mxu0 0
        %1853 = vmatprep.subr.bf16.mxu0 0
        %1854 = vmatpush1.bf16.msra.mxu0 0
        %1855 = vmatprep.subr.bf16.mxu0 0
        %1856 = vmatpush1.bf16.msra.mxu0 0
        %1857 = vmatprep.mubr.bf16.mxu0 0
        %1858 = vmatmul.mubr.bf16.gmra.mrb[0].mxu0 %v1823
        %v1859 = vpop.f32.mrb[0].mxu0
        %v1860 = vadd.f32 %v1819, %v1859
        %v1861 = vpop.f32.mrb[0].mxu0
        %v1862 = vpop.f32.mrb[0].mxu0
        %v1863 = vpop.f32.mrb[0].mxu0
        %1864 = vdwg.mxu0
        %v1865 = vadd.f32 %v1690, %v1860
        %1866 = vst.msk [vmem:[%s445] sm:$0xff] %vm452, %v1865
        %s1867 = sand.u32 %s228, 1
        %s1868 = scalar_lea.sflag [#allocation4], %s1867
        %s1869 = sand.u32 %s228, 1
        %s1870 = smul.addr %s1869, 8
        %s1871 = scalar_lea.vmem [#allocation12], %s1870
        // Predicated region
        $region73: #{tpu_custom_call.1} parent=51 // pred_check
          %p1872 = pneg %p238
        $region74: #{tpu_custom_call.1} parent=51 // pred_check_branch
          %1874 = sbr.rel (%p1872) target = $region76
        $region75: #{tpu_custom_call.1} parent=51 // pred_region
          %s1876 = ssub.s32 128, 128
          %1877 = vsyncadd %s1868, %s1876
          %s1878 = smul.addr %s32, 128
          %s1879 = scalar_lea.hbm %s8, %s1878
          %s1881 = sshll.u32 %s1871, 4
          %s1882 = int_to_ptr.vmem [resolvable:$true] %s1881
          %1884 = dma.vmem_to_hbm [thread:$0]  %s1882, 128, %s1879, %s1868
        $region76: #{tpu_custom_call.1} parent=51 // pred_fallthru
          _
      $region52: #{tpu_custom_call.1} parent=5 // pred_fallthru
        _
      %p1885 = scmp.le.s32.totalorder 2, %s27
      // Predicated region
      $region77: #{tpu_custom_call.1} parent=5 // pred_check
        %p1886 = pneg %p1885
      $region78: #{tpu_custom_call.1} parent=5 // pred_check_branch
        %1888 = sbr.rel (%p1886) target = $region80
      $region79: #{tpu_custom_call.1} parent=5 // pred_region
        %s1889 = ssub.s32 %s27, 2
        // Predicated region
        $region81: #{tpu_custom_call.1} parent=79 // pred_check
          %p1890 = pneg %p244
        $region82: #{tpu_custom_call.1} parent=79 // pred_check_branch
          %1892 = sbr.rel (%p1890) target = $region84
        $region83: #{tpu_custom_call.1} parent=79 // pred_region
          %s1893 = sand.u32 %s229, 1
          %s1894 = scalar_lea.sflag [#allocation4], %s1893
          %s1895 = sand.u32 %s229, 1
          %s1896 = smul.addr %s1895, 8
          %s1897 = scalar_lea.vmem [#allocation12], %s1896
          %1898 = dma.done %s1894, 128
        $region84: #{tpu_custom_call.1} parent=79 // pred_fallthru
          _
      $region80: #{tpu_custom_call.1} parent=5 // pred_fallthru
        _
    $region6: #{tpu_custom_call.1} parent=1 // loop_footer
      %s31 = sadd.s32 1, %s27
    $region7: #{tpu_custom_call.1} parent=1 // loop_footer_branch
      %26 = sbr.rel target = $region3
    $region8: #{tpu_custom_call.1} parent=1 // loop_exit
      _
    %1899 = vsyncpa [#allocation3], 1
    %s1900 = scalar_lea.sflag [#allocation3], 1
    %1901 = vsyncpa %s1900, 1
    %1902 = vsyncpa [#allocation7], 1
    %s1903 = scalar_lea.sflag [#allocation7], 1
    %1904 = vsyncpa %s1903, 1
    %1905 = vsyncpa [#allocation10], 1
    %s1906 = scalar_lea.sflag [#allocation10], 1
    %1907 = vsyncpa %s1906, 1
    %1908 = vsyncpa [#allocation4], 1
    %s1909 = scalar_lea.sflag [#allocation4], 1
    %1910 = vsyncpa %s1909, 1
    %1911 = vsyncpa [#allocation5], 1
    %s1912 = scalar_lea.sflag [#allocation5], 1
    %1913 = vsyncpa %s1912, 1

</llo_original>
